<compile_context>
chip_gen: v7x
topology: tpu7x:2x2x1
jax: 0.10.0
libtpu: 0.0.40
codegen_flags: <defaults>
</compile_context>

<pallas_src>
import jax
import jax.numpy as jnp
from jax.experimental import pallas as pl
from jax.experimental.pallas import tpu as pltpu

# ---- scaled-down ViT configuration ----
EMBED_DIM = 128          # vit_large: 1024
DEPTH = 2                # vit_large: 24
NUM_HEADS = 4            # vit_large: 16
HEAD_DIM = EMBED_DIM // NUM_HEADS
MLP_DIM = 4 * EMBED_DIM
ORIGINAL_HW = 4          # sqrt(num_patches); vit_large: 14
NUM_PATCHES = ORIGINAL_HW * ORIGINAL_HW
ORIG_PATCH_SIZE = 6      # vit_large: 16
LN_EPS = 1e-6
ATTN_SCALE = HEAD_DIM ** -0.5


def _round_up(n, m):
    return ((n + m - 1) // m) * m


def _row_tiling(m):
    # Largest row tile that fits comfortably in VMEM, padded to a multiple of 8.
    m_pad = _round_up(m, 8)
    tm = min(512, m_pad)
    m_pad = _round_up(m_pad, tm)
    return m_pad, tm


def _layernorm(x, g, b):
    mu = jnp.mean(x, axis=-1, keepdims=True)
    xc = x - mu
    var = jnp.mean(xc * xc, axis=-1, keepdims=True)
    return (xc * jax.lax.rsqrt(var + LN_EPS)) * g + b


# ----------------------------- Pallas kernels -----------------------------
def _resize_kernel(x_ref, rh_ref, rwt_ref, o_ref):
    # One batch element per grid step: out = Rh @ x @ Rw^T  (f32, exact bilinear).
    x = x_ref[0]                                              # (H, W)
    t = jnp.dot(rh_ref[...], x, preferred_element_type=jnp.float32)      # (side, W)
    o_ref[0] = jnp.dot(t, rwt_ref[...], preferred_element_type=jnp.float32)


def _patch_embed_kernel(p_ref, w_ref, b_ref, pos_ref, o_ref):
    # tokens = patches @ W + bias + pos_embed   (bias + pos fused epilogue)
    acc = jnp.dot(p_ref[...], w_ref[...], preferred_element_type=jnp.float32)
    o_ref[...] = acc + b_ref[...] + pos_ref[...]


def _attn_block_kernel(x_ref, g1_ref, b1_ref, qkvw_ref, qkvb_ref,
                       pw_ref, pb_ref, o_ref):
    # Full attention sublayer for one batch element:
    #   out = x + proj(attn(LN1(x)))
    x = x_ref[0]                                              # (S, D) f32
    xn = _layernorm(x, g1_ref[...], b1_ref[...])
    qkv = jnp.dot(xn.astype(jnp.bfloat16), qkvw_ref[...],
                  preferred_element_type=jnp.float32) + qkvb_ref[...]     # (S, 3D)
    ctxs = []
    for h in range(NUM_HEADS):                                # unrolled static loop
        q = qkv[:, h * HEAD_DIM:(h + 1) * HEAD_DIM].astype(jnp.bfloat16)
        k = qkv[:, EMBED_DIM + h * HEAD_DIM:
                EMBED_DIM + (h + 1) * HEAD_DIM].astype(jnp.bfloat16)
        v = qkv[:, 2 * EMBED_DIM + h * HEAD_DIM:
                2 * EMBED_DIM + (h + 1) * HEAD_DIM].astype(jnp.bfloat16)
        s = jax.lax.dot_general(q, k, (((1,), (1,)), ((), ())),
                                preferred_element_type=jnp.float32) * ATTN_SCALE
        s = s - jnp.max(s, axis=-1, keepdims=True)
        p = jnp.exp(s)
        p = p * pl.reciprocal(jnp.sum(p, axis=-1, keepdims=True), approx=True)
        ctxs.append(jnp.dot(p.astype(jnp.bfloat16), v,
                            preferred_element_type=jnp.float32))
    ctx = jnp.concatenate(ctxs, axis=-1)                      # (S, D) lane-dense
    out = jnp.dot(ctx.astype(jnp.bfloat16), pw_ref[...],
                  preferred_element_type=jnp.float32) + pb_ref[...]
    o_ref[0] = (x + out).astype(o_ref.dtype)


def _mlp_block_kernel(x_ref, g2_ref, b2_ref, w1_ref, bb1_ref,
                      w2_ref, bb2_ref, o_ref):
    # Full MLP sublayer for one row tile:
    #   out = x + fc2(gelu(fc1(LN2(x))))
    x = x_ref[...]                                            # (tm, D) f32
    xn = _layernorm(x, g2_ref[...], b2_ref[...])
    h = jnp.dot(xn.astype(jnp.bfloat16), w1_ref[...],
                preferred_element_type=jnp.float32) + bb1_ref[...]        # (tm, 4D)
    h = jax.nn.gelu(h, approximate=True)
    out = jnp.dot(h.astype(jnp.bfloat16), w2_ref[...],
                  preferred_element_type=jnp.float32) + bb2_ref[...]
    o_ref[...] = (x + out).astype(o_ref.dtype)


def _layernorm_kernel(x_ref, g_ref, b_ref, o_ref):
    o_ref[...] = _layernorm(x_ref[...], g_ref[...], b_ref[...])


# --------------------------- kernel wrappers ---------------------------
def pallas_resize(x_bhw, rh, rwt):
    b, h, w = x_bhw.shape
    side = rh.shape[0]
    return pl.pallas_call(
        _resize_kernel,
        out_shape=jax.ShapeDtypeStruct((b, side, side), jnp.float32),
        grid=(b,),
        in_specs=[pl.BlockSpec((1, h, w), lambda i: (i, 0, 0)),
                  pl.BlockSpec((side, h), lambda i: (0, 0)),
                  pl.BlockSpec((w, side), lambda i: (0, 0))],
        out_specs=pl.BlockSpec((1, side, side), lambda i: (i, 0, 0)),
        compiler_params=pltpu.CompilerParams(dimension_semantics=("parallel",)),
    )(x_bhw, rh, rwt)


def pallas_patch_embed(patches, w_pe, bias, pos):
    m, k = patches.shape
    n = w_pe.shape[1]
    m_pad, tm = _row_tiling(m)
    pad = m_pad - m
    xp = jnp.pad(patches, ((0, pad), (0, 0))) if pad else patches
    posp = jnp.pad(pos, ((0, pad), (0, 0))) if pad else pos
    y = pl.pallas_call(
        _patch_embed_kernel,
        out_shape=jax.ShapeDtypeStruct((m_pad, n), jnp.float32),
        grid=(m_pad // tm,),
        in_specs=[pl.BlockSpec((tm, k), lambda i: (i, 0)),
                  pl.BlockSpec((k, n), lambda i: (0, 0)),
                  pl.BlockSpec((1, n), lambda i: (0, 0)),
                  pl.BlockSpec((tm, n), lambda i: (i, 0))],
        out_specs=pl.BlockSpec((tm, n), lambda i: (i, 0)),
        compiler_params=pltpu.CompilerParams(dimension_semantics=("parallel",)),
    )(xp, w_pe, bias.reshape(1, n), posp)
    return y[:m] if pad else y


def pallas_attn_block(x_bsd, blk):
    b, s, d = x_bsd.shape
    return pl.pallas_call(
        _attn_block_kernel,
        out_shape=jax.ShapeDtypeStruct((b, s, d), jnp.float32),
        grid=(b,),
        in_specs=[pl.BlockSpec((1, s, d), lambda i: (i, 0, 0)),
                  pl.BlockSpec((1, d), lambda i: (0, 0)),
                  pl.BlockSpec((1, d), lambda i: (0, 0)),
                  pl.BlockSpec((d, 3 * d), lambda i: (0, 0)),
                  pl.BlockSpec((1, 3 * d), lambda i: (0, 0)),
                  pl.BlockSpec((d, d), lambda i: (0, 0)),
                  pl.BlockSpec((1, d), lambda i: (0, 0))],
        out_specs=pl.BlockSpec((1, s, d), lambda i: (i, 0, 0)),
        compiler_params=pltpu.CompilerParams(dimension_semantics=("parallel",)),
    )(x_bsd,
      blk["ln1_g"].reshape(1, d), blk["ln1_b"].reshape(1, d),
      blk["qkv_w"], blk["qkv_b"].reshape(1, 3 * d),
      blk["proj_w"], blk["proj_b"].reshape(1, d))


def pallas_mlp_block(x2d, blk):
    m, d = x2d.shape
    n = MLP_DIM
    m_pad, tm = _row_tiling(m)
    pad = m_pad - m
    xp = jnp.pad(x2d, ((0, pad), (0, 0))) if pad else x2d
    y = pl.pallas_call(
        _mlp_block_kernel,
        out_shape=jax.ShapeDtypeStruct((m_pad, d), jnp.float32),
        grid=(m_pad // tm,),
        in_specs=[pl.BlockSpec((tm, d), lambda i: (i, 0)),
                  pl.BlockSpec((1, d), lambda i: (0, 0)),
                  pl.BlockSpec((1, d), lambda i: (0, 0)),
                  pl.BlockSpec((d, n), lambda i: (0, 0)),
                  pl.BlockSpec((1, n), lambda i: (0, 0)),
                  pl.BlockSpec((n, d), lambda i: (0, 0)),
                  pl.BlockSpec((1, d), lambda i: (0, 0))],
        out_specs=pl.BlockSpec((tm, d), lambda i: (i, 0)),
        compiler_params=pltpu.CompilerParams(dimension_semantics=("parallel",)),
    )(xp,
      blk["ln2_g"].reshape(1, d), blk["ln2_b"].reshape(1, d),
      blk["fc1_w"], blk["fc1_b"].reshape(1, n),
      blk["fc2_w"], blk["fc2_b"].reshape(1, d))
    return y[:m] if pad else y


def pallas_layernorm(x2d, gamma, beta):
    m, d = x2d.shape
    m_pad, tm = _row_tiling(m)
    pad = m_pad - m
    xp = jnp.pad(x2d, ((0, pad), (0, 0))) if pad else x2d
    y = pl.pallas_call(
        _layernorm_kernel,
        out_shape=jax.ShapeDtypeStruct((m_pad, d), jnp.float32),
        grid=(m_pad // tm,),
        in_specs=[pl.BlockSpec((tm, d), lambda i: (i, 0)),
                  pl.BlockSpec((1, d), lambda i: (0, 0)),
                  pl.BlockSpec((1, d), lambda i: (0, 0))],
        out_specs=pl.BlockSpec((tm, d), lambda i: (i, 0)),
        compiler_params=pltpu.CompilerParams(dimension_semantics=("parallel",)),
    )(xp, gamma.reshape(1, d), beta.reshape(1, d))
    return y[:m] if pad else y


# ------------------------------ glue helpers ------------------------------
def _bilinear_matrix(in_size, out_size):
    # PyTorch F.interpolate(..., mode='bilinear', align_corners=False) row matrix.
    i = jnp.arange(out_size, dtype=jnp.float32)
    src = jnp.clip((i + 0.5) * (in_size / out_size) - 0.5, 0.0, in_size - 1)
    lo = jnp.floor(src).astype(jnp.int32)
    hi = jnp.minimum(lo + 1, in_size - 1)
    w_hi = src - lo.astype(jnp.float32)
    w_lo = 1.0 - w_hi
    rows = jnp.arange(out_size)
    m = jnp.zeros((out_size, in_size), jnp.float32)
    m = m.at[rows, lo].add(w_lo)
    m = m.at[rows, hi].add(w_hi)
    return m                                         # (out_size, in_size)


def _extract_patches(x_bhw, p):
    # Non-overlapping p x p patches (stride == kernel), row-major (ky, kx) order.
    b, hh, ww = x_bhw.shape
    gh, gw = hh // p, ww // p
    x = x_bhw.reshape(b, gh, p, gw, p)
    x = jnp.transpose(x, (0, 1, 3, 2, 4))            # (b, gh, gw, p, p)
    return x.reshape(b * gh * gw, p * p)


# ----------------------------- parameter init ------------------------------
def init_isavit_params(key):
    ks = iter(jax.random.split(key, 64))

    def nrm(k, shape, std=0.02):
        return std * jax.random.normal(k, shape, jnp.float32)

    params = {
        # timm patch_embed.proj weight (3 input channels) + bias
        "proj_w_orig": nrm(next(ks), (EMBED_DIM, 3, ORIG_PATCH_SIZE, ORIG_PATCH_SIZE)),
        "proj_b": nrm(next(ks), (EMBED_DIM,)),
        "cls": nrm(next(ks), (EMBED_DIM,)),
        "pos": nrm(next(ks), (NUM_PATCHES + 1, EMBED_DIM)),
        "norm_g": jnp.ones((EMBED_DIM,), jnp.float32),
        "norm_b": jnp.zeros((EMBED_DIM,), jnp.float32),
        "blocks": [],
    }
    for _ in range(DEPTH):
        params["blocks"].append({
            "ln1_g": jnp.ones((EMBED_DIM,), jnp.float32),
            "ln1_b": jnp.zeros((EMBED_DIM,), jnp.float32),
            "qkv_w": nrm(next(ks), (EMBED_DIM, 3 * EMBED_DIM)).astype(jnp.bfloat16),
            "qkv_b": jnp.zeros((3 * EMBED_DIM,), jnp.float32),
            "proj_w": nrm(next(ks), (EMBED_DIM, EMBED_DIM)).astype(jnp.bfloat16),
            "proj_b": jnp.zeros((EMBED_DIM,), jnp.float32),
            "ln2_g": jnp.ones((EMBED_DIM,), jnp.float32),
            "ln2_b": jnp.zeros((EMBED_DIM,), jnp.float32),
            "fc1_w": nrm(next(ks), (EMBED_DIM, MLP_DIM)).astype(jnp.bfloat16),
            "fc1_b": jnp.zeros((MLP_DIM,), jnp.float32),
            "fc2_w": nrm(next(ks), (MLP_DIM, EMBED_DIM)).astype(jnp.bfloat16),
            "fc2_b": jnp.zeros((EMBED_DIM,), jnp.float32),
        })
    return params


# -------------------------------- forward ----------------------------------
def isavit_forward(params, x_nchw):
    x = x_nchw.astype(jnp.float32)
    bsz, _, h_in, w_in = x.shape

    # Lazy "initialized" branch of the reference forward: derive patch / canvas size.
    long_side = max(h_in, w_in)
    patch_side = int(long_side / ORIGINAL_HW) + 1
    side = patch_side * ORIGINAL_HW

    # patch_avg_pool(): channel-sum the original proj weight, then avg-pool to
    # (patch_side, patch_side).  Only the old >= new branch is implemented.
    ksz = ORIG_PATCH_SIZE - patch_side + 1
    assert ksz >= 1, "interpolate branch of patch_avg_pool not implemented"
    w1 = jnp.sum(params["proj_w_orig"], axis=1, keepdims=True)      # (D,1,P,P)
    w_pool = jnp.zeros((EMBED_DIM, 1, patch_side, patch_side), jnp.float32)
    for i in range(ksz):
        for j in range(ksz):
            w_pool = w_pool + w1[:, :, i:i + patch_side, j:j + patch_side]
    w_pool = w_pool / float(ksz * ksz)
    w_pe = jnp.transpose(w_pool.reshape(EMBED_DIM, patch_side * patch_side),
                         (1, 0))                                    # (p*p, D)

    # F.interpolate(x, (side, side), bilinear, align_corners=False): both
    # separable interpolation matmuls fused into one kernel per batch element.
    rh = _bilinear_matrix(h_in, side)                               # (side, H)
    rw = _bilinear_matrix(w_in, side)                               # (side, W)
    y = pallas_resize(x[:, 0], rh, jnp.transpose(rw))               # (B, side, side)

    # Patch embedding: bias + positional embedding fused into the matmul epilogue.
    patches = _extract_patches(y, patch_side)                       # (B*P, p*p)
    pos_tok = jnp.broadcast_to(params["pos"][1:], (bsz, NUM_PATCHES, EMBED_DIM))
    tokens = pallas_patch_embed(patches, w_pe, params["proj_b"],
                                pos_tok.reshape(bsz * NUM_PATCHES, EMBED_DIM))
    tokens = tokens.reshape(bsz, NUM_PATCHES, EMBED_DIM)

    cls_row = (params["cls"] + params["pos"][0]).reshape(1, 1, EMBED_DIM)
    xseq = jnp.concatenate(
        [jnp.broadcast_to(cls_row, (bsz, 1, EMBED_DIM)), tokens], axis=1)
    seq = NUM_PATCHES + 1

    # Transformer blocks: one fused kernel per sublayer.
    for blk in params["blocks"]:
        xseq = pallas_attn_block(xseq, blk)                         # (B, S, D)
        xf = pallas_mlp_block(xseq.reshape(bsz * seq, EMBED_DIM), blk)
        xseq = xf.reshape(bsz, seq, EMBED_DIM)

    # Final norm applied only to the CLS rows (the only rows consumed); head = Identity.
    cls_out = xseq[:, 0]                                            # (B, D)
    return pallas_layernorm(cls_out, params["norm_g"], params["norm_b"])


if __name__ == "__main__":
    key = jax.random.PRNGKey(0)
    pkey, xkey = jax.random.split(key)
    params = init_isavit_params(pkey)
    # 1-channel NCHW input like the PyTorch module's re-initialized Conv2d(1, D, ...).
    x = jax.random.normal(xkey, (2, 1, 18, 18), jnp.float32)
    fwd = jax.jit(isavit_forward)
    out = fwd(params, x)
    out = jax.block_until_ready(out)
    assert out.shape == (2, EMBED_DIM), out.shape
    assert bool(jnp.all(jnp.isfinite(out)))
    print("KERNEL_OK")
</pallas_src>

<mosaic_0001>
module attributes {stable_mosaic.version = 11 : i64} {
  func.func @_resize_kernel(%arg0: i32, %arg1: memref<1x18x18xf32, #tpu.memory_space<vmem>>, %arg2: memref<20x18xf32, #tpu.memory_space<vmem>>, %arg3: memref<18x20xf32, #tpu.memory_space<vmem>>, %arg4: memref<1x20x20xf32, #tpu.memory_space<vmem>>) attributes {dimension_semantics = [#tpu.dimension_semantics<parallel>], iteration_bounds = array<i64: 2>, scalar_prefetch = 0 : i64, scratch_operands = 0 : i64, tpu.core_type = #tpu.core_type<tc>, window_params = [{transform_indices = @transform_0, window_bounds = array<i64: 1, 18, 18>}, {pipeline_mode = #tpu.pipeline_mode<synchronous>, transform_indices = @transform_1, window_bounds = array<i64: 20, 18>}, {pipeline_mode = #tpu.pipeline_mode<synchronous>, transform_indices = @transform_2, window_bounds = array<i64: 18, 20>}, {transform_indices = @transform_3, window_bounds = array<i64: 1, 20, 20>}]} {
    %c0 = arith.constant 0 : index
    %c0_0 = arith.constant 0 : index
    %c0_1 = arith.constant 0 : index
    %0 = vector.load %arg1[%c0, %c0_0, %c0_1] : memref<1x18x18xf32, #tpu.memory_space<vmem>>, vector<1x18x18xf32>
    %1 = vector.shape_cast %0 : vector<1x18x18xf32> to vector<18x18xf32>
    %c0_2 = arith.constant 0 : index
    %c0_3 = arith.constant 0 : index
    %2 = vector.load %arg2[%c0_2, %c0_3] : memref<20x18xf32, #tpu.memory_space<vmem>>, vector<20x18xf32>
    %cst = arith.constant dense<0.000000e+00> : vector<20x18xf32>
    %3 = tpu.matmul %2, %1, %cst {dimension_numbers = #tpu.dot_dimension_numbers<[1], [0], [0], [1], [0, 0, 1, 1], [], []>} : vector<20x18xf32>, vector<18x18xf32>, vector<20x18xf32> -> vector<20x18xf32>
    %c0_4 = arith.constant 0 : index
    %c0_5 = arith.constant 0 : index
    %4 = vector.load %arg3[%c0_4, %c0_5] : memref<18x20xf32, #tpu.memory_space<vmem>>, vector<18x20xf32>
    %cst_6 = arith.constant dense<0.000000e+00> : vector<20x20xf32>
    %5 = tpu.matmul %3, %4, %cst_6 {dimension_numbers = #tpu.dot_dimension_numbers<[1], [0], [0], [1], [0, 0, 1, 1], [], []>} : vector<20x18xf32>, vector<18x20xf32>, vector<20x20xf32> -> vector<20x20xf32>
    %c0_7 = arith.constant 0 : index
    %c0_8 = arith.constant 0 : index
    %c0_9 = arith.constant 0 : index
    %6 = vector.load %arg4[%c0_7, %c0_8, %c0_9] : memref<1x20x20xf32, #tpu.memory_space<vmem>>, vector<1x20x20xf32>
    %7 = vector.shape_cast %6 : vector<1x20x20xf32> to vector<20x20xf32>
    %8 = vector.shape_cast %5 : vector<20x20xf32> to vector<1x20x20xf32>
    tpu.vector_store %arg4[%c0_7, %c0_8, %c0_9], %8 {strides = array<i32>} : memref<1x20x20xf32, #tpu.memory_space<vmem>>, vector<1x20x20xf32>,
    return
  }
  func.func @transform_0(%arg0: i32) -> (i32, i32, i32) {
    %c0_i32 = arith.constant 0 : i32
    %c0_i32_0 = arith.constant 0 : i32
    %c0_i32_1 = arith.constant 0 : i32
    return %arg0, %c0_i32, %c0_i32_0 : i32, i32, i32
  }
  func.func @transform_1(%arg0: i32) -> (i32, i32) {
    %c0_i32 = arith.constant 0 : i32
    %c0_i32_0 = arith.constant 0 : i32
    %c0_i32_1 = arith.constant 0 : i32
    return %c0_i32, %c0_i32_0 : i32, i32
  }
  func.func @transform_2(%arg0: i32) -> (i32, i32) {
    %c0_i32 = arith.constant 0 : i32
    %c0_i32_0 = arith.constant 0 : i32
    %c0_i32_1 = arith.constant 0 : i32
    return %c0_i32, %c0_i32_0 : i32, i32
  }
  func.func @transform_3(%arg0: i32) -> (i32, i32, i32) {
    %c0_i32 = arith.constant 0 : i32
    %c0_i32_0 = arith.constant 0 : i32
    %c0_i32_1 = arith.constant 0 : i32
    return %arg0, %c0_i32, %c0_i32_0 : i32, i32, i32
  }
}

module attributes {stable_mosaic.version = 11 : i64} {
  func.func @_patch_embed_kernel(%arg0: i32, %arg1: memref<32x25xf32, #tpu.memory_space<vmem>>, %arg2: memref<25x128xf32, #tpu.memory_space<vmem>>, %arg3: memref<1x128xf32, #tpu.memory_space<vmem>>, %arg4: memref<32x128xf32, #tpu.memory_space<vmem>>, %arg5: memref<32x128xf32, #tpu.memory_space<vmem>>) attributes {dimension_semantics = [#tpu.dimension_semantics<parallel>], iteration_bounds = array<i64: 1>, scalar_prefetch = 0 : i64, scratch_operands = 0 : i64, tpu.core_type = #tpu.core_type<tc>, window_params = [{transform_indices = @transform_0, window_bounds = array<i64: 32, 25>}, {pipeline_mode = #tpu.pipeline_mode<synchronous>, transform_indices = @transform_1, window_bounds = array<i64: 25, 128>}, {pipeline_mode = #tpu.pipeline_mode<synchronous>, transform_indices = @transform_2, window_bounds = array<i64: 1, 128>}, {transform_indices = @transform_3, window_bounds = array<i64: 32, 128>}, {transform_indices = @transform_4, window_bounds = array<i64: 32, 128>}]} {
    %c0 = arith.constant 0 : index
    %c0_0 = arith.constant 0 : index
    %0 = vector.load %arg1[%c0, %c0_0] : memref<32x25xf32, #tpu.memory_space<vmem>>, vector<32x25xf32>
    %c0_1 = arith.constant 0 : index
    %c0_2 = arith.constant 0 : index
    %1 = vector.load %arg2[%c0_1, %c0_2] : memref<25x128xf32, #tpu.memory_space<vmem>>, vector<25x128xf32>
    %cst = arith.constant dense<0.000000e+00> : vector<32x128xf32>
    %2 = tpu.matmul %0, %1, %cst {dimension_numbers = #tpu.dot_dimension_numbers<[1], [0], [0], [1], [0, 0, 1, 1], [], []>} : vector<32x25xf32>, vector<25x128xf32>, vector<32x128xf32> -> vector<32x128xf32>
    %c0_3 = arith.constant 0 : index
    %c0_4 = arith.constant 0 : index
    %3 = vector.load %arg3[%c0_3, %c0_4] : memref<1x128xf32, #tpu.memory_space<vmem>>, vector<1x128xf32>
    %4 = vector.broadcast %3 : vector<1x128xf32> to vector<32x128xf32>
    %5 = arith.addf %2, %4 : vector<32x128xf32>
    %c0_5 = arith.constant 0 : index
    %c0_6 = arith.constant 0 : index
    %6 = vector.load %arg4[%c0_5, %c0_6] : memref<32x128xf32, #tpu.memory_space<vmem>>, vector<32x128xf32>
    %7 = arith.addf %5, %6 : vector<32x128xf32>
    %c0_7 = arith.constant 0 : index
    %c0_8 = arith.constant 0 : index
    %8 = vector.load %arg5[%c0_7, %c0_8] : memref<32x128xf32, #tpu.memory_space<vmem>>, vector<32x128xf32>
    tpu.vector_store %arg5[%c0_7, %c0_8], %7 {strides = array<i32>} : memref<32x128xf32, #tpu.memory_space<vmem>>, vector<32x128xf32>,
    return
  }
  func.func @transform_0(%arg0: i32) -> (i32, i32) {
    %c0_i32 = arith.constant 0 : i32
    %c0_i32_0 = arith.constant 0 : i32
    return %arg0, %c0_i32 : i32, i32
  }
  func.func @transform_1(%arg0: i32) -> (i32, i32) {
    %c0_i32 = arith.constant 0 : i32
    %c0_i32_0 = arith.constant 0 : i32
    %c0_i32_1 = arith.constant 0 : i32
    return %c0_i32, %c0_i32_0 : i32, i32
  }
  func.func @transform_2(%arg0: i32) -> (i32, i32) {
    %c0_i32 = arith.constant 0 : i32
    %c0_i32_0 = arith.constant 0 : i32
    %c0_i32_1 = arith.constant 0 : i32
    return %c0_i32, %c0_i32_0 : i32, i32
  }
  func.func @transform_3(%arg0: i32) -> (i32, i32) {
    %c0_i32 = arith.constant 0 : i32
    %c0_i32_0 = arith.constant 0 : i32
    return %arg0, %c0_i32 : i32, i32
  }
  func.func @transform_4(%arg0: i32) -> (i32, i32) {
    %c0_i32 = arith.constant 0 : i32
    %c0_i32_0 = arith.constant 0 : i32
    return %arg0, %c0_i32 : i32, i32
  }
}

module attributes {stable_mosaic.version = 11 : i64} {
  func.func @_attn_block_kernel(%arg0: i32, %arg1: memref<1x17x128xf32, #tpu.memory_space<vmem>>, %arg2: memref<1x128xf32, #tpu.memory_space<vmem>>, %arg3: memref<1x128xf32, #tpu.memory_space<vmem>>, %arg4: memref<128x384xbf16, #tpu.memory_space<vmem>>, %arg5: memref<1x384xf32, #tpu.memory_space<vmem>>, %arg6: memref<128x128xbf16, #tpu.memory_space<vmem>>, %arg7: memref<1x128xf32, #tpu.memory_space<vmem>>, %arg8: memref<1x17x128xf32, #tpu.memory_space<vmem>>) attributes {dimension_semantics = [#tpu.dimension_semantics<parallel>], iteration_bounds = array<i64: 2>, scalar_prefetch = 0 : i64, scratch_operands = 0 : i64, tpu.core_type = #tpu.core_type<tc>, window_params = [{transform_indices = @transform_0, window_bounds = array<i64: 1, 17, 128>}, {pipeline_mode = #tpu.pipeline_mode<synchronous>, transform_indices = @transform_1, window_bounds = array<i64: 1, 128>}, {pipeline_mode = #tpu.pipeline_mode<synchronous>, transform_indices = @transform_2, window_bounds = array<i64: 1, 128>}, {pipeline_mode = #tpu.pipeline_mode<synchronous>, transform_indices = @transform_3, window_bounds = array<i64: 128, 384>}, {pipeline_mode = #tpu.pipeline_mode<synchronous>, transform_indices = @transform_4, window_bounds = array<i64: 1, 384>}, {pipeline_mode = #tpu.pipeline_mode<synchronous>, transform_indices = @transform_5, window_bounds = array<i64: 128, 128>}, {pipeline_mode = #tpu.pipeline_mode<synchronous>, transform_indices = @transform_6, window_bounds = array<i64: 1, 128>}, {transform_indices = @transform_7, window_bounds = array<i64: 1, 17, 128>}]} {
    %c0 = arith.constant 0 : index
    %c0_0 = arith.constant 0 : index
    %c0_1 = arith.constant 0 : index
    %0 = vector.load %arg1[%c0, %c0_0, %c0_1] : memref<1x17x128xf32, #tpu.memory_space<vmem>>, vector<1x17x128xf32>
    %1 = vector.shape_cast %0 : vector<1x17x128xf32> to vector<17x128xf32>
    %c0_2 = arith.constant 0 : index
    %c0_3 = arith.constant 0 : index
    %2 = vector.load %arg2[%c0_2, %c0_3] : memref<1x128xf32, #tpu.memory_space<vmem>>, vector<1x128xf32>
    %c0_4 = arith.constant 0 : index
    %c0_5 = arith.constant 0 : index
    %3 = vector.load %arg3[%c0_4, %c0_5] : memref<1x128xf32, #tpu.memory_space<vmem>>, vector<1x128xf32>
    %cst = arith.constant dense<0.000000e+00> : vector<17xf32>
    %4 = vector.multi_reduction <add>, %1, %cst [1] : vector<17x128xf32> to vector<17xf32>
    %5 = vector.shape_cast %4 : vector<17xf32> to vector<17x1xf32>
    %cst_6 = arith.constant 1.280000e+02 : f32
    %6 = vector.broadcast %cst_6 : f32 to vector<17x1xf32>
    %7 = arith.divf %5, %6 : vector<17x1xf32>
    %8 = vector.broadcast %7 : vector<17x1xf32> to vector<17x128xf32>
    %9 = arith.subf %1, %8 : vector<17x128xf32>
    %10 = arith.mulf %9, %9 : vector<17x128xf32>
    %cst_7 = arith.constant dense<0.000000e+00> : vector<17xf32>
    %11 = vector.multi_reduction <add>, %10, %cst_7 [1] : vector<17x128xf32> to vector<17xf32>
    %12 = vector.shape_cast %11 : vector<17xf32> to vector<17x1xf32>
    %cst_8 = arith.constant 1.280000e+02 : f32
    %13 = vector.broadcast %cst_8 : f32 to vector<17x1xf32>
    %14 = arith.divf %12, %13 : vector<17x1xf32>
    %cst_9 = arith.constant 9.99999997E-7 : f32
    %15 = vector.broadcast %cst_9 : f32 to vector<17x1xf32>
    %16 = arith.addf %14, %15 : vector<17x1xf32>
    %17 = math.rsqrt %16 : vector<17x1xf32>
    %18 = vector.broadcast %17 : vector<17x1xf32> to vector<17x128xf32>
    %19 = arith.mulf %9, %18 : vector<17x128xf32>
    %20 = vector.broadcast %2 : vector<1x128xf32> to vector<17x128xf32>
    %21 = arith.mulf %19, %20 : vector<17x128xf32>
    %22 = vector.broadcast %3 : vector<1x128xf32> to vector<17x128xf32>
    %23 = arith.addf %21, %22 : vector<17x128xf32>
    %24 = arith.truncf %23 : vector<17x128xf32> to vector<17x128xbf16>
    %c0_10 = arith.constant 0 : index
    %c0_11 = arith.constant 0 : index
    %25 = vector.load %arg4[%c0_10, %c0_11] : memref<128x384xbf16, #tpu.memory_space<vmem>>, vector<128x384xbf16>
    %cst_12 = arith.constant dense<0.000000e+00> : vector<17x384xf32>
    %26 = tpu.matmul %24, %25, %cst_12 {dimension_numbers = #tpu.dot_dimension_numbers<[1], [0], [0], [1], [0, 0, 1, 1], [], []>} : vector<17x128xbf16>, vector<128x384xbf16>, vector<17x384xf32> -> vector<17x384xf32>
    %c0_13 = arith.constant 0 : index
    %c0_14 = arith.constant 0 : index
    %27 = vector.load %arg5[%c0_13, %c0_14] : memref<1x384xf32, #tpu.memory_space<vmem>>, vector<1x384xf32>
    %28 = vector.broadcast %27 : vector<1x384xf32> to vector<17x384xf32>
    %29 = arith.addf %26, %28 : vector<17x384xf32>
    %30 = vector.extract_strided_slice %29 {offsets = [0, 0], sizes = [17, 32], strides = [1, 1]} : vector<17x384xf32> to vector<17x32xf32>
    %31 = arith.truncf %30 : vector<17x32xf32> to vector<17x32xbf16>
    %32 = vector.extract_strided_slice %29 {offsets = [0, 128], sizes = [17, 32], strides = [1, 1]} : vector<17x384xf32> to vector<17x32xf32>
    %33 = arith.truncf %32 : vector<17x32xf32> to vector<17x32xbf16>
    %34 = vector.extract_strided_slice %29 {offsets = [0, 256], sizes = [17, 32], strides = [1, 1]} : vector<17x384xf32> to vector<17x32xf32>
    %35 = arith.truncf %34 : vector<17x32xf32> to vector<17x32xbf16>
    %cst_15 = arith.constant dense<0.000000e+00> : vector<17x17xf32>
    %36 = tpu.matmul %31, %33, %cst_15 {dimension_numbers = #tpu.dot_dimension_numbers<[1], [1], [0], [0], [0, 0, 1, 0], [], []>} : vector<17x32xbf16>, vector<17x32xbf16>, vector<17x17xf32> -> vector<17x17xf32>
    %cst_16 = arith.constant 0.176776692 : f32
    %37 = vector.broadcast %cst_16 : f32 to vector<17x17xf32>
    %38 = arith.mulf %36, %37 : vector<17x17xf32>
    %cst_17 = arith.constant dense<0xFF800000> : vector<17xf32>
    %39 = vector.multi_reduction <maximumf>, %38, %cst_17 [1] : vector<17x17xf32> to vector<17xf32>
    %40 = vector.shape_cast %39 : vector<17xf32> to vector<17x1xf32>
    %41 = vector.broadcast %40 : vector<17x1xf32> to vector<17x17xf32>
    %42 = arith.subf %38, %41 : vector<17x17xf32>
    %43 = math.exp %42 : vector<17x17xf32>
    %cst_18 = arith.constant dense<0.000000e+00> : vector<17xf32>
    %44 = vector.multi_reduction <add>, %43, %cst_18 [1] : vector<17x17xf32> to vector<17xf32>
    %45 = vector.shape_cast %44 : vector<17xf32> to vector<17x1xf32>
    %46 = tpu.reciprocal %45 {approx = true} : vector<17x1xf32> -> vector<17x1xf32>
    %47 = vector.broadcast %46 : vector<17x1xf32> to vector<17x17xf32>
    %48 = arith.mulf %43, %47 : vector<17x17xf32>
    %49 = arith.truncf %48 : vector<17x17xf32> to vector<17x17xbf16>
    %cst_19 = arith.constant dense<0.000000e+00> : vector<17x32xf32>
    %50 = tpu.matmul %49, %35, %cst_19 {dimension_numbers = #tpu.dot_dimension_numbers<[1], [0], [0], [1], [0, 0, 1, 1], [], []>} : vector<17x17xbf16>, vector<17x32xbf16>, vector<17x32xf32> -> vector<17x32xf32>
    %51 = vector.extract_strided_slice %29 {offsets = [0, 32], sizes = [17, 32], strides = [1, 1]} : vector<17x384xf32> to vector<17x32xf32>
    %52 = arith.truncf %51 : vector<17x32xf32> to vector<17x32xbf16>
    %53 = vector.extract_strided_slice %29 {offsets = [0, 160], sizes = [17, 32], strides = [1, 1]} : vector<17x384xf32> to vector<17x32xf32>
    %54 = arith.truncf %53 : vector<17x32xf32> to vector<17x32xbf16>
    %55 = vector.extract_strided_slice %29 {offsets = [0, 288], sizes = [17, 32], strides = [1, 1]} : vector<17x384xf32> to vector<17x32xf32>
    %56 = arith.truncf %55 : vector<17x32xf32> to vector<17x32xbf16>
    %cst_20 = arith.constant dense<0.000000e+00> : vector<17x17xf32>
    %57 = tpu.matmul %52, %54, %cst_20 {dimension_numbers = #tpu.dot_dimension_numbers<[1], [1], [0], [0], [0, 0, 1, 0], [], []>} : vector<17x32xbf16>, vector<17x32xbf16>, vector<17x17xf32> -> vector<17x17xf32>
    %cst_21 = arith.constant 0.176776692 : f32
    %58 = vector.broadcast %cst_21 : f32 to vector<17x17xf32>
    %59 = arith.mulf %57, %58 : vector<17x17xf32>
    %cst_22 = arith.constant dense<0xFF800000> : vector<17xf32>
    %60 = vector.multi_reduction <maximumf>, %59, %cst_22 [1] : vector<17x17xf32> to vector<17xf32>
    %61 = vector.shape_cast %60 : vector<17xf32> to vector<17x1xf32>
    %62 = vector.broadcast %61 : vector<17x1xf32> to vector<17x17xf32>
    %63 = arith.subf %59, %62 : vector<17x17xf32>
    %64 = math.exp %63 : vector<17x17xf32>
    %cst_23 = arith.constant dense<0.000000e+00> : vector<17xf32>
    %65 = vector.multi_reduction <add>, %64, %cst_23 [1] : vector<17x17xf32> to vector<17xf32>
    %66 = vector.shape_cast %65 : vector<17xf32> to vector<17x1xf32>
    %67 = tpu.reciprocal %66 {approx = true} : vector<17x1xf32> -> vector<17x1xf32>
    %68 = vector.broadcast %67 : vector<17x1xf32> to vector<17x17xf32>
    %69 = arith.mulf %64, %68 : vector<17x17xf32>
    %70 = arith.truncf %69 : vector<17x17xf32> to vector<17x17xbf16>
    %cst_24 = arith.constant dense<0.000000e+00> : vector<17x32xf32>
    %71 = tpu.matmul %70, %56, %cst_24 {dimension_numbers = #tpu.dot_dimension_numbers<[1], [0], [0], [1], [0, 0, 1, 1], [], []>} : vector<17x17xbf16>, vector<17x32xbf16>, vector<17x32xf32> -> vector<17x32xf32>
    %72 = vector.extract_strided_slice %29 {offsets = [0, 64], sizes = [17, 32], strides = [1, 1]} : vector<17x384xf32> to vector<17x32xf32>
    %73 = arith.truncf %72 : vector<17x32xf32> to vector<17x32xbf16>
    %74 = vector.extract_strided_slice %29 {offsets = [0, 192], sizes = [17, 32], strides = [1, 1]} : vector<17x384xf32> to vector<17x32xf32>
    %75 = arith.truncf %74 : vector<17x32xf32> to vector<17x32xbf16>
    %76 = vector.extract_strided_slice %29 {offsets = [0, 320], sizes = [17, 32], strides = [1, 1]} : vector<17x384xf32> to vector<17x32xf32>
    %77 = arith.truncf %76 : vector<17x32xf32> to vector<17x32xbf16>
    %cst_25 = arith.constant dense<0.000000e+00> : vector<17x17xf32>
    %78 = tpu.matmul %73, %75, %cst_25 {dimension_numbers = #tpu.dot_dimension_numbers<[1], [1], [0], [0], [0, 0, 1, 0], [], []>} : vector<17x32xbf16>, vector<17x32xbf16>, vector<17x17xf32> -> vector<17x17xf32>
    %cst_26 = arith.constant 0.176776692 : f32
    %79 = vector.broadcast %cst_26 : f32 to vector<17x17xf32>
    %80 = arith.mulf %78, %79 : vector<17x17xf32>
    %cst_27 = arith.constant dense<0xFF800000> : vector<17xf32>
    %81 = vector.multi_reduction <maximumf>, %80, %cst_27 [1] : vector<17x17xf32> to vector<17xf32>
    %82 = vector.shape_cast %81 : vector<17xf32> to vector<17x1xf32>
    %83 = vector.broadcast %82 : vector<17x1xf32> to vector<17x17xf32>
    %84 = arith.subf %80, %83 : vector<17x17xf32>
    %85 = math.exp %84 : vector<17x17xf32>
    %cst_28 = arith.constant dense<0.000000e+00> : vector<17xf32>
    %86 = vector.multi_reduction <add>, %85, %cst_28 [1] : vector<17x17xf32> to vector<17xf32>
    %87 = vector.shape_cast %86 : vector<17xf32> to vector<17x1xf32>
    %88 = tpu.reciprocal %87 {approx = true} : vector<17x1xf32> -> vector<17x1xf32>
    %89 = vector.broadcast %88 : vector<17x1xf32> to vector<17x17xf32>
    %90 = arith.mulf %85, %89 : vector<17x17xf32>
    %91 = arith.truncf %90 : vector<17x17xf32> to vector<17x17xbf16>
    %cst_29 = arith.constant dense<0.000000e+00> : vector<17x32xf32>
    %92 = tpu.matmul %91, %77, %cst_29 {dimension_numbers = #tpu.dot_dimension_numbers<[1], [0], [0], [1], [0, 0, 1, 1], [], []>} : vector<17x17xbf16>, vector<17x32xbf16>, vector<17x32xf32> -> vector<17x32xf32>
    %93 = vector.extract_strided_slice %29 {offsets = [0, 96], sizes = [17, 32], strides = [1, 1]} : vector<17x384xf32> to vector<17x32xf32>
    %94 = arith.truncf %93 : vector<17x32xf32> to vector<17x32xbf16>
    %95 = vector.extract_strided_slice %29 {offsets = [0, 224], sizes = [17, 32], strides = [1, 1]} : vector<17x384xf32> to vector<17x32xf32>
    %96 = arith.truncf %95 : vector<17x32xf32> to vector<17x32xbf16>
    %97 = vector.extract_strided_slice %29 {offsets = [0, 352], sizes = [17, 32], strides = [1, 1]} : vector<17x384xf32> to vector<17x32xf32>
    %98 = arith.truncf %97 : vector<17x32xf32> to vector<17x32xbf16>
    %cst_30 = arith.constant dense<0.000000e+00> : vector<17x17xf32>
    %99 = tpu.matmul %94, %96, %cst_30 {dimension_numbers = #tpu.dot_dimension_numbers<[1], [1], [0], [0], [0, 0, 1, 0], [], []>} : vector<17x32xbf16>, vector<17x32xbf16>, vector<17x17xf32> -> vector<17x17xf32>
    %cst_31 = arith.constant 0.176776692 : f32
    %100 = vector.broadcast %cst_31 : f32 to vector<17x17xf32>
    %101 = arith.mulf %99, %100 : vector<17x17xf32>
    %cst_32 = arith.constant dense<0xFF800000> : vector<17xf32>
    %102 = vector.multi_reduction <maximumf>, %101, %cst_32 [1] : vector<17x17xf32> to vector<17xf32>
    %103 = vector.shape_cast %102 : vector<17xf32> to vector<17x1xf32>
    %104 = vector.broadcast %103 : vector<17x1xf32> to vector<17x17xf32>
    %105 = arith.subf %101, %104 : vector<17x17xf32>
    %106 = math.exp %105 : vector<17x17xf32>
    %cst_33 = arith.constant dense<0.000000e+00> : vector<17xf32>
    %107 = vector.multi_reduction <add>, %106, %cst_33 [1] : vector<17x17xf32> to vector<17xf32>
    %108 = vector.shape_cast %107 : vector<17xf32> to vector<17x1xf32>
    %109 = tpu.reciprocal %108 {approx = true} : vector<17x1xf32> -> vector<17x1xf32>
    %110 = vector.broadcast %109 : vector<17x1xf32> to vector<17x17xf32>
    %111 = arith.mulf %106, %110 : vector<17x17xf32>
    %112 = arith.truncf %111 : vector<17x17xf32> to vector<17x17xbf16>
    %cst_34 = arith.constant dense<0.000000e+00> : vector<17x32xf32>
    %113 = tpu.matmul %112, %98, %cst_34 {dimension_numbers = #tpu.dot_dimension_numbers<[1], [0], [0], [1], [0, 0, 1, 1], [], []>} : vector<17x17xbf16>, vector<17x32xbf16>, vector<17x32xf32> -> vector<17x32xf32>
    %114 = tpu.concatenate %50, %71, %92, %113 in 1 : vector<17x32xf32>, vector<17x32xf32>, vector<17x32xf32>, vector<17x32xf32> -> vector<17x128xf32>
    %115 = arith.truncf %114 : vector<17x128xf32> to vector<17x128xbf16>
    %c0_35 = arith.constant 0 : index
    %c0_36 = arith.constant 0 : index
    %116 = vector.load %arg6[%c0_35, %c0_36] : memref<128x128xbf16, #tpu.memory_space<vmem>>, vector<128x128xbf16>
    %cst_37 = arith.constant dense<0.000000e+00> : vector<17x128xf32>
    %117 = tpu.matmul %115, %116, %cst_37 {dimension_numbers = #tpu.dot_dimension_numbers<[1], [0], [0], [1], [0, 0, 1, 1], [], []>} : vector<17x128xbf16>, vector<128x128xbf16>, vector<17x128xf32> -> vector<17x128xf32>
    %c0_38 = arith.constant 0 : index
    %c0_39 = arith.constant 0 : index
    %118 = vector.load %arg7[%c0_38, %c0_39] : memref<1x128xf32, #tpu.memory_space<vmem>>, vector<1x128xf32>
    %119 = vector.broadcast %118 : vector<1x128xf32> to vector<17x128xf32>
    %120 = arith.addf %117, %119 : vector<17x128xf32>
    %121 = arith.addf %1, %120 : vector<17x128xf32>
    %c0_40 = arith.constant 0 : index
    %c0_41 = arith.constant 0 : index
    %c0_42 = arith.constant 0 : index
    %122 = vector.load %arg8[%c0_40, %c0_41, %c0_42] : memref<1x17x128xf32, #tpu.memory_space<vmem>>, vector<1x17x128xf32>
    %123 = vector.shape_cast %122 : vector<1x17x128xf32> to vector<17x128xf32>
    %124 = vector.shape_cast %121 : vector<17x128xf32> to vector<1x17x128xf32>
    tpu.vector_store %arg8[%c0_40, %c0_41, %c0_42], %124 {strides = array<i32>} : memref<1x17x128xf32, #tpu.memory_space<vmem>>, vector<1x17x128xf32>,
    return
  }
  func.func @transform_0(%arg0: i32) -> (i32, i32, i32) {
    %c0_i32 = arith.constant 0 : i32
    %c0_i32_0 = arith.constant 0 : i32
    %c0_i32_1 = arith.constant 0 : i32
    return %arg0, %c0_i32, %c0_i32_0 : i32, i32, i32
  }
  func.func @transform_1(%arg0: i32) -> (i32, i32) {
    %c0_i32 = arith.constant 0 : i32
    %c0_i32_0 = arith.constant 0 : i32
    %c0_i32_1 = arith.constant 0 : i32
    return %c0_i32, %c0_i32_0 : i32, i32
  }
  func.func @transform_2(%arg0: i32) -> (i32, i32) {
    %c0_i32 = arith.constant 0 : i32
    %c0_i32_0 = arith.constant 0 : i32
    %c0_i32_1 = arith.constant 0 : i32
    return %c0_i32, %c0_i32_0 : i32, i32
  }
  func.func @transform_3(%arg0: i32) -> (i32, i32) {
    %c0_i32 = arith.constant 0 : i32
    %c0_i32_0 = arith.constant 0 : i32
    %c0_i32_1 = arith.constant 0 : i32
    return %c0_i32, %c0_i32_0 : i32, i32
  }
  func.func @transform_4(%arg0: i32) -> (i32, i32) {
    %c0_i32 = arith.constant 0 : i32
    %c0_i32_0 = arith.constant 0 : i32
    %c0_i32_1 = arith.constant 0 : i32
    return %c0_i32, %c0_i32_0 : i32, i32
  }
  func.func @transform_5(%arg0: i32) -> (i32, i32) {
    %c0_i32 = arith.constant 0 : i32
    %c0_i32_0 = arith.constant 0 : i32
    %c0_i32_1 = arith.constant 0 : i32
    return %c0_i32, %c0_i32_0 : i32, i32
  }
  func.func @transform_6(%arg0: i32) -> (i32, i32) {
    %c0_i32 = arith.constant 0 : i32
    %c0_i32_0 = arith.constant 0 : i32
    %c0_i32_1 = arith.constant 0 : i32
    return %c0_i32, %c0_i32_0 : i32, i32
  }
  func.func @transform_7(%arg0: i32) -> (i32, i32, i32) {
    %c0_i32 = arith.constant 0 : i32
    %c0_i32_0 = arith.constant 0 : i32
    %c0_i32_1 = arith.constant 0 : i32
    return %arg0, %c0_i32, %c0_i32_0 : i32, i32, i32
  }
}

module attributes {stable_mosaic.version = 11 : i64} {
  func.func @_mlp_block_kernel(%arg0: i32, %arg1: memref<40x128xf32, #tpu.memory_space<vmem>>, %arg2: memref<1x128xf32, #tpu.memory_space<vmem>>, %arg3: memref<1x128xf32, #tpu.memory_space<vmem>>, %arg4: memref<128x512xbf16, #tpu.memory_space<vmem>>, %arg5: memref<1x512xf32, #tpu.memory_space<vmem>>, %arg6: memref<512x128xbf16, #tpu.memory_space<vmem>>, %arg7: memref<1x128xf32, #tpu.memory_space<vmem>>, %arg8: memref<40x128xf32, #tpu.memory_space<vmem>>) attributes {dimension_semantics = [#tpu.dimension_semantics<parallel>], iteration_bounds = array<i64: 1>, scalar_prefetch = 0 : i64, scratch_operands = 0 : i64, tpu.core_type = #tpu.core_type<tc>, window_params = [{transform_indices = @transform_0, window_bounds = array<i64: 40, 128>}, {pipeline_mode = #tpu.pipeline_mode<synchronous>, transform_indices = @transform_1, window_bounds = array<i64: 1, 128>}, {pipeline_mode = #tpu.pipeline_mode<synchronous>, transform_indices = @transform_2, window_bounds = array<i64: 1, 128>}, {pipeline_mode = #tpu.pipeline_mode<synchronous>, transform_indices = @transform_3, window_bounds = array<i64: 128, 512>}, {pipeline_mode = #tpu.pipeline_mode<synchronous>, transform_indices = @transform_4, window_bounds = array<i64: 1, 512>}, {pipeline_mode = #tpu.pipeline_mode<synchronous>, transform_indices = @transform_5, window_bounds = array<i64: 512, 128>}, {pipeline_mode = #tpu.pipeline_mode<synchronous>, transform_indices = @transform_6, window_bounds = array<i64: 1, 128>}, {transform_indices = @transform_7, window_bounds = array<i64: 40, 128>}]} {
    %c0 = arith.constant 0 : index
    %c0_0 = arith.constant 0 : index
    %0 = vector.load %arg1[%c0, %c0_0] : memref<40x128xf32, #tpu.memory_space<vmem>>, vector<40x128xf32>
    %c0_1 = arith.constant 0 : index
    %c0_2 = arith.constant 0 : index
    %1 = vector.load %arg2[%c0_1, %c0_2] : memref<1x128xf32, #tpu.memory_space<vmem>>, vector<1x128xf32>
    %c0_3 = arith.constant 0 : index
    %c0_4 = arith.constant 0 : index
    %2 = vector.load %arg3[%c0_3, %c0_4] : memref<1x128xf32, #tpu.memory_space<vmem>>, vector<1x128xf32>
    %cst = arith.constant dense<0.000000e+00> : vector<40xf32>
    %3 = vector.multi_reduction <add>, %0, %cst [1] : vector<40x128xf32> to vector<40xf32>
    %4 = vector.shape_cast %3 : vector<40xf32> to vector<40x1xf32>
    %cst_5 = arith.constant 1.280000e+02 : f32
    %5 = vector.broadcast %cst_5 : f32 to vector<40x1xf32>
    %6 = arith.divf %4, %5 : vector<40x1xf32>
    %7 = vector.broadcast %6 : vector<40x1xf32> to vector<40x128xf32>
    %8 = arith.subf %0, %7 : vector<40x128xf32>
    %9 = arith.mulf %8, %8 : vector<40x128xf32>
    %cst_6 = arith.constant dense<0.000000e+00> : vector<40xf32>
    %10 = vector.multi_reduction <add>, %9, %cst_6 [1] : vector<40x128xf32> to vector<40xf32>
    %11 = vector.shape_cast %10 : vector<40xf32> to vector<40x1xf32>
    %cst_7 = arith.constant 1.280000e+02 : f32
    %12 = vector.broadcast %cst_7 : f32 to vector<40x1xf32>
    %13 = arith.divf %11, %12 : vector<40x1xf32>
    %cst_8 = arith.constant 9.99999997E-7 : f32
    %14 = vector.broadcast %cst_8 : f32 to vector<40x1xf32>
    %15 = arith.addf %13, %14 : vector<40x1xf32>
    %16 = math.rsqrt %15 : vector<40x1xf32>
    %17 = vector.broadcast %16 : vector<40x1xf32> to vector<40x128xf32>
    %18 = arith.mulf %8, %17 : vector<40x128xf32>
    %19 = vector.broadcast %1 : vector<1x128xf32> to vector<40x128xf32>
    %20 = arith.mulf %18, %19 : vector<40x128xf32>
    %21 = vector.broadcast %2 : vector<1x128xf32> to vector<40x128xf32>
    %22 = arith.addf %20, %21 : vector<40x128xf32>
    %23 = arith.truncf %22 : vector<40x128xf32> to vector<40x128xbf16>
    %c0_9 = arith.constant 0 : index
    %c0_10 = arith.constant 0 : index
    %24 = vector.load %arg4[%c0_9, %c0_10] : memref<128x512xbf16, #tpu.memory_space<vmem>>, vector<128x512xbf16>
    %cst_11 = arith.constant dense<0.000000e+00> : vector<40x512xf32>
    %25 = tpu.matmul %23, %24, %cst_11 {dimension_numbers = #tpu.dot_dimension_numbers<[1], [0], [0], [1], [0, 0, 1, 1], [], []>} : vector<40x128xbf16>, vector<128x512xbf16>, vector<40x512xf32> -> vector<40x512xf32>
    %c0_12 = arith.constant 0 : index
    %c0_13 = arith.constant 0 : index
    %26 = vector.load %arg5[%c0_12, %c0_13] : memref<1x512xf32, #tpu.memory_space<vmem>>, vector<1x512xf32>
    %27 = vector.broadcast %26 : vector<1x512xf32> to vector<40x512xf32>
    %28 = arith.addf %25, %27 : vector<40x512xf32>
    %29 = arith.mulf %28, %28 : vector<40x512xf32>
    %30 = arith.mulf %28, %29 : vector<40x512xf32>
    %cst_14 = arith.constant 4.471500e-02 : f32
    %31 = vector.broadcast %cst_14 : f32 to vector<40x512xf32>
    %32 = arith.mulf %31, %30 : vector<40x512xf32>
    %33 = arith.addf %28, %32 : vector<40x512xf32>
    %cst_15 = arith.constant 0.797884583 : f32
    %34 = vector.broadcast %cst_15 : f32 to vector<40x512xf32>
    %35 = arith.mulf %34, %33 : vector<40x512xf32>
    %36 = math.tanh %35 : vector<40x512xf32>
    %cst_16 = arith.constant 1.000000e+00 : f32
    %37 = vector.broadcast %cst_16 : f32 to vector<40x512xf32>
    %38 = arith.addf %37, %36 : vector<40x512xf32>
    %cst_17 = arith.constant 5.000000e-01 : f32
    %39 = vector.broadcast %cst_17 : f32 to vector<40x512xf32>
    %40 = arith.mulf %39, %38 : vector<40x512xf32>
    %41 = arith.mulf %28, %40 : vector<40x512xf32>
    %42 = arith.truncf %41 : vector<40x512xf32> to vector<40x512xbf16>
    %c0_18 = arith.constant 0 : index
    %c0_19 = arith.constant 0 : index
    %43 = vector.load %arg6[%c0_18, %c0_19] : memref<512x128xbf16, #tpu.memory_space<vmem>>, vector<512x128xbf16>
    %cst_20 = arith.constant dense<0.000000e+00> : vector<40x128xf32>
    %44 = tpu.matmul %42, %43, %cst_20 {dimension_numbers = #tpu.dot_dimension_numbers<[1], [0], [0], [1], [0, 0, 1, 1], [], []>} : vector<40x512xbf16>, vector<512x128xbf16>, vector<40x128xf32> -> vector<40x128xf32>
    %c0_21 = arith.constant 0 : index
    %c0_22 = arith.constant 0 : index
    %45 = vector.load %arg7[%c0_21, %c0_22] : memref<1x128xf32, #tpu.memory_space<vmem>>, vector<1x128xf32>
    %46 = vector.broadcast %45 : vector<1x128xf32> to vector<40x128xf32>
    %47 = arith.addf %44, %46 : vector<40x128xf32>
    %48 = arith.addf %0, %47 : vector<40x128xf32>
    %c0_23 = arith.constant 0 : index
    %c0_24 = arith.constant 0 : index
    %49 = vector.load %arg8[%c0_23, %c0_24] : memref<40x128xf32, #tpu.memory_space<vmem>>, vector<40x128xf32>
    tpu.vector_store %arg8[%c0_23, %c0_24], %48 {strides = array<i32>} : memref<40x128xf32, #tpu.memory_space<vmem>>, vector<40x128xf32>,
    return
  }
  func.func @transform_0(%arg0: i32) -> (i32, i32) {
    %c0_i32 = arith.constant 0 : i32
    %c0_i32_0 = arith.constant 0 : i32
    return %arg0, %c0_i32 : i32, i32
  }
  func.func @transform_1(%arg0: i32) -> (i32, i32) {
    %c0_i32 = arith.constant 0 : i32
    %c0_i32_0 = arith.constant 0 : i32
    %c0_i32_1 = arith.constant 0 : i32
    return %c0_i32, %c0_i32_0 : i32, i32
  }
  func.func @transform_2(%arg0: i32) -> (i32, i32) {
    %c0_i32 = arith.constant 0 : i32
    %c0_i32_0 = arith.constant 0 : i32
    %c0_i32_1 = arith.constant 0 : i32
    return %c0_i32, %c0_i32_0 : i32, i32
  }
  func.func @transform_3(%arg0: i32) -> (i32, i32) {
    %c0_i32 = arith.constant 0 : i32
    %c0_i32_0 = arith.constant 0 : i32
    %c0_i32_1 = arith.constant 0 : i32
    return %c0_i32, %c0_i32_0 : i32, i32
  }
  func.func @transform_4(%arg0: i32) -> (i32, i32) {
    %c0_i32 = arith.constant 0 : i32
    %c0_i32_0 = arith.constant 0 : i32
    %c0_i32_1 = arith.constant 0 : i32
    return %c0_i32, %c0_i32_0 : i32, i32
  }
  func.func @transform_5(%arg0: i32) -> (i32, i32) {
    %c0_i32 = arith.constant 0 : i32
    %c0_i32_0 = arith.constant 0 : i32
    %c0_i32_1 = arith.constant 0 : i32
    return %c0_i32, %c0_i32_0 : i32, i32
  }
  func.func @transform_6(%arg0: i32) -> (i32, i32) {
    %c0_i32 = arith.constant 0 : i32
    %c0_i32_0 = arith.constant 0 : i32
    %c0_i32_1 = arith.constant 0 : i32
    return %c0_i32, %c0_i32_0 : i32, i32
  }
  func.func @transform_7(%arg0: i32) -> (i32, i32) {
    %c0_i32 = arith.constant 0 : i32
    %c0_i32_0 = arith.constant 0 : i32
    return %arg0, %c0_i32 : i32, i32
  }
}

module attributes {stable_mosaic.version = 11 : i64} {
  func.func @_layernorm_kernel(%arg0: i32, %arg1: memref<8x128xf32, #tpu.memory_space<vmem>>, %arg2: memref<1x128xf32, #tpu.memory_space<vmem>>, %arg3: memref<1x128xf32, #tpu.memory_space<vmem>>, %arg4: memref<8x128xf32, #tpu.memory_space<vmem>>) attributes {dimension_semantics = [#tpu.dimension_semantics<parallel>], iteration_bounds = array<i64: 1>, scalar_prefetch = 0 : i64, scratch_operands = 0 : i64, tpu.core_type = #tpu.core_type<tc>, window_params = [{transform_indices = @transform_0, window_bounds = array<i64: 8, 128>}, {pipeline_mode = #tpu.pipeline_mode<synchronous>, transform_indices = @transform_1, window_bounds = array<i64: 1, 128>}, {pipeline_mode = #tpu.pipeline_mode<synchronous>, transform_indices = @transform_2, window_bounds = array<i64: 1, 128>}, {transform_indices = @transform_3, window_bounds = array<i64: 8, 128>}]} {
    %c0 = arith.constant 0 : index
    %c0_0 = arith.constant 0 : index
    %0 = vector.load %arg1[%c0, %c0_0] : memref<8x128xf32, #tpu.memory_space<vmem>>, vector<8x128xf32>
    %c0_1 = arith.constant 0 : index
    %c0_2 = arith.constant 0 : index
    %1 = vector.load %arg2[%c0_1, %c0_2] : memref<1x128xf32, #tpu.memory_space<vmem>>, vector<1x128xf32>
    %c0_3 = arith.constant 0 : index
    %c0_4 = arith.constant 0 : index
    %2 = vector.load %arg3[%c0_3, %c0_4] : memref<1x128xf32, #tpu.memory_space<vmem>>, vector<1x128xf32>
    %cst = arith.constant dense<0.000000e+00> : vector<8xf32>
    %3 = vector.multi_reduction <add>, %0, %cst [1] : vector<8x128xf32> to vector<8xf32>
    %4 = vector.shape_cast %3 : vector<8xf32> to vector<8x1xf32>
    %cst_5 = arith.constant 1.280000e+02 : f32
    %5 = vector.broadcast %cst_5 : f32 to vector<8x1xf32>
    %6 = arith.divf %4, %5 : vector<8x1xf32>
    %7 = vector.broadcast %6 : vector<8x1xf32> to vector<8x128xf32>
    %8 = arith.subf %0, %7 : vector<8x128xf32>
    %9 = arith.mulf %8, %8 : vector<8x128xf32>
    %cst_6 = arith.constant dense<0.000000e+00> : vector<8xf32>
    %10 = vector.multi_reduction <add>, %9, %cst_6 [1] : vector<8x128xf32> to vector<8xf32>
    %11 = vector.shape_cast %10 : vector<8xf32> to vector<8x1xf32>
    %cst_7 = arith.constant 1.280000e+02 : f32
    %12 = vector.broadcast %cst_7 : f32 to vector<8x1xf32>
    %13 = arith.divf %11, %12 : vector<8x1xf32>
    %cst_8 = arith.constant 9.99999997E-7 : f32
    %14 = vector.broadcast %cst_8 : f32 to vector<8x1xf32>
    %15 = arith.addf %13, %14 : vector<8x1xf32>
    %16 = math.rsqrt %15 : vector<8x1xf32>
    %17 = vector.broadcast %16 : vector<8x1xf32> to vector<8x128xf32>
    %18 = arith.mulf %8, %17 : vector<8x128xf32>
    %19 = vector.broadcast %1 : vector<1x128xf32> to vector<8x128xf32>
    %20 = arith.mulf %18, %19 : vector<8x128xf32>
    %21 = vector.broadcast %2 : vector<1x128xf32> to vector<8x128xf32>
    %22 = arith.addf %20, %21 : vector<8x128xf32>
    %c0_9 = arith.constant 0 : index
    %c0_10 = arith.constant 0 : index
    %23 = vector.load %arg4[%c0_9, %c0_10] : memref<8x128xf32, #tpu.memory_space<vmem>>, vector<8x128xf32>
    tpu.vector_store %arg4[%c0_9, %c0_10], %22 {strides = array<i32>} : memref<8x128xf32, #tpu.memory_space<vmem>>, vector<8x128xf32>,
    return
  }
  func.func @transform_0(%arg0: i32) -> (i32, i32) {
    %c0_i32 = arith.constant 0 : i32
    %c0_i32_0 = arith.constant 0 : i32
    return %arg0, %c0_i32 : i32, i32
  }
  func.func @transform_1(%arg0: i32) -> (i32, i32) {
    %c0_i32 = arith.constant 0 : i32
    %c0_i32_0 = arith.constant 0 : i32
    %c0_i32_1 = arith.constant 0 : i32
    return %c0_i32, %c0_i32_0 : i32, i32
  }
  func.func @transform_2(%arg0: i32) -> (i32, i32) {
    %c0_i32 = arith.constant 0 : i32
    %c0_i32_0 = arith.constant 0 : i32
    %c0_i32_1 = arith.constant 0 : i32
    return %c0_i32, %c0_i32_0 : i32, i32
  }
  func.func @transform_3(%arg0: i32) -> (i32, i32) {
    %c0_i32 = arith.constant 0 : i32
    %c0_i32_0 = arith.constant 0 : i32
    return %arg0, %c0_i32 : i32, i32
  }
}

</mosaic_0001>

<llo_original>
// kernel: isavit_forward.7
$region0: #{isavit_forward.7}
  #allocation0 [shape = 'u32[]', space=smem, size = 0x4, offset = 0x4, fixed_abs, tag = 'smem constant byte address 0x4 - core index']
  #allocation1 [shape = 'u32[144,128]{1,0:T(1,128)}', space=vmem, size = 0x12000, scoped, tag = 'internal scratch']
  %s0 = inlined_call_operand.vmem [shape: f32[2,18,18], index: 0, kind: input, shape index: {}]
  %s1 = inlined_call_operand.vmem [shape: f32[20,18], index: 1, kind: input, shape index: {}]
  %s2 = inlined_call_operand.vmem [shape: f32[18,20], index: 2, kind: input, shape index: {}]
  %s3 = inlined_call_operand.vmem [shape: f32[2,20,20], index: 3, kind: output, shape index: {}]
  %s4 = sld [smem:[#allocation0]]
  $region45: #{isavit_forward.7} parent=0
    _
  %s6 = ssub.s32 1, %s4
  %s7 = scalar_select 0, %s6, %s4
  loop: start=0, step=1, limit=4
  $region2: #{isavit_forward.7} parent=0 // loop_pre_header
    _
  $region3: #{isavit_forward.7} parent=0 // loop_header
    %s9 = sphi 0, %s13
    %p10 = scmp.ge.s32.totalorder %s9, 4
    %s19 = sphi 0, %s21
    %s22 = sphi 0, %s19
    %s23 = sphi 0, %s22
    %s39 = sphi 0, %s23
    %s43 = sphi 0, %s43
    %s45 = sphi 0, %s43
    %s46 = sphi 0, %s45
    %s60 = sphi 0, %s46
    %s64 = sphi 0, %s64
    %s66 = sphi 0, %s64
    %s67 = sphi 0, %s66
    %s81 = sphi 0, %s67
    %s87 = sphi 0, %s89
    %s90 = sphi 0, %s87
    %s91 = sphi 0, %s90
    %s107 = sphi 0, %s91
  $region4: #{isavit_forward.7} parent=0 // loop_header_branch
    %12 = sbr.rel (%p10) target = $region8
  $region5: #{isavit_forward.7} parent=0 // loop_body
    %s14 = ssub.s32 %s9, 1
    %s15 = ssub.s32 %s9, 2
    %s16 = sadd.s32 %s9, 1
    %s17 = ssub.s32 %s9, %s16
    %p18 = scmp.eq.s32.totalorder %s17, 0
    %s20 = sadd.s32 %s19, 1
    %s21 = scalar_select %p18, %s19, %s20
    %p24 = pneg %p18
    %p25 = scmp.eq.s32.totalorder %s9, 1
    %p26 = por %p24, %p25
    %p27 = scmp.ne.s32.totalorder %s19, %s22
    %p28 = scmp.eq.s32.totalorder %s9, 0
    %p29 = por %p27, %p28
    %p30 = scmp.ne.s32.totalorder %s19, %s22
    %p31 = scmp.eq.s32.totalorder %s14, 1
    %p32 = por %p30, %p31
    %p33 = scmp.ne.s32.totalorder %s22, %s23
    %p34 = scmp.eq.s32.totalorder %s14, 0
    %p35 = por %p33, %p34
    %p36 = scmp.ne.s32.totalorder %s22, %s23
    %p37 = scmp.eq.s32.totalorder %s15, 1
    %p38 = por %p36, %p37
    %p40 = scmp.ne.s32.totalorder %s23, %s39
    %p41 = scmp.eq.s32.totalorder %s15, 0
    %p42 = por %p40, %p41
    %s44 = sadd.s32 %s43, 1
    %p47 = scmp.eq.s32.totalorder %s9, 1
    %p48 = scmp.ne.s32.totalorder %s43, %s45
    %p49 = scmp.eq.s32.totalorder %s9, 0
    %p50 = por %p48, %p49
    %p51 = scmp.ne.s32.totalorder %s43, %s45
    %p52 = scmp.eq.s32.totalorder %s14, 1
    %p53 = por %p51, %p52
    %p54 = scmp.ne.s32.totalorder %s45, %s46
    %p55 = scmp.eq.s32.totalorder %s14, 0
    %p56 = por %p54, %p55
    %p57 = scmp.ne.s32.totalorder %s45, %s46
    %p58 = scmp.eq.s32.totalorder %s15, 1
    %p59 = por %p57, %p58
    %p61 = scmp.ne.s32.totalorder %s46, %s60
    %p62 = scmp.eq.s32.totalorder %s15, 0
    %p63 = por %p61, %p62
    %s65 = sadd.s32 %s64, 1
    %p68 = scmp.eq.s32.totalorder %s9, 1
    %p69 = scmp.ne.s32.totalorder %s64, %s66
    %p70 = scmp.eq.s32.totalorder %s9, 0
    %p71 = por %p69, %p70
    %p72 = scmp.ne.s32.totalorder %s64, %s66
    %p73 = scmp.eq.s32.totalorder %s14, 1
    %p74 = por %p72, %p73
    %p75 = scmp.ne.s32.totalorder %s66, %s67
    %p76 = scmp.eq.s32.totalorder %s14, 0
    %p77 = por %p75, %p76
    %p78 = scmp.ne.s32.totalorder %s66, %s67
    %p79 = scmp.eq.s32.totalorder %s15, 1
    %p80 = por %p78, %p79
    %p82 = scmp.ne.s32.totalorder %s67, %s81
    %p83 = scmp.eq.s32.totalorder %s15, 0
    %p84 = por %p82, %p83
    %s85 = ssub.s32 %s9, %s16
    %p86 = scmp.eq.s32.totalorder %s85, 0
    %s88 = sadd.s32 %s87, 1
    %s89 = scalar_select %p86, %s87, %s88
    %p92 = pneg %p86
    %p93 = scmp.eq.s32.totalorder %s9, 1
    %p94 = por %p92, %p93
    %p95 = scmp.ne.s32.totalorder %s87, %s90
    %p96 = scmp.eq.s32.totalorder %s9, 0
    %p97 = por %p95, %p96
    %p98 = scmp.ne.s32.totalorder %s87, %s90
    %p99 = scmp.eq.s32.totalorder %s14, 1
    %p100 = por %p98, %p99
    %p101 = scmp.ne.s32.totalorder %s90, %s91
    %p102 = scmp.eq.s32.totalorder %s14, 0
    %p103 = por %p101, %p102
    %p104 = scmp.ne.s32.totalorder %s90, %s91
    %p105 = scmp.eq.s32.totalorder %s15, 1
    %p106 = por %p104, %p105
    %p108 = scmp.ne.s32.totalorder %s91, %s107
    %p109 = scmp.eq.s32.totalorder %s15, 0
    %p110 = por %p108, %p109
    %p111 = scmp.le.s32.totalorder 1, %s9
    %p112 = scmp.lt.s32.totalorder %s9, 3
    %p113 = pnand %p111, %p112
    %p114 = pneg %p113
    // Predicated region
    $region9: #{isavit_forward.7} parent=5 // pred_check
      _
    $region10: #{isavit_forward.7} parent=5 // pred_check_branch
      %116 = sbr.rel (%p113) target = $region12
    $region11: #{isavit_forward.7} parent=5 // pred_region
      %s117 = ssub.s32 %s9, 1
      // Predicated region
      $region13: #{isavit_forward.7} parent=11 // pred_check
        %p118 = pneg %p56
      $region14: #{isavit_forward.7} parent=11 // pred_check_branch
        %120 = sbr.rel (%p118) target = $region16
      $region15: #{isavit_forward.7} parent=11 // pred_region
        _
      $region16: #{isavit_forward.7} parent=11 // pred_fallthru
        _
      // Predicated region
      $region17: #{isavit_forward.7} parent=11 // pred_check
        %p121 = pneg %p77
      $region18: #{isavit_forward.7} parent=11 // pred_check_branch
        %123 = sbr.rel (%p121) target = $region20
      $region19: #{isavit_forward.7} parent=11 // pred_region
        _
      $region20: #{isavit_forward.7} parent=11 // pred_fallthru
        _
    $region12: #{isavit_forward.7} parent=5 // pred_fallthru
      _
    %p124 = scmp.lt.s32.totalorder %s9, 2
    // Predicated region
    $region21: #{isavit_forward.7} parent=5 // pred_check
      %p125 = pneg %p124
    $region22: #{isavit_forward.7} parent=5 // pred_check_branch
      %127 = sbr.rel (%p125) target = $region24
    $region23: #{isavit_forward.7} parent=5 // pred_region
      // Predicated region
      $region25: #{isavit_forward.7} parent=23 // pred_check
        %p128 = pneg %p29
      $region26: #{isavit_forward.7} parent=23 // pred_check_branch
        %130 = sbr.rel (%p128) target = $region28
      $region27: #{isavit_forward.7} parent=23 // pred_region
        %p131 = scmp.lt.s32.totalorder %s9, 1
        %s132 = scalar_select %p131, %s9, 1
        %s133 = smul.addr %s132, 3
        %s134 = smul.addr %s133, 8
        %s135 = scalar_lea.vmem %s0, %s134
      $region28: #{isavit_forward.7} parent=23 // pred_fallthru
        _
    $region24: #{isavit_forward.7} parent=5 // pred_fallthru
      _
    %p136 = scmp.le.s32.totalorder 1, %s9
    %p137 = scmp.lt.s32.totalorder %s9, 3
    %p138 = pnand %p136, %p137
    %p139 = pneg %p138
    // Predicated region
    $region29: #{isavit_forward.7} parent=5 // pred_check
      _
    $region30: #{isavit_forward.7} parent=5 // pred_check_branch
      %141 = sbr.rel (%p138) target = $region32
    $region31: #{isavit_forward.7} parent=5 // pred_region
      %s142 = ssub.s32 %s9, 1
      %p143 = scmp.lt.s32.totalorder %s14, 1
      %s144 = scalar_select %p143, %s14, 1
      %s145 = smul.addr %s144, 3
      %s146 = smul.addr %s145, 8
      %s147 = scalar_lea.vmem %s0, %s146
      %p148 = pneg %p35
      %p149 = pneg %p32
      %p150 = pneg %p56
      %p151 = pneg %p53
      %p152 = pneg %p77
      %p153 = pneg %p74
      %p154 = pneg %p103
      %p155 = pneg %p100
      %p156 = scmp.lt.s32.totalorder %s14, 1
      %s157 = scalar_select %p156, %s14, 1
      %s158 = smul.addr %s157, 3
      %s159 = smul.addr %s158, 8
      %s160 = scalar_lea.vmem %s3, %s159
      %p161 = scmp.lt.s32.totalorder %s14, 1
      %s162 = scalar_select %p161, %s14, 1
      %s163 = smul.addr %s162, 3
      %s164 = smul.addr %s163, 8
      %s165 = scalar_lea.vmem %s0, %s164
      %p166 = scmp.lt.s32.totalorder %s14, 1
      %s167 = scalar_select %p166, %s14, 1
      %s168 = smul.addr %s167, 3
      %s169 = smul.addr %s168, 8
      %s170 = scalar_lea.vmem %s3, %s169
      %v171 = vld [vmem:[%s165] sm:$0xff]
      %v172 = vld [vmem:[%s165 + $0x8] sm:$0xff]
      %v173 = vld [vmem:[%s165 + $0x10] sm:$0x3]
      %v174 = vld [vmem:[%s1] sm:$0xff]
      %v175 = vld [vmem:[%s1 + $0x8] sm:$0xff]
      %v176 = vld [vmem:[%s1 + $0x10] sm:$0xf]
      %vm177 = vcmask 146432
      %v179 = vsel %vm177, %v174, 0
      %v182 = vsel %vm177, %v175, 0
      %v185 = vsel %vm177, %v176, 0
      %vm187 = vcmask 1041408
      %v189 = vsel %vm187, %v173, 0
      %191 = vmatprep.subr.mxu0 0.0
      %192 = vmatpush1.msra.mxu0 %v171
      %193 = vmatprep.subr.mxu0 0.0
      %194 = vmatpush1.msra.mxu0 %v172
      %195 = vmatprep.subr.mxu0 0.0
      %196 = vmatpush1.msra.mxu0 %v189
      %197 = vmatprep.subr.mxu0 0.0
      %198 = vmatpush1.msra.mxu0 0.0
      %199 = vmatprep.subr.mxu0 0.0
      %200 = vmatpush1.msra.mxu0 0.0
      %201 = vmatprep.subr.mxu0 0.0
      %202 = vmatpush1.msra.mxu0 0.0
      %203 = vmatprep.subr.mxu0 0.0
      %204 = vmatpush1.msra.mxu0 0.0
      %205 = vmatprep.subr.mxu0 0.0
      %206 = vmatpush1.msra.mxu0 0.0
      %207 = vmatprep.subr.mxu0 0.0
      %208 = vmatpush1.msra.mxu0 0.0
      %209 = vmatprep.subr.mxu0 0.0
      %210 = vmatpush1.msra.mxu0 0.0
      %211 = vmatprep.subr.mxu0 0.0
      %212 = vmatpush1.msra.mxu0 0.0
      %213 = vmatprep.subr.mxu0 0.0
      %214 = vmatpush1.msra.mxu0 0.0
      %215 = vmatprep.subr.mxu0 0.0
      %216 = vmatpush1.msra.mxu0 0.0
      %217 = vmatprep.subr.mxu0 0.0
      %218 = vmatpush1.msra.mxu0 0.0
      %219 = vmatprep.subr.mxu0 0.0
      %220 = vmatpush1.msra.mxu0 0.0
      %221 = vmatprep.subr.mxu0 0.0
      %222 = vmatpush1.msra.mxu0 0.0
      %223 = vmatprep.subr.mxu0 0.0
      %224 = vmatpush1.msra.mxu0 0.0
      %225 = vmatprep.subr.mxu0 0.0
      %226 = vmatpush1.msra.mxu0 0.0
      %227 = vmatprep.subr.mxu0 0.0
      %228 = vmatpush1.msra.mxu0 0.0
      %229 = vmatprep.subr.mxu0 0.0
      %230 = vmatpush1.msra.mxu0 0.0
      %231 = vmatprep.subr.mxu0 0.0
      %232 = vmatpush1.msra.mxu0 0.0
      %233 = vmatprep.subr.mxu0 0.0
      %234 = vmatpush1.msra.mxu0 0.0
      %235 = vmatprep.subr.mxu0 0.0
      %236 = vmatpush1.msra.mxu0 0.0
      %237 = vmatprep.subr.mxu0 0.0
      %238 = vmatpush1.msra.mxu0 0.0
      %239 = vmatprep.subr.mxu0 0.0
      %240 = vmatpush1.msra.mxu0 0.0
      %241 = vmatprep.subr.mxu0 0.0
      %242 = vmatpush1.msra.mxu0 0.0
      %243 = vmatprep.subr.mxu0 0.0
      %244 = vmatpush1.msra.mxu0 0.0
      %245 = vmatprep.subr.mxu0 0.0
      %246 = vmatpush1.msra.mxu0 0.0
      %247 = vmatprep.subr.mxu0 0.0
      %248 = vmatpush1.msra.mxu0 0.0
      %249 = vmatprep.subr.mxu0 0.0
      %250 = vmatpush1.msra.mxu0 0.0
      %251 = vmatprep.subr.mxu0 0.0
      %252 = vmatpush1.msra.mxu0 0.0
      %253 = vmatprep.subr.mxu0 0.0
      %254 = vmatpush1.msra.mxu0 0.0
      %255 = vmatprep.mubr.f32.mxu0 0.0
      %256 = vmatmul.mubr.f32.gmra.mrb[0].mxu0 %v179
      %v257 = vpop.f32.mrb[0].mxu0
      %v258 = vadd.f32 0.0, %v257
      %v259 = vpop.f32.mrb[0].mxu0
      %260 = vmatprep.mubr.f32.mxu0 0.0
      %261 = vmatmul.mubr.f32.gmra.mrb[0].mxu0 %v182
      %v262 = vpop.f32.mrb[0].mxu0
      %v263 = vadd.f32 0.0, %v262
      %v264 = vpop.f32.mrb[0].mxu0
      %265 = vmatprep.mubr.f32.mxu0 0.0
      %266 = vmatmul.mubr.f32.gmra.mrb[0].mxu0 %v185
      %v267 = vpop.f32.mrb[0].mxu0
      %v268 = vadd.f32 0.0, %v267
      %v269 = vpop.f32.mrb[0].mxu0
      %270 = vdwg.mxu0
      %v271 = vld [vmem:[%s2] sm:$0xff]
      %v272 = vld [vmem:[%s2 + $0x8] sm:$0xff]
      %v273 = vld [vmem:[%s2 + $0x10] sm:$0x3]
      %v275 = vsel %vm177, %v258, 0
      %v278 = vsel %vm177, %v263, 0
      %v281 = vsel %vm177, %v268, 0
      %v284 = vsel %vm187, %v273, 0
      %286 = vmatprep.subr.mxu0 0.0
      %287 = vmatpush1.msra.mxu0 %v271
      %288 = vmatprep.subr.mxu0 0.0
      %289 = vmatpush1.msra.mxu0 %v272
      %290 = vmatprep.subr.mxu0 0.0
      %291 = vmatpush1.msra.mxu0 %v284
      %292 = vmatprep.subr.mxu0 0.0
      %293 = vmatpush1.msra.mxu0 0.0
      %294 = vmatprep.subr.mxu0 0.0
      %295 = vmatpush1.msra.mxu0 0.0
      %296 = vmatprep.subr.mxu0 0.0
      %297 = vmatpush1.msra.mxu0 0.0
      %298 = vmatprep.subr.mxu0 0.0
      %299 = vmatpush1.msra.mxu0 0.0
      %300 = vmatprep.subr.mxu0 0.0
      %301 = vmatpush1.msra.mxu0 0.0
      %302 = vmatprep.subr.mxu0 0.0
      %303 = vmatpush1.msra.mxu0 0.0
      %304 = vmatprep.subr.mxu0 0.0
      %305 = vmatpush1.msra.mxu0 0.0
      %306 = vmatprep.subr.mxu0 0.0
      %307 = vmatpush1.msra.mxu0 0.0
      %308 = vmatprep.subr.mxu0 0.0
      %309 = vmatpush1.msra.mxu0 0.0
      %310 = vmatprep.subr.mxu0 0.0
      %311 = vmatpush1.msra.mxu0 0.0
      %312 = vmatprep.subr.mxu0 0.0
      %313 = vmatpush1.msra.mxu0 0.0
      %314 = vmatprep.subr.mxu0 0.0
      %315 = vmatpush1.msra.mxu0 0.0
      %316 = vmatprep.subr.mxu0 0.0
      %317 = vmatpush1.msra.mxu0 0.0
      %318 = vmatprep.subr.mxu0 0.0
      %319 = vmatpush1.msra.mxu0 0.0
      %320 = vmatprep.subr.mxu0 0.0
      %321 = vmatpush1.msra.mxu0 0.0
      %322 = vmatprep.subr.mxu0 0.0
      %323 = vmatpush1.msra.mxu0 0.0
      %324 = vmatprep.subr.mxu0 0.0
      %325 = vmatpush1.msra.mxu0 0.0
      %326 = vmatprep.subr.mxu0 0.0
      %327 = vmatpush1.msra.mxu0 0.0
      %328 = vmatprep.subr.mxu0 0.0
      %329 = vmatpush1.msra.mxu0 0.0
      %330 = vmatprep.subr.mxu0 0.0
      %331 = vmatpush1.msra.mxu0 0.0
      %332 = vmatprep.subr.mxu0 0.0
      %333 = vmatpush1.msra.mxu0 0.0
      %334 = vmatprep.subr.mxu0 0.0
      %335 = vmatpush1.msra.mxu0 0.0
      %336 = vmatprep.subr.mxu0 0.0
      %337 = vmatpush1.msra.mxu0 0.0
      %338 = vmatprep.subr.mxu0 0.0
      %339 = vmatpush1.msra.mxu0 0.0
      %340 = vmatprep.subr.mxu0 0.0
      %341 = vmatpush1.msra.mxu0 0.0
      %342 = vmatprep.subr.mxu0 0.0
      %343 = vmatpush1.msra.mxu0 0.0
      %344 = vmatprep.subr.mxu0 0.0
      %345 = vmatpush1.msra.mxu0 0.0
      %346 = vmatprep.subr.mxu0 0.0
      %347 = vmatpush1.msra.mxu0 0.0
      %348 = vmatprep.subr.mxu0 0.0
      %349 = vmatpush1.msra.mxu0 0.0
      %350 = vmatprep.mubr.f32.mxu0 0.0
      %351 = vmatmul.mubr.f32.gmra.mrb[0].mxu0 %v275
      %v352 = vpop.f32.mrb[0].mxu0
      %v353 = vadd.f32 0.0, %v352
      %v354 = vpop.f32.mrb[0].mxu0
      %355 = vmatprep.mubr.f32.mxu0 0.0
      %356 = vmatmul.mubr.f32.gmra.mrb[0].mxu0 %v278
      %v357 = vpop.f32.mrb[0].mxu0
      %v358 = vadd.f32 0.0, %v357
      %v359 = vpop.f32.mrb[0].mxu0
      %360 = vmatprep.mubr.f32.mxu0 0.0
      %361 = vmatmul.mubr.f32.gmra.mrb[0].mxu0 %v281
      %v362 = vpop.f32.mrb[0].mxu0
      %v363 = vadd.f32 0.0, %v362
      %v364 = vpop.f32.mrb[0].mxu0
      %365 = vdwg.mxu0
      %vm366 = vcmask 162816
      %367 = vst.msk [vmem:[%s170] sm:$0xff] %vm366, %v353
      %368 = vst.msk [vmem:[%s170 + $0x8] sm:$0xff] %vm366, %v358
      %vm369 = vcmask 158720
      %370 = vst.msk [vmem:[%s170 + $0x10] sm:$0xf] %vm369, %v363
      %p371 = scmp.lt.s32.totalorder %s14, 1
      %s372 = scalar_select %p371, %s14, 1
      %s373 = smul.addr %s372, 3
      %s374 = smul.addr %s373, 8
      %s375 = scalar_lea.vmem %s3, %s374
      // Predicated region
      $region33: #{isavit_forward.7} parent=31 // pred_check
        %p376 = pneg %p100
      $region34: #{isavit_forward.7} parent=31 // pred_check_branch
        %378 = sbr.rel (%p376) target = $region36
      $region35: #{isavit_forward.7} parent=31 // pred_region
        _
      $region36: #{isavit_forward.7} parent=31 // pred_fallthru
        _
    $region32: #{isavit_forward.7} parent=5 // pred_fallthru
      _
    %p379 = scmp.le.s32.totalorder 2, %s9
    // Predicated region
    $region37: #{isavit_forward.7} parent=5 // pred_check
      %p380 = pneg %p379
    $region38: #{isavit_forward.7} parent=5 // pred_check_branch
      %382 = sbr.rel (%p380) target = $region40
    $region39: #{isavit_forward.7} parent=5 // pred_region
      %s383 = ssub.s32 %s9, 2
      // Predicated region
      $region41: #{isavit_forward.7} parent=39 // pred_check
        %p384 = pneg %p106
      $region42: #{isavit_forward.7} parent=39 // pred_check_branch
        %386 = sbr.rel (%p384) target = $region44
      $region43: #{isavit_forward.7} parent=39 // pred_region
        %p387 = scmp.lt.s32.totalorder %s15, 1
        %s388 = scalar_select %p387, %s15, 1
        %s389 = smul.addr %s388, 3
        %s390 = smul.addr %s389, 8
        %s391 = scalar_lea.vmem %s3, %s390
      $region44: #{isavit_forward.7} parent=39 // pred_fallthru
        _
    $region40: #{isavit_forward.7} parent=5 // pred_fallthru
      _
  $region6: #{isavit_forward.7} parent=0 // loop_footer
    %s13 = sadd.s32 1, %s9
  $region7: #{isavit_forward.7} parent=0 // loop_footer_branch
    %8 = sbr.rel target = $region3
  $region8: #{isavit_forward.7} parent=0 // loop_exit
    _

// kernel: isavit_forward.8
$region0: #{isavit_forward.8}
  #allocation0 [shape = 'u32[]', space=smem, size = 0x4, offset = 0x4, fixed_abs, tag = 'smem constant byte address 0x4 - core index']
  #allocation1 [shape = 'u32[144,128]{1,0:T(1,128)}', space=vmem, size = 0x12000, scoped, tag = 'internal scratch']
  %s0 = inlined_call_operand.vmem [shape: f32[32,25], index: 0, kind: input, shape index: {}]
  %s1 = inlined_call_operand.vmem [shape: f32[25,128], index: 1, kind: input, shape index: {}]
  %s2 = inlined_call_operand.vmem [shape: f32[1,128], index: 2, kind: input, shape index: {}]
  %s3 = inlined_call_operand.vmem [shape: f32[32,128], index: 3, kind: input, shape index: {}]
  %s4 = inlined_call_operand.vmem [shape: f32[32,128], index: 4, kind: output, shape index: {}]
  %s5 = sld [smem:[#allocation0]]
  $region26: #{isavit_forward.8} parent=0
    _
  %s7 = ssub.s32 1, %s5
  %s8 = scalar_select 0, %s7, %s5
  // Predicated region
  $region2: #{isavit_forward.8} parent=0 // pred_check
    _
  $region3: #{isavit_forward.8} parent=0 // pred_check_branch
    %10 = sbr.rel (0) target = $region5
  $region4: #{isavit_forward.8} parent=0 // pred_region
    _
  $region5: #{isavit_forward.8} parent=0 // pred_fallthru
    _
  // Predicated region
  $region6: #{isavit_forward.8} parent=0 // pred_check
    _
  $region7: #{isavit_forward.8} parent=0 // pred_check_branch
    %12 = sbr.rel (0) target = $region9
  $region8: #{isavit_forward.8} parent=0 // pred_region
    _
  $region9: #{isavit_forward.8} parent=0 // pred_fallthru
    _
  // Predicated region
  $region10: #{isavit_forward.8} parent=0 // pred_check
    _
  $region11: #{isavit_forward.8} parent=0 // pred_check_branch
    %14 = sbr.rel (0) target = $region13
  $region12: #{isavit_forward.8} parent=0 // pred_region
    _
  $region13: #{isavit_forward.8} parent=0 // pred_fallthru
    _
  // Predicated region
  $region14: #{isavit_forward.8} parent=0 // pred_check
    _
  $region15: #{isavit_forward.8} parent=0 // pred_check_branch
    %16 = sbr.rel (0) target = $region17
  $region16: #{isavit_forward.8} parent=0 // pred_region
    _
  $region17: #{isavit_forward.8} parent=0 // pred_fallthru
    _
  %v17 = vld [vmem:[%s0] sm:$0xff]
  %v18 = vld [vmem:[%s0 + $0x8] sm:$0xff]
  %v19 = vld [vmem:[%s0 + $0x10] sm:$0xff]
  %v20 = vld [vmem:[%s0 + $0x18] sm:$0xff]
  %v21 = vld [vmem:[%s1] sm:$0xff]
  %v22 = vld [vmem:[%s1 + $0x8] sm:$0xff]
  %v23 = vld [vmem:[%s1 + $0x10] sm:$0xff]
  %v24 = vld [vmem:[%s1 + $0x18] sm:$0x1]
  %v25 = vld [vmem:[%s2] sm:$0x1]
  %v27 = vlaneseq
  %v28 = vshrl.u32 %v27, 7
  %v29 = vsub.s32 0, %v28
  %v30 = vrot.slane %v25, %v29
  %vm32 = vcmask 203776
  %v34 = vsel %vm32, %v17, 0
  %v37 = vsel %vm32, %v18, 0
  %v40 = vsel %vm32, %v19, 0
  %v43 = vsel %vm32, %v20, 0
  %vm45 = vcmask 1040384
  %v47 = vsel %vm45, %v24, 0
  %49 = vmatprep.subr.mxu0 0.0
  %50 = vmatpush1.msra.mxu0 %v21
  %51 = vmatprep.subr.mxu0 0.0
  %52 = vmatpush1.msra.mxu0 %v22
  %53 = vmatprep.subr.mxu0 0.0
  %54 = vmatpush1.msra.mxu0 %v23
  %55 = vmatprep.subr.mxu0 0.0
  %56 = vmatpush1.msra.mxu0 %v47
  %57 = vmatprep.subr.mxu0 0.0
  %58 = vmatpush1.msra.mxu0 0.0
  %59 = vmatprep.subr.mxu0 0.0
  %60 = vmatpush1.msra.mxu0 0.0
  %61 = vmatprep.subr.mxu0 0.0
  %62 = vmatpush1.msra.mxu0 0.0
  %63 = vmatprep.subr.mxu0 0.0
  %64 = vmatpush1.msra.mxu0 0.0
  %65 = vmatprep.subr.mxu0 0.0
  %66 = vmatpush1.msra.mxu0 0.0
  %67 = vmatprep.subr.mxu0 0.0
  %68 = vmatpush1.msra.mxu0 0.0
  %69 = vmatprep.subr.mxu0 0.0
  %70 = vmatpush1.msra.mxu0 0.0
  %71 = vmatprep.subr.mxu0 0.0
  %72 = vmatpush1.msra.mxu0 0.0
  %73 = vmatprep.subr.mxu0 0.0
  %74 = vmatpush1.msra.mxu0 0.0
  %75 = vmatprep.subr.mxu0 0.0
  %76 = vmatpush1.msra.mxu0 0.0
  %77 = vmatprep.subr.mxu0 0.0
  %78 = vmatpush1.msra.mxu0 0.0
  %79 = vmatprep.subr.mxu0 0.0
  %80 = vmatpush1.msra.mxu0 0.0
  %81 = vmatprep.subr.mxu0 0.0
  %82 = vmatpush1.msra.mxu0 0.0
  %83 = vmatprep.subr.mxu0 0.0
  %84 = vmatpush1.msra.mxu0 0.0
  %85 = vmatprep.subr.mxu0 0.0
  %86 = vmatpush1.msra.mxu0 0.0
  %87 = vmatprep.subr.mxu0 0.0
  %88 = vmatpush1.msra.mxu0 0.0
  %89 = vmatprep.subr.mxu0 0.0
  %90 = vmatpush1.msra.mxu0 0.0
  %91 = vmatprep.subr.mxu0 0.0
  %92 = vmatpush1.msra.mxu0 0.0
  %93 = vmatprep.subr.mxu0 0.0
  %94 = vmatpush1.msra.mxu0 0.0
  %95 = vmatprep.subr.mxu0 0.0
  %96 = vmatpush1.msra.mxu0 0.0
  %97 = vmatprep.subr.mxu0 0.0
  %98 = vmatpush1.msra.mxu0 0.0
  %99 = vmatprep.subr.mxu0 0.0
  %100 = vmatpush1.msra.mxu0 0.0
  %101 = vmatprep.subr.mxu0 0.0
  %102 = vmatpush1.msra.mxu0 0.0
  %103 = vmatprep.subr.mxu0 0.0
  %104 = vmatpush1.msra.mxu0 0.0
  %105 = vmatprep.subr.mxu0 0.0
  %106 = vmatpush1.msra.mxu0 0.0
  %107 = vmatprep.subr.mxu0 0.0
  %108 = vmatpush1.msra.mxu0 0.0
  %109 = vmatprep.subr.mxu0 0.0
  %110 = vmatpush1.msra.mxu0 0.0
  %111 = vmatprep.subr.mxu0 0.0
  %112 = vmatpush1.msra.mxu0 0.0
  %113 = vmatprep.mubr.f32.mxu0 0.0
  %114 = vmatmul.mubr.f32.gmra.mrb[0].mxu0 %v34
  %v115 = vpop.f32.mrb[0].mxu0
  %v116 = vadd.f32 %v30, %v115
  %v117 = vpop.f32.mrb[0].mxu0
  %118 = vmatprep.mubr.f32.mxu0 0.0
  %119 = vmatmul.mubr.f32.gmra.mrb[0].mxu0 %v37
  %v120 = vpop.f32.mrb[0].mxu0
  %v121 = vadd.f32 %v30, %v120
  %v122 = vpop.f32.mrb[0].mxu0
  %123 = vmatprep.mubr.f32.mxu0 0.0
  %124 = vmatmul.mubr.f32.gmra.mrb[0].mxu0 %v40
  %v125 = vpop.f32.mrb[0].mxu0
  %v126 = vadd.f32 %v30, %v125
  %v127 = vpop.f32.mrb[0].mxu0
  %128 = vmatprep.mubr.f32.mxu0 0.0
  %129 = vmatmul.mubr.f32.gmra.mrb[0].mxu0 %v43
  %v130 = vpop.f32.mrb[0].mxu0
  %v131 = vadd.f32 %v30, %v130
  %v132 = vpop.f32.mrb[0].mxu0
  %133 = vdwg.mxu0
  %v134 = vld [vmem:[%s3] sm:$0xff]
  %v135 = vld [vmem:[%s3 + $0x8] sm:$0xff]
  %v136 = vld [vmem:[%s3 + $0x10] sm:$0xff]
  %v137 = vld [vmem:[%s3 + $0x18] sm:$0xff]
  %v138 = vadd.f32 %v116, %v134
  %v139 = vadd.f32 %v121, %v135
  %v140 = vadd.f32 %v126, %v136
  %v141 = vadd.f32 %v131, %v137
  %142 = vst [vmem:[%s4] sm:$0xff] %v138
  %143 = vst [vmem:[%s4 + $0x8] sm:$0xff] %v139
  %144 = vst [vmem:[%s4 + $0x10] sm:$0xff] %v140
  %145 = vst [vmem:[%s4 + $0x18] sm:$0xff] %v141
  // Predicated region
  $region18: #{isavit_forward.8} parent=0 // pred_check
    _
  $region19: #{isavit_forward.8} parent=0 // pred_check_branch
    %147 = sbr.rel (0) target = $region21
  $region20: #{isavit_forward.8} parent=0 // pred_region
    _
  $region21: #{isavit_forward.8} parent=0 // pred_fallthru
    _
  // Predicated region
  $region22: #{isavit_forward.8} parent=0 // pred_check
    _
  $region23: #{isavit_forward.8} parent=0 // pred_check_branch
    %149 = sbr.rel (0) target = $region25
  $region24: #{isavit_forward.8} parent=0 // pred_region
    _
  $region25: #{isavit_forward.8} parent=0 // pred_fallthru
    _

// kernel: isavit_forward.13
$region0: #{isavit_forward.13}
  #allocation0 [shape = 'u32[]', space=smem, size = 0x4, offset = 0x4, fixed_abs, tag = 'smem constant byte address 0x4 - core index']
  #allocation1 [shape = 'u32[144,128]{1,0:T(1,128)}', space=vmem, size = 0x12000, scoped, tag = 'internal scratch']
  %s0 = inlined_call_operand.vmem [shape: f32[8,128], index: 0, kind: input, shape index: {}]
  %s1 = inlined_call_operand.vmem [shape: f32[1,128], index: 1, kind: input, shape index: {}]
  %s2 = inlined_call_operand.vmem [shape: f32[1,128], index: 2, kind: input, shape index: {}]
  %s3 = inlined_call_operand.vmem [shape: f32[8,128], index: 3, kind: output, shape index: {}]
  %s4 = sld [smem:[#allocation0]]
  $region22: #{isavit_forward.13} parent=0
    _
  %s6 = ssub.s32 1, %s4
  %s7 = scalar_select 0, %s6, %s4
  // Predicated region
  $region2: #{isavit_forward.13} parent=0 // pred_check
    _
  $region3: #{isavit_forward.13} parent=0 // pred_check_branch
    %9 = sbr.rel (0) target = $region5
  $region4: #{isavit_forward.13} parent=0 // pred_region
    _
  $region5: #{isavit_forward.13} parent=0 // pred_fallthru
    _
  // Predicated region
  $region6: #{isavit_forward.13} parent=0 // pred_check
    _
  $region7: #{isavit_forward.13} parent=0 // pred_check_branch
    %11 = sbr.rel (0) target = $region9
  $region8: #{isavit_forward.13} parent=0 // pred_region
    _
  $region9: #{isavit_forward.13} parent=0 // pred_fallthru
    _
  // Predicated region
  $region10: #{isavit_forward.13} parent=0 // pred_check
    _
  $region11: #{isavit_forward.13} parent=0 // pred_check_branch
    %13 = sbr.rel (0) target = $region13
  $region12: #{isavit_forward.13} parent=0 // pred_region
    _
  $region13: #{isavit_forward.13} parent=0 // pred_fallthru
    _
  %v14 = vld [vmem:[%s0] sm:$0xff]
  %v15 = vld [vmem:[%s1] sm:$0x1]
  %v16 = vld [vmem:[%s2] sm:$0x1]
  %17 = vadd.xlane.f32.xlu0 %v14
  %v18 = vpop.xlane.xlu0 %17
  %v19 = vrcp.pop 128.0
  %v20 = vmul.f32 %v18, %v19
  %v21 = vsub.f32 %v14, %v20
  %v22 = vmul.f32 %v21, %v21
  %23 = vadd.xlane.f32.xlu0 %v22
  %v24 = vpop.xlane.xlu0 %23
  %v25 = vmul.f32 %v24, %v19
  %v26 = vadd.f32 %v25, 1e-06
  %v27 = vrsqrt.pop %v26
  %v28 = vmul.f32 %v21, %v27
  %v30 = vlaneseq
  %v31 = vshrl.u32 %v30, 7
  %v32 = vsub.s32 0, %v31
  %v33 = vrot.slane %v15, %v32
  %v35 = vmul.f32 %v28, %v33
  %v37 = vlaneseq
  %v38 = vshrl.u32 %v37, 7
  %v39 = vsub.s32 0, %v38
  %v40 = vrot.slane %v16, %v39
  %v42 = vadd.f32 %v35, %v40
  %43 = vst [vmem:[%s3] sm:$0xff] %v42
  // Predicated region
  $region14: #{isavit_forward.13} parent=0 // pred_check
    _
  $region15: #{isavit_forward.13} parent=0 // pred_check_branch
    %45 = sbr.rel (0) target = $region17
  $region16: #{isavit_forward.13} parent=0 // pred_region
    _
  $region17: #{isavit_forward.13} parent=0 // pred_fallthru
    _
  // Predicated region
  $region18: #{isavit_forward.13} parent=0 // pred_check
    _
  $region19: #{isavit_forward.13} parent=0 // pred_check_branch
    %47 = sbr.rel (0) target = $region21
  $region20: #{isavit_forward.13} parent=0 // pred_region
    _
  $region21: #{isavit_forward.13} parent=0 // pred_fallthru
    _

// kernel: isavit_forward.9
$region0: #{isavit_forward.9}
  #allocation0 [shape = 'u32[]', space=smem, size = 0x4, offset = 0x4, fixed_abs, tag = 'smem constant byte address 0x4 - core index']
  #allocation1 [shape = 'u32[144,128]{1,0:T(1,128)}', space=vmem, size = 0x12000, scoped, tag = 'internal scratch']
  %s0 = inlined_call_operand.vmem [shape: f32[2,17,128], index: 0, kind: input, shape index: {}]
  %s1 = inlined_call_operand.vmem [shape: f32[1,128], index: 1, kind: input, shape index: {}]
  %s2 = inlined_call_operand.vmem [shape: f32[1,128], index: 2, kind: input, shape index: {}]
  %s3 = inlined_call_operand.vmem [shape: bf16[128,384], index: 3, kind: input, shape index: {}]
  %s4 = inlined_call_operand.vmem [shape: f32[1,384], index: 4, kind: input, shape index: {}]
  %s5 = inlined_call_operand.vmem [shape: bf16[128,128], index: 5, kind: input, shape index: {}]
  %s6 = inlined_call_operand.vmem [shape: f32[1,128], index: 6, kind: input, shape index: {}]
  %s7 = inlined_call_operand.vmem [shape: f32[2,17,128], index: 7, kind: output, shape index: {}]
  %s8 = sld [smem:[#allocation0]]
  $region61: #{isavit_forward.9} parent=0
    _
  %s10 = ssub.s32 1, %s8
  %s11 = scalar_select 0, %s10, %s8
  loop: start=0, step=1, limit=4
  $region2: #{isavit_forward.9} parent=0 // loop_pre_header
    _
  $region3: #{isavit_forward.9} parent=0 // loop_header
    %s13 = sphi 0, %s17
    %p14 = scmp.ge.s32.totalorder %s13, 4
    %s23 = sphi 0, %s25
    %s26 = sphi 0, %s23
    %s27 = sphi 0, %s26
    %s43 = sphi 0, %s27
    %s47 = sphi 0, %s47
    %s49 = sphi 0, %s47
    %s50 = sphi 0, %s49
    %s64 = sphi 0, %s50
    %s68 = sphi 0, %s68
    %s70 = sphi 0, %s68
    %s71 = sphi 0, %s70
    %s85 = sphi 0, %s71
    %s89 = sphi 0, %s89
    %s91 = sphi 0, %s89
    %s92 = sphi 0, %s91
    %s106 = sphi 0, %s92
    %s110 = sphi 0, %s110
    %s112 = sphi 0, %s110
    %s113 = sphi 0, %s112
    %s127 = sphi 0, %s113
    %s131 = sphi 0, %s131
    %s133 = sphi 0, %s131
    %s134 = sphi 0, %s133
    %s148 = sphi 0, %s134
    %s152 = sphi 0, %s152
    %s154 = sphi 0, %s152
    %s155 = sphi 0, %s154
    %s169 = sphi 0, %s155
    %s175 = sphi 0, %s177
    %s178 = sphi 0, %s175
    %s179 = sphi 0, %s178
    %s195 = sphi 0, %s179
  $region4: #{isavit_forward.9} parent=0 // loop_header_branch
    %16 = sbr.rel (%p14) target = $region8
  $region5: #{isavit_forward.9} parent=0 // loop_body
    %s18 = ssub.s32 %s13, 1
    %s19 = ssub.s32 %s13, 2
    %s20 = sadd.s32 %s13, 1
    %s21 = ssub.s32 %s13, %s20
    %p22 = scmp.eq.s32.totalorder %s21, 0
    %s24 = sadd.s32 %s23, 1
    %s25 = scalar_select %p22, %s23, %s24
    %p28 = pneg %p22
    %p29 = scmp.eq.s32.totalorder %s13, 1
    %p30 = por %p28, %p29
    %p31 = scmp.ne.s32.totalorder %s23, %s26
    %p32 = scmp.eq.s32.totalorder %s13, 0
    %p33 = por %p31, %p32
    %p34 = scmp.ne.s32.totalorder %s23, %s26
    %p35 = scmp.eq.s32.totalorder %s18, 1
    %p36 = por %p34, %p35
    %p37 = scmp.ne.s32.totalorder %s26, %s27
    %p38 = scmp.eq.s32.totalorder %s18, 0
    %p39 = por %p37, %p38
    %p40 = scmp.ne.s32.totalorder %s26, %s27
    %p41 = scmp.eq.s32.totalorder %s19, 1
    %p42 = por %p40, %p41
    %p44 = scmp.ne.s32.totalorder %s27, %s43
    %p45 = scmp.eq.s32.totalorder %s19, 0
    %p46 = por %p44, %p45
    %s48 = sadd.s32 %s47, 1
    %p51 = scmp.eq.s32.totalorder %s13, 1
    %p52 = scmp.ne.s32.totalorder %s47, %s49
    %p53 = scmp.eq.s32.totalorder %s13, 0
    %p54 = por %p52, %p53
    %p55 = scmp.ne.s32.totalorder %s47, %s49
    %p56 = scmp.eq.s32.totalorder %s18, 1
    %p57 = por %p55, %p56
    %p58 = scmp.ne.s32.totalorder %s49, %s50
    %p59 = scmp.eq.s32.totalorder %s18, 0
    %p60 = por %p58, %p59
    %p61 = scmp.ne.s32.totalorder %s49, %s50
    %p62 = scmp.eq.s32.totalorder %s19, 1
    %p63 = por %p61, %p62
    %p65 = scmp.ne.s32.totalorder %s50, %s64
    %p66 = scmp.eq.s32.totalorder %s19, 0
    %p67 = por %p65, %p66
    %s69 = sadd.s32 %s68, 1
    %p72 = scmp.eq.s32.totalorder %s13, 1
    %p73 = scmp.ne.s32.totalorder %s68, %s70
    %p74 = scmp.eq.s32.totalorder %s13, 0
    %p75 = por %p73, %p74
    %p76 = scmp.ne.s32.totalorder %s68, %s70
    %p77 = scmp.eq.s32.totalorder %s18, 1
    %p78 = por %p76, %p77
    %p79 = scmp.ne.s32.totalorder %s70, %s71
    %p80 = scmp.eq.s32.totalorder %s18, 0
    %p81 = por %p79, %p80
    %p82 = scmp.ne.s32.totalorder %s70, %s71
    %p83 = scmp.eq.s32.totalorder %s19, 1
    %p84 = por %p82, %p83
    %p86 = scmp.ne.s32.totalorder %s71, %s85
    %p87 = scmp.eq.s32.totalorder %s19, 0
    %p88 = por %p86, %p87
    %s90 = sadd.s32 %s89, 1
    %p93 = scmp.eq.s32.totalorder %s13, 1
    %p94 = scmp.ne.s32.totalorder %s89, %s91
    %p95 = scmp.eq.s32.totalorder %s13, 0
    %p96 = por %p94, %p95
    %p97 = scmp.ne.s32.totalorder %s89, %s91
    %p98 = scmp.eq.s32.totalorder %s18, 1
    %p99 = por %p97, %p98
    %p100 = scmp.ne.s32.totalorder %s91, %s92
    %p101 = scmp.eq.s32.totalorder %s18, 0
    %p102 = por %p100, %p101
    %p103 = scmp.ne.s32.totalorder %s91, %s92
    %p104 = scmp.eq.s32.totalorder %s19, 1
    %p105 = por %p103, %p104
    %p107 = scmp.ne.s32.totalorder %s92, %s106
    %p108 = scmp.eq.s32.totalorder %s19, 0
    %p109 = por %p107, %p108
    %s111 = sadd.s32 %s110, 1
    %p114 = scmp.eq.s32.totalorder %s13, 1
    %p115 = scmp.ne.s32.totalorder %s110, %s112
    %p116 = scmp.eq.s32.totalorder %s13, 0
    %p117 = por %p115, %p116
    %p118 = scmp.ne.s32.totalorder %s110, %s112
    %p119 = scmp.eq.s32.totalorder %s18, 1
    %p120 = por %p118, %p119
    %p121 = scmp.ne.s32.totalorder %s112, %s113
    %p122 = scmp.eq.s32.totalorder %s18, 0
    %p123 = por %p121, %p122
    %p124 = scmp.ne.s32.totalorder %s112, %s113
    %p125 = scmp.eq.s32.totalorder %s19, 1
    %p126 = por %p124, %p125
    %p128 = scmp.ne.s32.totalorder %s113, %s127
    %p129 = scmp.eq.s32.totalorder %s19, 0
    %p130 = por %p128, %p129
    %s132 = sadd.s32 %s131, 1
    %p135 = scmp.eq.s32.totalorder %s13, 1
    %p136 = scmp.ne.s32.totalorder %s131, %s133
    %p137 = scmp.eq.s32.totalorder %s13, 0
    %p138 = por %p136, %p137
    %p139 = scmp.ne.s32.totalorder %s131, %s133
    %p140 = scmp.eq.s32.totalorder %s18, 1
    %p141 = por %p139, %p140
    %p142 = scmp.ne.s32.totalorder %s133, %s134
    %p143 = scmp.eq.s32.totalorder %s18, 0
    %p144 = por %p142, %p143
    %p145 = scmp.ne.s32.totalorder %s133, %s134
    %p146 = scmp.eq.s32.totalorder %s19, 1
    %p147 = por %p145, %p146
    %p149 = scmp.ne.s32.totalorder %s134, %s148
    %p150 = scmp.eq.s32.totalorder %s19, 0
    %p151 = por %p149, %p150
    %s153 = sadd.s32 %s152, 1
    %p156 = scmp.eq.s32.totalorder %s13, 1
    %p157 = scmp.ne.s32.totalorder %s152, %s154
    %p158 = scmp.eq.s32.totalorder %s13, 0
    %p159 = por %p157, %p158
    %p160 = scmp.ne.s32.totalorder %s152, %s154
    %p161 = scmp.eq.s32.totalorder %s18, 1
    %p162 = por %p160, %p161
    %p163 = scmp.ne.s32.totalorder %s154, %s155
    %p164 = scmp.eq.s32.totalorder %s18, 0
    %p165 = por %p163, %p164
    %p166 = scmp.ne.s32.totalorder %s154, %s155
    %p167 = scmp.eq.s32.totalorder %s19, 1
    %p168 = por %p166, %p167
    %p170 = scmp.ne.s32.totalorder %s155, %s169
    %p171 = scmp.eq.s32.totalorder %s19, 0
    %p172 = por %p170, %p171
    %s173 = ssub.s32 %s13, %s20
    %p174 = scmp.eq.s32.totalorder %s173, 0
    %s176 = sadd.s32 %s175, 1
    %s177 = scalar_select %p174, %s175, %s176
    %p180 = pneg %p174
    %p181 = scmp.eq.s32.totalorder %s13, 1
    %p182 = por %p180, %p181
    %p183 = scmp.ne.s32.totalorder %s175, %s178
    %p184 = scmp.eq.s32.totalorder %s13, 0
    %p185 = por %p183, %p184
    %p186 = scmp.ne.s32.totalorder %s175, %s178
    %p187 = scmp.eq.s32.totalorder %s18, 1
    %p188 = por %p186, %p187
    %p189 = scmp.ne.s32.totalorder %s178, %s179
    %p190 = scmp.eq.s32.totalorder %s18, 0
    %p191 = por %p189, %p190
    %p192 = scmp.ne.s32.totalorder %s178, %s179
    %p193 = scmp.eq.s32.totalorder %s19, 1
    %p194 = por %p192, %p193
    %p196 = scmp.ne.s32.totalorder %s179, %s195
    %p197 = scmp.eq.s32.totalorder %s19, 0
    %p198 = por %p196, %p197
    %p199 = scmp.le.s32.totalorder 1, %s13
    %p200 = scmp.lt.s32.totalorder %s13, 3
    %p201 = pnand %p199, %p200
    %p202 = pneg %p201
    // Predicated region
    $region9: #{isavit_forward.9} parent=5 // pred_check
      _
    $region10: #{isavit_forward.9} parent=5 // pred_check_branch
      %204 = sbr.rel (%p201) target = $region12
    $region11: #{isavit_forward.9} parent=5 // pred_region
      %s205 = ssub.s32 %s13, 1
      // Predicated region
      $region13: #{isavit_forward.9} parent=11 // pred_check
        %p206 = pneg %p60
      $region14: #{isavit_forward.9} parent=11 // pred_check_branch
        %208 = sbr.rel (%p206) target = $region16
      $region15: #{isavit_forward.9} parent=11 // pred_region
        _
      $region16: #{isavit_forward.9} parent=11 // pred_fallthru
        _
      // Predicated region
      $region17: #{isavit_forward.9} parent=11 // pred_check
        %p209 = pneg %p81
      $region18: #{isavit_forward.9} parent=11 // pred_check_branch
        %211 = sbr.rel (%p209) target = $region20
      $region19: #{isavit_forward.9} parent=11 // pred_region
        _
      $region20: #{isavit_forward.9} parent=11 // pred_fallthru
        _
      // Predicated region
      $region21: #{isavit_forward.9} parent=11 // pred_check
        %p212 = pneg %p102
      $region22: #{isavit_forward.9} parent=11 // pred_check_branch
        %214 = sbr.rel (%p212) target = $region24
      $region23: #{isavit_forward.9} parent=11 // pred_region
        _
      $region24: #{isavit_forward.9} parent=11 // pred_fallthru
        _
      // Predicated region
      $region25: #{isavit_forward.9} parent=11 // pred_check
        %p215 = pneg %p123
      $region26: #{isavit_forward.9} parent=11 // pred_check_branch
        %217 = sbr.rel (%p215) target = $region28
      $region27: #{isavit_forward.9} parent=11 // pred_region
        _
      $region28: #{isavit_forward.9} parent=11 // pred_fallthru
        _
      // Predicated region
      $region29: #{isavit_forward.9} parent=11 // pred_check
        %p218 = pneg %p144
      $region30: #{isavit_forward.9} parent=11 // pred_check_branch
        %220 = sbr.rel (%p218) target = $region32
      $region31: #{isavit_forward.9} parent=11 // pred_region
        _
      $region32: #{isavit_forward.9} parent=11 // pred_fallthru
        _
      // Predicated region
      $region33: #{isavit_forward.9} parent=11 // pred_check
        %p221 = pneg %p165
      $region34: #{isavit_forward.9} parent=11 // pred_check_branch
        %223 = sbr.rel (%p221) target = $region36
      $region35: #{isavit_forward.9} parent=11 // pred_region
        _
      $region36: #{isavit_forward.9} parent=11 // pred_fallthru
        _
    $region12: #{isavit_forward.9} parent=5 // pred_fallthru
      _
    %p224 = scmp.lt.s32.totalorder %s13, 2
    // Predicated region
    $region37: #{isavit_forward.9} parent=5 // pred_check
      %p225 = pneg %p224
    $region38: #{isavit_forward.9} parent=5 // pred_check_branch
      %227 = sbr.rel (%p225) target = $region40
    $region39: #{isavit_forward.9} parent=5 // pred_region
      // Predicated region
      $region41: #{isavit_forward.9} parent=39 // pred_check
        %p228 = pneg %p33
      $region42: #{isavit_forward.9} parent=39 // pred_check_branch
        %230 = sbr.rel (%p228) target = $region44
      $region43: #{isavit_forward.9} parent=39 // pred_region
        %p231 = scmp.lt.s32.totalorder %s13, 1
        %s232 = scalar_select %p231, %s13, 1
        %s233 = smul.addr %s232, 3
        %s234 = smul.addr %s233, 8
        %s235 = scalar_lea.vmem %s0, %s234
      $region44: #{isavit_forward.9} parent=39 // pred_fallthru
        _
    $region40: #{isavit_forward.9} parent=5 // pred_fallthru
      _
    %p236 = scmp.le.s32.totalorder 1, %s13
    %p237 = scmp.lt.s32.totalorder %s13, 3
    %p238 = pnand %p236, %p237
    %p239 = pneg %p238
    // Predicated region
    $region45: #{isavit_forward.9} parent=5 // pred_check
      _
    $region46: #{isavit_forward.9} parent=5 // pred_check_branch
      %241 = sbr.rel (%p238) target = $region48
    $region47: #{isavit_forward.9} parent=5 // pred_region
      %s242 = ssub.s32 %s13, 1
      %p243 = scmp.lt.s32.totalorder %s18, 1
      %s244 = scalar_select %p243, %s18, 1
      %s245 = smul.addr %s244, 3
      %s246 = smul.addr %s245, 8
      %s247 = scalar_lea.vmem %s0, %s246
      %p248 = pneg %p39
      %p249 = pneg %p36
      %p250 = pneg %p60
      %p251 = pneg %p57
      %p252 = pneg %p81
      %p253 = pneg %p78
      %p254 = pneg %p102
      %p255 = pneg %p99
      %p256 = pneg %p123
      %p257 = pneg %p120
      %p258 = pneg %p144
      %p259 = pneg %p141
      %p260 = pneg %p165
      %p261 = pneg %p162
      %p262 = pneg %p191
      %p263 = pneg %p188
      %p264 = scmp.lt.s32.totalorder %s18, 1
      %s265 = scalar_select %p264, %s18, 1
      %s266 = smul.addr %s265, 3
      %s267 = smul.addr %s266, 8
      %s268 = scalar_lea.vmem %s7, %s267
      %p269 = scmp.lt.s32.totalorder %s18, 1
      %s270 = scalar_select %p269, %s18, 1
      %s271 = smul.addr %s270, 3
      %s272 = smul.addr %s271, 8
      %s273 = scalar_lea.vmem %s0, %s272
      %p274 = scmp.lt.s32.totalorder %s18, 1
      %s275 = scalar_select %p274, %s18, 1
      %s276 = smul.addr %s275, 3
      %s277 = smul.addr %s276, 8
      %s278 = scalar_lea.vmem %s7, %s277
      %v280 = vld [vmem:[%s273] sm:$0xff]
      %v281 = vld [vmem:[%s273 + $0x8] sm:$0xff]
      %v282 = vld [vmem:[%s273 + $0x10] sm:$0x1]
      %v283 = vld [vmem:[%s1] sm:$0x1]
      %v284 = vld [vmem:[%s2] sm:$0x1]
      %285 = vadd.xlane.f32.xlu0 %v280
      %v286 = vpop.xlane.xlu0 %285
      %287 = vadd.xlane.f32.xlu0 %v281
      %v288 = vpop.xlane.xlu0 %287
      %vm289 = vcmask 1040384
      %v290 = vsel %vm289, %v282, 0.0
      %291 = vadd.xlane.f32.xlu0 %v290
      %v292 = vpop.xlane.xlu0 %291
      %v293 = vrcp.pop 128.0
      %v294 = vmul.f32 %v286, %v293
      %v295 = vmul.f32 %v288, %v293
      %v296 = vmul.f32 %v292, %v293
      %v297 = vsub.f32 %v280, %v294
      %v298 = vsub.f32 %v281, %v295
      %v299 = vsub.f32 %v282, %v296
      %v300 = vmul.f32 %v297, %v297
      %v301 = vmul.f32 %v298, %v298
      %v302 = vmul.f32 %v299, %v299
      %303 = vadd.xlane.f32.xlu0 %v300
      %v304 = vpop.xlane.xlu0 %303
      %305 = vadd.xlane.f32.xlu0 %v301
      %v306 = vpop.xlane.xlu0 %305
      %v307 = vsel %vm289, %v302, 0.0
      %308 = vadd.xlane.f32.xlu0 %v307
      %v309 = vpop.xlane.xlu0 %308
      %v310 = vmul.f32 %v304, %v293
      %v311 = vmul.f32 %v306, %v293
      %v312 = vmul.f32 %v309, %v293
      %v313 = vadd.f32 %v310, 1e-06
      %v314 = vadd.f32 %v311, 1e-06
      %v315 = vadd.f32 %v312, 1e-06
      %v316 = vrsqrt.pop %v313
      %v317 = vrsqrt.pop %v314
      %v318 = vrsqrt.pop %v315
      %v319 = vmul.f32 %v297, %v316
      %v320 = vmul.f32 %v298, %v317
      %v321 = vmul.f32 %v299, %v318
      %v323 = vlaneseq
      %v324 = vshrl.u32 %v323, 7
      %v325 = vsub.s32 0, %v324
      %v326 = vrot.slane %v283, %v325
      %v328 = vmul.f32 %v319, %v326
      %v329 = vmul.f32 %v320, %v326
      %v330 = vmul.f32 %v321, %v326
      %v332 = vlaneseq
      %v333 = vshrl.u32 %v332, 7
      %v334 = vsub.s32 0, %v333
      %v335 = vrot.slane %v284, %v334
      %v337 = vadd.f32 %v328, %v335
      %v338 = vadd.f32 %v329, %v335
      %v339 = vadd.f32 %v330, %v335
      %v340 = vpack.c.bf16 %v338, %v337
      %v341 = vpack.c.bf16 %v339, %v339
      %v342 = vld [vmem:[%s3] sm:$0xff]
      %v343 = vld [vmem:[%s3 + $0x8] sm:$0xf]
      %v344 = vld [vmem:[%s3 + $0xc] sm:$0xff]
      %v345 = vld [vmem:[%s3 + $0x14] sm:$0xf]
      %v346 = vld [vmem:[%s3 + $0x18] sm:$0xff]
      %v347 = vld [vmem:[%s3 + $0x20] sm:$0xf]
      %v348 = vld [vmem:[%s3 + $0x24] sm:$0xff]
      %v349 = vld [vmem:[%s3 + $0x2c] sm:$0xf]
      %v350 = vld [vmem:[%s3 + $0x30] sm:$0xff]
      %v351 = vld [vmem:[%s3 + $0x38] sm:$0xf]
      %v352 = vld [vmem:[%s3 + $0x3c] sm:$0xff]
      %v353 = vld [vmem:[%s3 + $0x44] sm:$0xf]
      %v354 = vld [vmem:[%s3 + $0x48] sm:$0xff]
      %v355 = vld [vmem:[%s3 + $0x50] sm:$0xf]
      %v356 = vld [vmem:[%s3 + $0x54] sm:$0xff]
      %v357 = vld [vmem:[%s3 + $0x5c] sm:$0xf]
      %v358 = vld [vmem:[%s3 + $0x60] sm:$0xff]
      %v359 = vld [vmem:[%s3 + $0x68] sm:$0xf]
      %v360 = vld [vmem:[%s3 + $0x6c] sm:$0xff]
      %v361 = vld [vmem:[%s3 + $0x74] sm:$0xf]
      %v362 = vld [vmem:[%s3 + $0x78] sm:$0xff]
      %v363 = vld [vmem:[%s3 + $0x80] sm:$0xf]
      %v364 = vld [vmem:[%s3 + $0x84] sm:$0xff]
      %v365 = vld [vmem:[%s3 + $0x8c] sm:$0xf]
      %v366 = vld [vmem:[%s3 + $0x90] sm:$0xff]
      %v367 = vld [vmem:[%s3 + $0x98] sm:$0xf]
      %v368 = vld [vmem:[%s3 + $0x9c] sm:$0xff]
      %v369 = vld [vmem:[%s3 + $0xa4] sm:$0xf]
      %v370 = vld [vmem:[%s3 + $0xa8] sm:$0xff]
      %v371 = vld [vmem:[%s3 + $0xb0] sm:$0xf]
      %v372 = vld [vmem:[%s3 + $0xb4] sm:$0xff]
      %v373 = vld [vmem:[%s3 + $0xbc] sm:$0xf]
      %v374 = vld [vmem:[%s4] sm:$0x7]
      %v376 = vlaneseq
      %v377 = vshrl.u32 %v376, 7
      %v378 = vsub.s32 0, %v377
      %v379 = vrot.slane %v374, %v378
      %v380 = vlaneseq
      %v381 = vshrl.u32 %v380, 7
      %v382 = vsub.s32 1, %v381
      %v383 = vrot.slane %v374, %v382
      %v384 = vlaneseq
      %v385 = vshrl.u32 %v384, 7
      %v386 = vsub.s32 2, %v385
      %v387 = vrot.slane %v374, %v386
      %v423 = vunpack.c.l.b16 %v342
      %v424 = vunpack.c.h.b16 %v342
      %v425 = vunpack.c.l.b16 %v343
      %v426 = vunpack.c.l.b16 %v344
      %v427 = vunpack.c.h.b16 %v344
      %v428 = vunpack.c.l.b16 %v345
      %v429 = vunpack.c.l.b16 %v346
      %v430 = vunpack.c.h.b16 %v346
      %v431 = vunpack.c.l.b16 %v347
      %v432 = vunpack.c.l.b16 %v348
      %v433 = vunpack.c.h.b16 %v348
      %v434 = vunpack.c.l.b16 %v349
      %v435 = vunpack.c.l.b16 %v350
      %v436 = vunpack.c.h.b16 %v350
      %v437 = vunpack.c.l.b16 %v351
      %v438 = vunpack.c.l.b16 %v352
      %v439 = vunpack.c.h.b16 %v352
      %v440 = vunpack.c.l.b16 %v353
      %v441 = vunpack.c.l.b16 %v354
      %v442 = vunpack.c.h.b16 %v354
      %v443 = vunpack.c.l.b16 %v355
      %v444 = vunpack.c.l.b16 %v356
      %v445 = vunpack.c.h.b16 %v356
      %v446 = vunpack.c.l.b16 %v357
      %v447 = vunpack.c.l.b16 %v358
      %v448 = vunpack.c.h.b16 %v358
      %v449 = vunpack.c.l.b16 %v359
      %v450 = vunpack.c.l.b16 %v360
      %v451 = vunpack.c.h.b16 %v360
      %v452 = vunpack.c.l.b16 %v361
      %v453 = vunpack.c.l.b16 %v362
      %v454 = vunpack.c.h.b16 %v362
      %v455 = vunpack.c.l.b16 %v363
      %v456 = vunpack.c.l.b16 %v364
      %v457 = vunpack.c.h.b16 %v364
      %v458 = vunpack.c.l.b16 %v365
      %v459 = vunpack.c.l.b16 %v366
      %v460 = vunpack.c.h.b16 %v366
      %v461 = vunpack.c.l.b16 %v367
      %v462 = vunpack.c.l.b16 %v368
      %v463 = vunpack.c.h.b16 %v368
      %v464 = vunpack.c.l.b16 %v369
      %v465 = vunpack.c.l.b16 %v370
      %v466 = vunpack.c.h.b16 %v370
      %v467 = vunpack.c.l.b16 %v371
      %v468 = vunpack.c.l.b16 %v372
      %v469 = vunpack.c.h.b16 %v372
      %v470 = vunpack.c.l.b16 %v373
      %v471 = vpack.c.b16 %v426, %v423
      %v472 = vpack.c.b16 %v427, %v424
      %v473 = vpack.c.b16 %v428, %v425
      %v474 = vpack.c.b16 %v432, %v429
      %v475 = vpack.c.b16 %v433, %v430
      %v476 = vpack.c.b16 %v434, %v431
      %v477 = vpack.c.b16 %v438, %v435
      %v478 = vpack.c.b16 %v439, %v436
      %v479 = vpack.c.b16 %v440, %v437
      %v480 = vpack.c.b16 %v444, %v441
      %v481 = vpack.c.b16 %v445, %v442
      %v482 = vpack.c.b16 %v446, %v443
      %v483 = vpack.c.b16 %v450, %v447
      %v484 = vpack.c.b16 %v451, %v448
      %v485 = vpack.c.b16 %v452, %v449
      %v486 = vpack.c.b16 %v456, %v453
      %v487 = vpack.c.b16 %v457, %v454
      %v488 = vpack.c.b16 %v458, %v455
      %v489 = vpack.c.b16 %v462, %v459
      %v490 = vpack.c.b16 %v463, %v460
      %v491 = vpack.c.b16 %v464, %v461
      %v492 = vpack.c.b16 %v468, %v465
      %v493 = vpack.c.b16 %v469, %v466
      %v494 = vpack.c.b16 %v470, %v467
      %519 = vmatprep.subr.bf16.mxu0 %v472
      %520 = vmatpush1.bf16.msra.mxu0 %v471
      %521 = vmatprep.subr.bf16.mxu0 %v475
      %522 = vmatpush1.bf16.msra.mxu0 %v474
      %523 = vmatprep.subr.bf16.mxu0 %v478
      %524 = vmatpush1.bf16.msra.mxu0 %v477
      %525 = vmatprep.subr.bf16.mxu0 %v481
      %526 = vmatpush1.bf16.msra.mxu0 %v480
      %527 = vmatprep.subr.bf16.mxu0 %v484
      %528 = vmatpush1.bf16.msra.mxu0 %v483
      %529 = vmatprep.subr.bf16.mxu0 %v487
      %530 = vmatpush1.bf16.msra.mxu0 %v486
      %531 = vmatprep.subr.bf16.mxu0 %v490
      %532 = vmatpush1.bf16.msra.mxu0 %v489
      %533 = vmatprep.subr.bf16.mxu0 %v493
      %534 = vmatpush1.bf16.msra.mxu0 %v492
      %535 = vmatprep.subr.bf16.mxu0 0
      %536 = vmatpush1.bf16.msra.mxu0 0
      %537 = vmatprep.subr.bf16.mxu0 0
      %538 = vmatpush1.bf16.msra.mxu0 0
      %539 = vmatprep.subr.bf16.mxu0 0
      %540 = vmatpush1.bf16.msra.mxu0 0
      %541 = vmatprep.subr.bf16.mxu0 0
      %542 = vmatpush1.bf16.msra.mxu0 0
      %543 = vmatprep.subr.bf16.mxu0 0
      %544 = vmatpush1.bf16.msra.mxu0 0
      %545 = vmatprep.subr.bf16.mxu0 0
      %546 = vmatpush1.bf16.msra.mxu0 0
      %547 = vmatprep.subr.bf16.mxu0 0
      %548 = vmatpush1.bf16.msra.mxu0 0
      %549 = vmatprep.subr.bf16.mxu0 0
      %550 = vmatpush1.bf16.msra.mxu0 0
      %551 = vmatprep.mubr.bf16.mxu0 0
      %552 = vmatmul.mubr.bf16.gmra.mrb[0].mxu0 %v340
      %v553 = vpop.f32.mrb[0].mxu0
      %v554 = vadd.f32 %v379, %v553
      %v555 = vpop.f32.mrb[0].mxu0
      %v556 = vadd.f32 %v383, %v555
      %v557 = vpop.f32.mrb[0].mxu0
      %v558 = vadd.f32 %v379, %v557
      %v559 = vpop.f32.mrb[0].mxu0
      %v560 = vadd.f32 %v383, %v559
      %561 = vmatprep.mubr.bf16.mxu0 0
      %562 = vmatmul.mubr.bf16.gmra.mrb[0].mxu0 %v341
      %v563 = vpop.f32.mrb[0].mxu0
      %v564 = vadd.f32 %v379, %v563
      %v565 = vpop.f32.mrb[0].mxu0
      %v566 = vadd.f32 %v383, %v565
      %v567 = vpop.f32.mrb[0].mxu0
      %v568 = vpop.f32.mrb[0].mxu0
      %569 = vdwg.mxu0
      %570 = vmatprep.subr.bf16.mxu0 0
      %571 = vmatpush1.bf16.msra.mxu0 %v473
      %572 = vmatprep.subr.bf16.mxu0 0
      %573 = vmatpush1.bf16.msra.mxu0 %v476
      %574 = vmatprep.subr.bf16.mxu0 0
      %575 = vmatpush1.bf16.msra.mxu0 %v479
      %576 = vmatprep.subr.bf16.mxu0 0
      %577 = vmatpush1.bf16.msra.mxu0 %v482
      %578 = vmatprep.subr.bf16.mxu0 0
      %579 = vmatpush1.bf16.msra.mxu0 %v485
      %580 = vmatprep.subr.bf16.mxu0 0
      %581 = vmatpush1.bf16.msra.mxu0 %v488
      %582 = vmatprep.subr.bf16.mxu0 0
      %583 = vmatpush1.bf16.msra.mxu0 %v491
      %584 = vmatprep.subr.bf16.mxu0 0
      %585 = vmatpush1.bf16.msra.mxu0 %v494
      %586 = vmatprep.subr.bf16.mxu0 0
      %587 = vmatpush1.bf16.msra.mxu0 0
      %588 = vmatprep.subr.bf16.mxu0 0
      %589 = vmatpush1.bf16.msra.mxu0 0
      %590 = vmatprep.subr.bf16.mxu0 0
      %591 = vmatpush1.bf16.msra.mxu0 0
      %592 = vmatprep.subr.bf16.mxu0 0
      %593 = vmatpush1.bf16.msra.mxu0 0
      %594 = vmatprep.subr.bf16.mxu0 0
      %595 = vmatpush1.bf16.msra.mxu0 0
      %596 = vmatprep.subr.bf16.mxu0 0
      %597 = vmatpush1.bf16.msra.mxu0 0
      %598 = vmatprep.subr.bf16.mxu0 0
      %599 = vmatpush1.bf16.msra.mxu0 0
      %600 = vmatprep.subr.bf16.mxu0 0
      %601 = vmatpush1.bf16.msra.mxu0 0
      %602 = vmatprep.mubr.bf16.mxu0 0
      %603 = vmatmul.mubr.bf16.gmra.mrb[0].mxu0 %v340
      %v604 = vpop.f32.mrb[0].mxu0
      %v605 = vadd.f32 %v387, %v604
      %v606 = vpop.f32.mrb[0].mxu0
      %v607 = vpop.f32.mrb[0].mxu0
      %v608 = vadd.f32 %v387, %v607
      %v609 = vpop.f32.mrb[0].mxu0
      %610 = vmatprep.mubr.bf16.mxu0 0
      %611 = vmatmul.mubr.bf16.gmra.mrb[0].mxu0 %v341
      %v612 = vpop.f32.mrb[0].mxu0
      %v613 = vadd.f32 %v387, %v612
      %v614 = vpop.f32.mrb[0].mxu0
      %v615 = vpop.f32.mrb[0].mxu0
      %v616 = vpop.f32.mrb[0].mxu0
      %617 = vdwg.mxu0
      %v618 = vpack.c.bf16 %v558, %v554
      %v619 = vpack.c.bf16 %v564, %v564
      %v620 = vpack.c.bf16 %v560, %v556
      %v621 = vpack.c.bf16 %v566, %v566
      %v622 = vpack.c.bf16 %v608, %v605
      %v623 = vpack.c.bf16 %v613, %v613
      %vm624 = vcmask 261120
      %v626 = vsel %vm624, %v618, 0
      %v629 = vsel %vm624, %v619, 0
      %v632 = vsel %vm624, %v620, 0
      %v635 = vsel %vm624, %v621, 0
      %637 = vmatprep.subr.bf16.mxu0 0
      %638 = vmatpush1.bf16.xpose.msra.mxu0 %v632
      %639 = vmatprep.subr.bf16.mxu0 0
      %640 = vmatpush1.bf16.xpose.msra.mxu0 %v635
      %641 = vmatprep.subr.bf16.mxu0 0
      %642 = vmatpush1.bf16.xpose.msra.mxu0 0
      %643 = vmatprep.subr.bf16.mxu0 0
      %644 = vmatpush1.bf16.xpose.msra.mxu0 0
      %645 = vmatprep.subr.bf16.mxu0 0
      %646 = vmatpush1.bf16.xpose.msra.mxu0 0
      %647 = vmatprep.subr.bf16.mxu0 0
      %648 = vmatpush1.bf16.xpose.msra.mxu0 0
      %649 = vmatprep.subr.bf16.mxu0 0
      %650 = vmatpush1.bf16.xpose.msra.mxu0 0
      %651 = vmatprep.subr.bf16.mxu0 0
      %652 = vmatpush1.bf16.xpose.msra.mxu0 0
      %653 = vmatprep.subr.bf16.mxu0 0
      %654 = vmatpush1.bf16.xpose.msra.mxu0 0
      %655 = vmatprep.subr.bf16.mxu0 0
      %656 = vmatpush1.bf16.xpose.msra.mxu0 0
      %657 = vmatprep.subr.bf16.mxu0 0
      %658 = vmatpush1.bf16.xpose.msra.mxu0 0
      %659 = vmatprep.subr.bf16.mxu0 0
      %660 = vmatpush1.bf16.xpose.msra.mxu0 0
      %661 = vmatprep.subr.bf16.mxu0 0
      %662 = vmatpush1.bf16.xpose.msra.mxu0 0
      %663 = vmatprep.subr.bf16.mxu0 0
      %664 = vmatpush1.bf16.xpose.msra.mxu0 0
      %665 = vmatprep.subr.bf16.mxu0 0
      %666 = vmatpush1.bf16.xpose.msra.mxu0 0
      %667 = vmatprep.subr.bf16.mxu0 0
      %668 = vmatpush1.bf16.xpose.msra.mxu0 0
      %669 = vmatprep.mubr.bf16.mxu0 0
      %670 = vmatmul.mubr.bf16.gmra.mrb[0].mxu0 %v626
      %v671 = vpop.f32.mrb[0].mxu0
      %v672 = vadd.f32 0.0, %v671
      %v673 = vpop.f32.mrb[0].mxu0
      %v674 = vpop.f32.mrb[0].mxu0
      %v675 = vadd.f32 0.0, %v674
      %v676 = vpop.f32.mrb[0].mxu0
      %677 = vmatprep.mubr.bf16.mxu0 0
      %678 = vmatmul.mubr.bf16.gmra.mrb[0].mxu0 %v629
      %v679 = vpop.f32.mrb[0].mxu0
      %v680 = vadd.f32 0.0, %v679
      %v681 = vpop.f32.mrb[0].mxu0
      %v682 = vpop.f32.mrb[0].mxu0
      %v683 = vpop.f32.mrb[0].mxu0
      %684 = vdwg.mxu0
      %v685 = vmul.f32 %v672, 0.17677669
      %v686 = vmul.f32 %v675, 0.17677669
      %v687 = vmul.f32 %v680, 0.17677669
      %vm688 = vcmask 138240
      %v689 = vsel %vm688, %v685, -inf
      %690 = vmax.xlane.f32.xlu0 %v689
      %v691 = vpop.xlane.xlu0 %690
      %v692 = vsel %vm688, %v686, -inf
      %693 = vmax.xlane.f32.xlu0 %v692
      %v694 = vpop.xlane.xlu0 %693
      %vm695 = vcmask 131072
      %v696 = vsel %vm695, %v687, -inf
      %697 = vmax.xlane.f32.xlu0 %v696
      %v698 = vpop.xlane.xlu0 %697
      %v699 = vsub.f32 %v685, %v691
      %v700 = vsub.f32 %v686, %v694
      %v701 = vsub.f32 %v687, %v698
      %v702 = vmul.f32 %v699, 1.442695
      %v703 = vpow.pop %v702
      %v704 = vmul.f32 %v700, 1.442695
      %v705 = vpow.pop %v704
      %v706 = vmul.f32 %v701, 1.442695
      %v707 = vpow.pop %v706
      %v708 = vsel %vm688, %v703, 0.0
      %709 = vadd.xlane.f32.xlu0 %v708
      %v710 = vpop.xlane.xlu0 %709
      %v711 = vsel %vm688, %v705, 0.0
      %712 = vadd.xlane.f32.xlu0 %v711
      %v713 = vpop.xlane.xlu0 %712
      %v714 = vsel %vm695, %v707, 0.0
      %715 = vadd.xlane.f32.xlu0 %v714
      %v716 = vpop.xlane.xlu0 %715
      %v717 = vrcp.pop %v710
      %v718 = vrcp.pop %v713
      %v719 = vrcp.pop %v716
      %v720 = vmul.f32 %v703, %v717
      %v721 = vmul.f32 %v705, %v718
      %v722 = vmul.f32 %v707, %v719
      %v723 = vpack.c.bf16 %v721, %v720
      %v724 = vpack.c.bf16 %v722, %v722
      %v726 = vsel %vm688, %v723, 0
      %v729 = vsel %vm688, %v724, 0
      %v731 = vsel 0, 4294967295, 65535
      %v732 = vsel %vm289, %v731, 0
      %v734 = vand.u32 %v623, %v732
      %736 = vmatprep.subr.bf16.mxu0 0
      %737 = vmatpush1.bf16.msra.mxu0 %v622
      %738 = vmatprep.subr.bf16.mxu0 0
      %739 = vmatpush1.bf16.msra.mxu0 %v734
      %740 = vmatprep.subr.bf16.mxu0 0
      %741 = vmatpush1.bf16.msra.mxu0 0
      %742 = vmatprep.subr.bf16.mxu0 0
      %743 = vmatpush1.bf16.msra.mxu0 0
      %744 = vmatprep.subr.bf16.mxu0 0
      %745 = vmatpush1.bf16.msra.mxu0 0
      %746 = vmatprep.subr.bf16.mxu0 0
      %747 = vmatpush1.bf16.msra.mxu0 0
      %748 = vmatprep.subr.bf16.mxu0 0
      %749 = vmatpush1.bf16.msra.mxu0 0
      %750 = vmatprep.subr.bf16.mxu0 0
      %751 = vmatpush1.bf16.msra.mxu0 0
      %752 = vmatprep.subr.bf16.mxu0 0
      %753 = vmatpush1.bf16.msra.mxu0 0
      %754 = vmatprep.subr.bf16.mxu0 0
      %755 = vmatpush1.bf16.msra.mxu0 0
      %756 = vmatprep.subr.bf16.mxu0 0
      %757 = vmatpush1.bf16.msra.mxu0 0
      %758 = vmatprep.subr.bf16.mxu0 0
      %759 = vmatpush1.bf16.msra.mxu0 0
      %760 = vmatprep.subr.bf16.mxu0 0
      %761 = vmatpush1.bf16.msra.mxu0 0
      %762 = vmatprep.subr.bf16.mxu0 0
      %763 = vmatpush1.bf16.msra.mxu0 0
      %764 = vmatprep.subr.bf16.mxu0 0
      %765 = vmatpush1.bf16.msra.mxu0 0
      %766 = vmatprep.subr.bf16.mxu0 0
      %767 = vmatpush1.bf16.msra.mxu0 0
      %768 = vmatprep.mubr.bf16.mxu0 0
      %769 = vmatmul.mubr.bf16.gmra.mrb[0].mxu0 %v726
      %v770 = vpop.f32.mrb[0].mxu0
      %v771 = vadd.f32 0.0, %v770
      %v772 = vpop.f32.mrb[0].mxu0
      %v773 = vpop.f32.mrb[0].mxu0
      %v774 = vadd.f32 0.0, %v773
      %v775 = vpop.f32.mrb[0].mxu0
      %776 = vmatprep.mubr.bf16.mxu0 0
      %777 = vmatmul.mubr.bf16.gmra.mrb[0].mxu0 %v729
      %v778 = vpop.f32.mrb[0].mxu0
      %v779 = vadd.f32 0.0, %v778
      %v780 = vpop.f32.mrb[0].mxu0
      %v781 = vpop.f32.mrb[0].mxu0
      %v782 = vpop.f32.mrb[0].mxu0
      %783 = vdwg.mxu0
      %786 = vrot.lane.b32.xlu0 %v618, 96
      %v787 = vpop.permute.xlu0 %786
      %788 = vrot.lane.b32.xlu0 %v619, 96
      %v789 = vpop.permute.xlu0 %788
      %792 = vrot.lane.b32.xlu0 %v620, 96
      %v793 = vpop.permute.xlu0 %792
      %794 = vrot.lane.b32.xlu0 %v621, 96
      %v795 = vpop.permute.xlu0 %794
      %v797 = vsel %vm624, %v787, 0
      %v800 = vsel %vm624, %v789, 0
      %v803 = vsel %vm624, %v793, 0
      %v806 = vsel %vm624, %v795, 0
      %808 = vmatprep.subr.bf16.mxu0 0
      %809 = vmatpush1.bf16.xpose.msra.mxu0 %v803
      %810 = vmatprep.subr.bf16.mxu0 0
      %811 = vmatpush1.bf16.xpose.msra.mxu0 %v806
      %812 = vmatprep.subr.bf16.mxu0 0
      %813 = vmatpush1.bf16.xpose.msra.mxu0 0
      %814 = vmatprep.subr.bf16.mxu0 0
      %815 = vmatpush1.bf16.xpose.msra.mxu0 0
      %816 = vmatprep.subr.bf16.mxu0 0
      %817 = vmatpush1.bf16.xpose.msra.mxu0 0
      %818 = vmatprep.subr.bf16.mxu0 0
      %819 = vmatpush1.bf16.xpose.msra.mxu0 0
      %820 = vmatprep.subr.bf16.mxu0 0
      %821 = vmatpush1.bf16.xpose.msra.mxu0 0
      %822 = vmatprep.subr.bf16.mxu0 0
      %823 = vmatpush1.bf16.xpose.msra.mxu0 0
      %824 = vmatprep.subr.bf16.mxu0 0
      %825 = vmatpush1.bf16.xpose.msra.mxu0 0
      %826 = vmatprep.subr.bf16.mxu0 0
      %827 = vmatpush1.bf16.xpose.msra.mxu0 0
      %828 = vmatprep.subr.bf16.mxu0 0
      %829 = vmatpush1.bf16.xpose.msra.mxu0 0
      %830 = vmatprep.subr.bf16.mxu0 0
      %831 = vmatpush1.bf16.xpose.msra.mxu0 0
      %832 = vmatprep.subr.bf16.mxu0 0
      %833 = vmatpush1.bf16.xpose.msra.mxu0 0
      %834 = vmatprep.subr.bf16.mxu0 0
      %835 = vmatpush1.bf16.xpose.msra.mxu0 0
      %836 = vmatprep.subr.bf16.mxu0 0
      %837 = vmatpush1.bf16.xpose.msra.mxu0 0
      %838 = vmatprep.subr.bf16.mxu0 0
      %839 = vmatpush1.bf16.xpose.msra.mxu0 0
      %840 = vmatprep.mubr.bf16.mxu0 0
      %841 = vmatmul.mubr.bf16.gmra.mrb[0].mxu0 %v797
      %v842 = vpop.f32.mrb[0].mxu0
      %v843 = vadd.f32 0.0, %v842
      %v844 = vpop.f32.mrb[0].mxu0
      %v845 = vpop.f32.mrb[0].mxu0
      %v846 = vadd.f32 0.0, %v845
      %v847 = vpop.f32.mrb[0].mxu0
      %848 = vmatprep.mubr.bf16.mxu0 0
      %849 = vmatmul.mubr.bf16.gmra.mrb[0].mxu0 %v800
      %v850 = vpop.f32.mrb[0].mxu0
      %v851 = vadd.f32 0.0, %v850
      %v852 = vpop.f32.mrb[0].mxu0
      %v853 = vpop.f32.mrb[0].mxu0
      %v854 = vpop.f32.mrb[0].mxu0
      %855 = vdwg.mxu0
      %v856 = vmul.f32 %v843, 0.17677669
      %v857 = vmul.f32 %v846, 0.17677669
      %v858 = vmul.f32 %v851, 0.17677669
      %v859 = vsel %vm688, %v856, -inf
      %860 = vmax.xlane.f32.xlu0 %v859
      %v861 = vpop.xlane.xlu0 %860
      %v862 = vsel %vm688, %v857, -inf
      %863 = vmax.xlane.f32.xlu0 %v862
      %v864 = vpop.xlane.xlu0 %863
      %v865 = vsel %vm695, %v858, -inf
      %866 = vmax.xlane.f32.xlu0 %v865
      %v867 = vpop.xlane.xlu0 %866
      %v868 = vsub.f32 %v856, %v861
      %v869 = vsub.f32 %v857, %v864
      %v870 = vsub.f32 %v858, %v867
      %v871 = vmul.f32 %v868, 1.442695
      %v872 = vpow.pop %v871
      %v873 = vmul.f32 %v869, 1.442695
      %v874 = vpow.pop %v873
      %v875 = vmul.f32 %v870, 1.442695
      %v876 = vpow.pop %v875
      %v877 = vsel %vm688, %v872, 0.0
      %878 = vadd.xlane.f32.xlu0 %v877
      %v879 = vpop.xlane.xlu0 %878
      %v880 = vsel %vm688, %v874, 0.0
      %881 = vadd.xlane.f32.xlu0 %v880
      %v882 = vpop.xlane.xlu0 %881
      %v883 = vsel %vm695, %v876, 0.0
      %884 = vadd.xlane.f32.xlu0 %v883
      %v885 = vpop.xlane.xlu0 %884
      %v886 = vrcp.pop %v879
      %v887 = vrcp.pop %v882
      %v888 = vrcp.pop %v885
      %v889 = vmul.f32 %v872, %v886
      %v890 = vmul.f32 %v874, %v887
      %v891 = vmul.f32 %v876, %v888
      %v892 = vpack.c.bf16 %v890, %v889
      %v893 = vpack.c.bf16 %v891, %v891
      %896 = vrot.lane.b32.xlu0 %v622, 96
      %v897 = vpop.permute.xlu0 %896
      %898 = vrot.lane.b32.xlu0 %v623, 96
      %v899 = vpop.permute.xlu0 %898
      %v902 = vsel %vm688, %v892, 0
      %v905 = vsel %vm688, %v893, 0
      %v908 = vand.u32 %v899, %v732
      %910 = vmatprep.subr.bf16.mxu0 0
      %911 = vmatpush1.bf16.msra.mxu0 %v897
      %912 = vmatprep.subr.bf16.mxu0 0
      %913 = vmatpush1.bf16.msra.mxu0 %v908
      %914 = vmatprep.subr.bf16.mxu0 0
      %915 = vmatpush1.bf16.msra.mxu0 0
      %916 = vmatprep.subr.bf16.mxu0 0
      %917 = vmatpush1.bf16.msra.mxu0 0
      %918 = vmatprep.subr.bf16.mxu0 0
      %919 = vmatpush1.bf16.msra.mxu0 0
      %920 = vmatprep.subr.bf16.mxu0 0
      %921 = vmatpush1.bf16.msra.mxu0 0
      %922 = vmatprep.subr.bf16.mxu0 0
      %923 = vmatpush1.bf16.msra.mxu0 0
      %924 = vmatprep.subr.bf16.mxu0 0
      %925 = vmatpush1.bf16.msra.mxu0 0
      %926 = vmatprep.subr.bf16.mxu0 0
      %927 = vmatpush1.bf16.msra.mxu0 0
      %928 = vmatprep.subr.bf16.mxu0 0
      %929 = vmatpush1.bf16.msra.mxu0 0
      %930 = vmatprep.subr.bf16.mxu0 0
      %931 = vmatpush1.bf16.msra.mxu0 0
      %932 = vmatprep.subr.bf16.mxu0 0
      %933 = vmatpush1.bf16.msra.mxu0 0
      %934 = vmatprep.subr.bf16.mxu0 0
      %935 = vmatpush1.bf16.msra.mxu0 0
      %936 = vmatprep.subr.bf16.mxu0 0
      %937 = vmatpush1.bf16.msra.mxu0 0
      %938 = vmatprep.subr.bf16.mxu0 0
      %939 = vmatpush1.bf16.msra.mxu0 0
      %940 = vmatprep.subr.bf16.mxu0 0
      %941 = vmatpush1.bf16.msra.mxu0 0
      %942 = vmatprep.mubr.bf16.mxu0 0
      %943 = vmatmul.mubr.bf16.gmra.mrb[0].mxu0 %v902
      %v944 = vpop.f32.mrb[0].mxu0
      %v945 = vadd.f32 0.0, %v944
      %v946 = vpop.f32.mrb[0].mxu0
      %v947 = vpop.f32.mrb[0].mxu0
      %v948 = vadd.f32 0.0, %v947
      %v949 = vpop.f32.mrb[0].mxu0
      %950 = vmatprep.mubr.bf16.mxu0 0
      %951 = vmatmul.mubr.bf16.gmra.mrb[0].mxu0 %v905
      %v952 = vpop.f32.mrb[0].mxu0
      %v953 = vadd.f32 0.0, %v952
      %v954 = vpop.f32.mrb[0].mxu0
      %v955 = vpop.f32.mrb[0].mxu0
      %v956 = vpop.f32.mrb[0].mxu0
      %957 = vdwg.mxu0
      %958 = vrot.lane.b32.xlu0 %v618, 64
      %v959 = vpop.permute.xlu0 %958
      %960 = vrot.lane.b32.xlu0 %v619, 64
      %v961 = vpop.permute.xlu0 %960
      %962 = vrot.lane.b32.xlu0 %v620, 64
      %v963 = vpop.permute.xlu0 %962
      %964 = vrot.lane.b32.xlu0 %v621, 64
      %v965 = vpop.permute.xlu0 %964
      %v967 = vsel %vm624, %v959, 0
      %v970 = vsel %vm624, %v961, 0
      %v973 = vsel %vm624, %v963, 0
      %v976 = vsel %vm624, %v965, 0
      %978 = vmatprep.subr.bf16.mxu0 0
      %979 = vmatpush1.bf16.xpose.msra.mxu0 %v973
      %980 = vmatprep.subr.bf16.mxu0 0
      %981 = vmatpush1.bf16.xpose.msra.mxu0 %v976
      %982 = vmatprep.subr.bf16.mxu0 0
      %983 = vmatpush1.bf16.xpose.msra.mxu0 0
      %984 = vmatprep.subr.bf16.mxu0 0
      %985 = vmatpush1.bf16.xpose.msra.mxu0 0
      %986 = vmatprep.subr.bf16.mxu0 0
      %987 = vmatpush1.bf16.xpose.msra.mxu0 0
      %988 = vmatprep.subr.bf16.mxu0 0
      %989 = vmatpush1.bf16.xpose.msra.mxu0 0
      %990 = vmatprep.subr.bf16.mxu0 0
      %991 = vmatpush1.bf16.xpose.msra.mxu0 0
      %992 = vmatprep.subr.bf16.mxu0 0
      %993 = vmatpush1.bf16.xpose.msra.mxu0 0
      %994 = vmatprep.subr.bf16.mxu0 0
      %995 = vmatpush1.bf16.xpose.msra.mxu0 0
      %996 = vmatprep.subr.bf16.mxu0 0
      %997 = vmatpush1.bf16.xpose.msra.mxu0 0
      %998 = vmatprep.subr.bf16.mxu0 0
      %999 = vmatpush1.bf16.xpose.msra.mxu0 0
      %1000 = vmatprep.subr.bf16.mxu0 0
      %1001 = vmatpush1.bf16.xpose.msra.mxu0 0
      %1002 = vmatprep.subr.bf16.mxu0 0
      %1003 = vmatpush1.bf16.xpose.msra.mxu0 0
      %1004 = vmatprep.subr.bf16.mxu0 0
      %1005 = vmatpush1.bf16.xpose.msra.mxu0 0
      %1006 = vmatprep.subr.bf16.mxu0 0
      %1007 = vmatpush1.bf16.xpose.msra.mxu0 0
      %1008 = vmatprep.subr.bf16.mxu0 0
      %1009 = vmatpush1.bf16.xpose.msra.mxu0 0
      %1010 = vmatprep.mubr.bf16.mxu0 0
      %1011 = vmatmul.mubr.bf16.gmra.mrb[0].mxu0 %v967
      %v1012 = vpop.f32.mrb[0].mxu0
      %v1013 = vadd.f32 0.0, %v1012
      %v1014 = vpop.f32.mrb[0].mxu0
      %v1015 = vpop.f32.mrb[0].mxu0
      %v1016 = vadd.f32 0.0, %v1015
      %v1017 = vpop.f32.mrb[0].mxu0
      %1018 = vmatprep.mubr.bf16.mxu0 0
      %1019 = vmatmul.mubr.bf16.gmra.mrb[0].mxu0 %v970
      %v1020 = vpop.f32.mrb[0].mxu0
      %v1021 = vadd.f32 0.0, %v1020
      %v1022 = vpop.f32.mrb[0].mxu0
      %v1023 = vpop.f32.mrb[0].mxu0
      %v1024 = vpop.f32.mrb[0].mxu0
      %1025 = vdwg.mxu0
      %v1026 = vmul.f32 %v1013, 0.17677669
      %v1027 = vmul.f32 %v1016, 0.17677669
      %v1028 = vmul.f32 %v1021, 0.17677669
      %v1029 = vsel %vm688, %v1026, -inf
      %1030 = vmax.xlane.f32.xlu0 %v1029
      %v1031 = vpop.xlane.xlu0 %1030
      %v1032 = vsel %vm688, %v1027, -inf
      %1033 = vmax.xlane.f32.xlu0 %v1032
      %v1034 = vpop.xlane.xlu0 %1033
      %v1035 = vsel %vm695, %v1028, -inf
      %1036 = vmax.xlane.f32.xlu0 %v1035
      %v1037 = vpop.xlane.xlu0 %1036
      %v1038 = vsub.f32 %v1026, %v1031
      %v1039 = vsub.f32 %v1027, %v1034
      %v1040 = vsub.f32 %v1028, %v1037
      %v1041 = vmul.f32 %v1038, 1.442695
      %v1042 = vpow.pop %v1041
      %v1043 = vmul.f32 %v1039, 1.442695
      %v1044 = vpow.pop %v1043
      %v1045 = vmul.f32 %v1040, 1.442695
      %v1046 = vpow.pop %v1045
      %v1047 = vsel %vm688, %v1042, 0.0
      %1048 = vadd.xlane.f32.xlu0 %v1047
      %v1049 = vpop.xlane.xlu0 %1048
      %v1050 = vsel %vm688, %v1044, 0.0
      %1051 = vadd.xlane.f32.xlu0 %v1050
      %v1052 = vpop.xlane.xlu0 %1051
      %v1053 = vsel %vm695, %v1046, 0.0
      %1054 = vadd.xlane.f32.xlu0 %v1053
      %v1055 = vpop.xlane.xlu0 %1054
      %v1056 = vrcp.pop %v1049
      %v1057 = vrcp.pop %v1052
      %v1058 = vrcp.pop %v1055
      %v1059 = vmul.f32 %v1042, %v1056
      %v1060 = vmul.f32 %v1044, %v1057
      %v1061 = vmul.f32 %v1046, %v1058
      %v1062 = vpack.c.bf16 %v1060, %v1059
      %v1063 = vpack.c.bf16 %v1061, %v1061
      %1064 = vrot.lane.b32.xlu0 %v622, 64
      %v1065 = vpop.permute.xlu0 %1064
      %1066 = vrot.lane.b32.xlu0 %v623, 64
      %v1067 = vpop.permute.xlu0 %1066
      %v1070 = vsel %vm688, %v1062, 0
      %v1073 = vsel %vm688, %v1063, 0
      %v1076 = vand.u32 %v1067, %v732
      %1078 = vmatprep.subr.bf16.mxu0 0
      %1079 = vmatpush1.bf16.msra.mxu0 %v1065
      %1080 = vmatprep.subr.bf16.mxu0 0
      %1081 = vmatpush1.bf16.msra.mxu0 %v1076
      %1082 = vmatprep.subr.bf16.mxu0 0
      %1083 = vmatpush1.bf16.msra.mxu0 0
      %1084 = vmatprep.subr.bf16.mxu0 0
      %1085 = vmatpush1.bf16.msra.mxu0 0
      %1086 = vmatprep.subr.bf16.mxu0 0
      %1087 = vmatpush1.bf16.msra.mxu0 0
      %1088 = vmatprep.subr.bf16.mxu0 0
      %1089 = vmatpush1.bf16.msra.mxu0 0
      %1090 = vmatprep.subr.bf16.mxu0 0
      %1091 = vmatpush1.bf16.msra.mxu0 0
      %1092 = vmatprep.subr.bf16.mxu0 0
      %1093 = vmatpush1.bf16.msra.mxu0 0
      %1094 = vmatprep.subr.bf16.mxu0 0
      %1095 = vmatpush1.bf16.msra.mxu0 0
      %1096 = vmatprep.subr.bf16.mxu0 0
      %1097 = vmatpush1.bf16.msra.mxu0 0
      %1098 = vmatprep.subr.bf16.mxu0 0
      %1099 = vmatpush1.bf16.msra.mxu0 0
      %1100 = vmatprep.subr.bf16.mxu0 0
      %1101 = vmatpush1.bf16.msra.mxu0 0
      %1102 = vmatprep.subr.bf16.mxu0 0
      %1103 = vmatpush1.bf16.msra.mxu0 0
      %1104 = vmatprep.subr.bf16.mxu0 0
      %1105 = vmatpush1.bf16.msra.mxu0 0
      %1106 = vmatprep.subr.bf16.mxu0 0
      %1107 = vmatpush1.bf16.msra.mxu0 0
      %1108 = vmatprep.subr.bf16.mxu0 0
      %1109 = vmatpush1.bf16.msra.mxu0 0
      %1110 = vmatprep.mubr.bf16.mxu0 0
      %1111 = vmatmul.mubr.bf16.gmra.mrb[0].mxu0 %v1070
      %v1112 = vpop.f32.mrb[0].mxu0
      %v1113 = vadd.f32 0.0, %v1112
      %v1114 = vpop.f32.mrb[0].mxu0
      %v1115 = vpop.f32.mrb[0].mxu0
      %v1116 = vadd.f32 0.0, %v1115
      %v1117 = vpop.f32.mrb[0].mxu0
      %1118 = vmatprep.mubr.bf16.mxu0 0
      %1119 = vmatmul.mubr.bf16.gmra.mrb[0].mxu0 %v1073
      %v1120 = vpop.f32.mrb[0].mxu0
      %v1121 = vadd.f32 0.0, %v1120
      %v1122 = vpop.f32.mrb[0].mxu0
      %v1123 = vpop.f32.mrb[0].mxu0
      %v1124 = vpop.f32.mrb[0].mxu0
      %1125 = vdwg.mxu0
      %1126 = vrot.lane.b32.xlu0 %v618, 32
      %v1127 = vpop.permute.xlu0 %1126
      %1128 = vrot.lane.b32.xlu0 %v619, 32
      %v1129 = vpop.permute.xlu0 %1128
      %1130 = vrot.lane.b32.xlu0 %v620, 32
      %v1131 = vpop.permute.xlu0 %1130
      %1132 = vrot.lane.b32.xlu0 %v621, 32
      %v1133 = vpop.permute.xlu0 %1132
      %v1135 = vsel %vm624, %v1127, 0
      %v1138 = vsel %vm624, %v1129, 0
      %v1141 = vsel %vm624, %v1131, 0
      %v1144 = vsel %vm624, %v1133, 0
      %1146 = vmatprep.subr.bf16.mxu0 0
      %1147 = vmatpush1.bf16.xpose.msra.mxu0 %v1141
      %1148 = vmatprep.subr.bf16.mxu0 0
      %1149 = vmatpush1.bf16.xpose.msra.mxu0 %v1144
      %1150 = vmatprep.subr.bf16.mxu0 0
      %1151 = vmatpush1.bf16.xpose.msra.mxu0 0
      %1152 = vmatprep.subr.bf16.mxu0 0
      %1153 = vmatpush1.bf16.xpose.msra.mxu0 0
      %1154 = vmatprep.subr.bf16.mxu0 0
      %1155 = vmatpush1.bf16.xpose.msra.mxu0 0
      %1156 = vmatprep.subr.bf16.mxu0 0
      %1157 = vmatpush1.bf16.xpose.msra.mxu0 0
      %1158 = vmatprep.subr.bf16.mxu0 0
      %1159 = vmatpush1.bf16.xpose.msra.mxu0 0
      %1160 = vmatprep.subr.bf16.mxu0 0
      %1161 = vmatpush1.bf16.xpose.msra.mxu0 0
      %1162 = vmatprep.subr.bf16.mxu0 0
      %1163 = vmatpush1.bf16.xpose.msra.mxu0 0
      %1164 = vmatprep.subr.bf16.mxu0 0
      %1165 = vmatpush1.bf16.xpose.msra.mxu0 0
      %1166 = vmatprep.subr.bf16.mxu0 0
      %1167 = vmatpush1.bf16.xpose.msra.mxu0 0
      %1168 = vmatprep.subr.bf16.mxu0 0
      %1169 = vmatpush1.bf16.xpose.msra.mxu0 0
      %1170 = vmatprep.subr.bf16.mxu0 0
      %1171 = vmatpush1.bf16.xpose.msra.mxu0 0
      %1172 = vmatprep.subr.bf16.mxu0 0
      %1173 = vmatpush1.bf16.xpose.msra.mxu0 0
      %1174 = vmatprep.subr.bf16.mxu0 0
      %1175 = vmatpush1.bf16.xpose.msra.mxu0 0
      %1176 = vmatprep.subr.bf16.mxu0 0
      %1177 = vmatpush1.bf16.xpose.msra.mxu0 0
      %1178 = vmatprep.mubr.bf16.mxu0 0
      %1179 = vmatmul.mubr.bf16.gmra.mrb[0].mxu0 %v1135
      %v1180 = vpop.f32.mrb[0].mxu0
      %v1181 = vadd.f32 0.0, %v1180
      %v1182 = vpop.f32.mrb[0].mxu0
      %v1183 = vpop.f32.mrb[0].mxu0
      %v1184 = vadd.f32 0.0, %v1183
      %v1185 = vpop.f32.mrb[0].mxu0
      %1186 = vmatprep.mubr.bf16.mxu0 0
      %1187 = vmatmul.mubr.bf16.gmra.mrb[0].mxu0 %v1138
      %v1188 = vpop.f32.mrb[0].mxu0
      %v1189 = vadd.f32 0.0, %v1188
      %v1190 = vpop.f32.mrb[0].mxu0
      %v1191 = vpop.f32.mrb[0].mxu0
      %v1192 = vpop.f32.mrb[0].mxu0
      %1193 = vdwg.mxu0
      %v1194 = vmul.f32 %v1181, 0.17677669
      %v1195 = vmul.f32 %v1184, 0.17677669
      %v1196 = vmul.f32 %v1189, 0.17677669
      %v1197 = vsel %vm688, %v1194, -inf
      %1198 = vmax.xlane.f32.xlu0 %v1197
      %v1199 = vpop.xlane.xlu0 %1198
      %v1200 = vsel %vm688, %v1195, -inf
      %1201 = vmax.xlane.f32.xlu0 %v1200
      %v1202 = vpop.xlane.xlu0 %1201
      %v1203 = vsel %vm695, %v1196, -inf
      %1204 = vmax.xlane.f32.xlu0 %v1203
      %v1205 = vpop.xlane.xlu0 %1204
      %v1206 = vsub.f32 %v1194, %v1199
      %v1207 = vsub.f32 %v1195, %v1202
      %v1208 = vsub.f32 %v1196, %v1205
      %v1209 = vmul.f32 %v1206, 1.442695
      %v1210 = vpow.pop %v1209
      %v1211 = vmul.f32 %v1207, 1.442695
      %v1212 = vpow.pop %v1211
      %v1213 = vmul.f32 %v1208, 1.442695
      %v1214 = vpow.pop %v1213
      %v1215 = vsel %vm688, %v1210, 0.0
      %1216 = vadd.xlane.f32.xlu0 %v1215
      %v1217 = vpop.xlane.xlu0 %1216
      %v1218 = vsel %vm688, %v1212, 0.0
      %1219 = vadd.xlane.f32.xlu0 %v1218
      %v1220 = vpop.xlane.xlu0 %1219
      %v1221 = vsel %vm695, %v1214, 0.0
      %1222 = vadd.xlane.f32.xlu0 %v1221
      %v1223 = vpop.xlane.xlu0 %1222
      %v1224 = vrcp.pop %v1217
      %v1225 = vrcp.pop %v1220
      %v1226 = vrcp.pop %v1223
      %v1227 = vmul.f32 %v1210, %v1224
      %v1228 = vmul.f32 %v1212, %v1225
      %v1229 = vmul.f32 %v1214, %v1226
      %v1230 = vpack.c.bf16 %v1228, %v1227
      %v1231 = vpack.c.bf16 %v1229, %v1229
      %1232 = vrot.lane.b32.xlu0 %v622, 32
      %v1233 = vpop.permute.xlu0 %1232
      %1234 = vrot.lane.b32.xlu0 %v623, 32
      %v1235 = vpop.permute.xlu0 %1234
      %v1238 = vsel %vm688, %v1230, 0
      %v1241 = vsel %vm688, %v1231, 0
      %v1244 = vand.u32 %v1235, %v732
      %1246 = vmatprep.subr.bf16.mxu0 0
      %1247 = vmatpush1.bf16.msra.mxu0 %v1233
      %1248 = vmatprep.subr.bf16.mxu0 0
      %1249 = vmatpush1.bf16.msra.mxu0 %v1244
      %1250 = vmatprep.subr.bf16.mxu0 0
      %1251 = vmatpush1.bf16.msra.mxu0 0
      %1252 = vmatprep.subr.bf16.mxu0 0
      %1253 = vmatpush1.bf16.msra.mxu0 0
      %1254 = vmatprep.subr.bf16.mxu0 0
      %1255 = vmatpush1.bf16.msra.mxu0 0
      %1256 = vmatprep.subr.bf16.mxu0 0
      %1257 = vmatpush1.bf16.msra.mxu0 0
      %1258 = vmatprep.subr.bf16.mxu0 0
      %1259 = vmatpush1.bf16.msra.mxu0 0
      %1260 = vmatprep.subr.bf16.mxu0 0
      %1261 = vmatpush1.bf16.msra.mxu0 0
      %1262 = vmatprep.subr.bf16.mxu0 0
      %1263 = vmatpush1.bf16.msra.mxu0 0
      %1264 = vmatprep.subr.bf16.mxu0 0
      %1265 = vmatpush1.bf16.msra.mxu0 0
      %1266 = vmatprep.subr.bf16.mxu0 0
      %1267 = vmatpush1.bf16.msra.mxu0 0
      %1268 = vmatprep.subr.bf16.mxu0 0
      %1269 = vmatpush1.bf16.msra.mxu0 0
      %1270 = vmatprep.subr.bf16.mxu0 0
      %1271 = vmatpush1.bf16.msra.mxu0 0
      %1272 = vmatprep.subr.bf16.mxu0 0
      %1273 = vmatpush1.bf16.msra.mxu0 0
      %1274 = vmatprep.subr.bf16.mxu0 0
      %1275 = vmatpush1.bf16.msra.mxu0 0
      %1276 = vmatprep.subr.bf16.mxu0 0
      %1277 = vmatpush1.bf16.msra.mxu0 0
      %1278 = vmatprep.mubr.bf16.mxu0 0
      %1279 = vmatmul.mubr.bf16.gmra.mrb[0].mxu0 %v1238
      %v1280 = vpop.f32.mrb[0].mxu0
      %v1281 = vadd.f32 0.0, %v1280
      %v1282 = vpop.f32.mrb[0].mxu0
      %v1283 = vpop.f32.mrb[0].mxu0
      %v1284 = vadd.f32 0.0, %v1283
      %v1285 = vpop.f32.mrb[0].mxu0
      %1286 = vmatprep.mubr.bf16.mxu0 0
      %1287 = vmatmul.mubr.bf16.gmra.mrb[0].mxu0 %v1241
      %v1288 = vpop.f32.mrb[0].mxu0
      %v1289 = vadd.f32 0.0, %v1288
      %v1290 = vpop.f32.mrb[0].mxu0
      %v1291 = vpop.f32.mrb[0].mxu0
      %v1292 = vpop.f32.mrb[0].mxu0
      %1293 = vdwg.mxu0
      %1297 = vrot.lane.b32.xlu0 %v945, 32
      %v1298 = vpop.permute.xlu0 %1297
      %1299 = vrot.lane.b32.xlu0 %v948, 32
      %v1300 = vpop.permute.xlu0 %1299
      %1301 = vrot.lane.b32.xlu0 %v953, 32
      %v1302 = vpop.permute.xlu0 %1301
      %1309 = vrot.lane.b32.xlu0 %v1113, 64
      %v1310 = vpop.permute.xlu0 %1309
      %1311 = vrot.lane.b32.xlu0 %v1116, 64
      %v1312 = vpop.permute.xlu0 %1311
      %1313 = vrot.lane.b32.xlu0 %v1121, 64
      %v1314 = vpop.permute.xlu0 %1313
      %1321 = vrot.lane.b32.xlu0 %v1281, 96
      %v1322 = vpop.permute.xlu0 %1321
      %1323 = vrot.lane.b32.xlu0 %v1284, 96
      %v1324 = vpop.permute.xlu0 %1323
      %1325 = vrot.lane.b32.xlu0 %v1289, 96
      %v1326 = vpop.permute.xlu0 %1325
      %v1330 = vsel %vm624, %v771, %v1298
      %v1331 = vsel %vm624, %v774, %v1300
      %v1332 = vsel %vm624, %v779, %v1302
      %vm1333 = vcmask 523264
      %v1334 = vsel %vm1333, %v1330, %v1310
      %v1335 = vsel %vm1333, %v1331, %v1312
      %v1336 = vsel %vm1333, %v1332, %v1314
      %vm1337 = vcmask 785408
      %v1338 = vsel %vm1337, %v1334, %v1322
      %v1339 = vsel %vm1337, %v1335, %v1324
      %v1340 = vsel %vm1337, %v1336, %v1326
      %v1341 = vpack.c.bf16 %v1339, %v1338
      %v1342 = vpack.c.bf16 %v1340, %v1340
      %v1343 = vld [vmem:[%s5] sm:$0xf]
      %v1344 = vld [vmem:[%s5 + $0x4] sm:$0xf]
      %v1345 = vld [vmem:[%s5 + $0x8] sm:$0xf]
      %v1346 = vld [vmem:[%s5 + $0xc] sm:$0xf]
      %v1347 = vld [vmem:[%s5 + $0x10] sm:$0xf]
      %v1348 = vld [vmem:[%s5 + $0x14] sm:$0xf]
      %v1349 = vld [vmem:[%s5 + $0x18] sm:$0xf]
      %v1350 = vld [vmem:[%s5 + $0x1c] sm:$0xf]
      %v1351 = vld [vmem:[%s5 + $0x20] sm:$0xf]
      %v1352 = vld [vmem:[%s5 + $0x24] sm:$0xf]
      %v1353 = vld [vmem:[%s5 + $0x28] sm:$0xf]
      %v1354 = vld [vmem:[%s5 + $0x2c] sm:$0xf]
      %v1355 = vld [vmem:[%s5 + $0x30] sm:$0xf]
      %v1356 = vld [vmem:[%s5 + $0x34] sm:$0xf]
      %v1357 = vld [vmem:[%s5 + $0x38] sm:$0xf]
      %v1358 = vld [vmem:[%s5 + $0x3c] sm:$0xf]
      %v1359 = vld [vmem:[%s6] sm:$0x1]
      %v1361 = vlaneseq
      %v1362 = vshrl.u32 %v1361, 7
      %v1363 = vsub.s32 0, %v1362
      %v1364 = vrot.slane %v1359, %v1363
      %v1382 = vunpack.c.l.b16 %v1343
      %v1383 = vunpack.c.l.b16 %v1344
      %v1384 = vunpack.c.l.b16 %v1345
      %v1385 = vunpack.c.l.b16 %v1346
      %v1386 = vunpack.c.l.b16 %v1347
      %v1387 = vunpack.c.l.b16 %v1348
      %v1388 = vunpack.c.l.b16 %v1349
      %v1389 = vunpack.c.l.b16 %v1350
      %v1390 = vunpack.c.l.b16 %v1351
      %v1391 = vunpack.c.l.b16 %v1352
      %v1392 = vunpack.c.l.b16 %v1353
      %v1393 = vunpack.c.l.b16 %v1354
      %v1394 = vunpack.c.l.b16 %v1355
      %v1395 = vunpack.c.l.b16 %v1356
      %v1396 = vunpack.c.l.b16 %v1357
      %v1397 = vunpack.c.l.b16 %v1358
      %v1398 = vpack.c.b16 %v1383, %v1382
      %v1399 = vpack.c.b16 %v1385, %v1384
      %v1400 = vpack.c.b16 %v1387, %v1386
      %v1401 = vpack.c.b16 %v1389, %v1388
      %v1402 = vpack.c.b16 %v1391, %v1390
      %v1403 = vpack.c.b16 %v1393, %v1392
      %v1404 = vpack.c.b16 %v1395, %v1394
      %v1405 = vpack.c.b16 %v1397, %v1396
      %1414 = vmatprep.subr.bf16.mxu0 0
      %1415 = vmatpush1.bf16.msra.mxu0 %v1398
      %1416 = vmatprep.subr.bf16.mxu0 0
      %1417 = vmatpush1.bf16.msra.mxu0 %v1399
      %1418 = vmatprep.subr.bf16.mxu0 0
      %1419 = vmatpush1.bf16.msra.mxu0 %v1400
      %1420 = vmatprep.subr.bf16.mxu0 0
      %1421 = vmatpush1.bf16.msra.mxu0 %v1401
      %1422 = vmatprep.subr.bf16.mxu0 0
      %1423 = vmatpush1.bf16.msra.mxu0 %v1402
      %1424 = vmatprep.subr.bf16.mxu0 0
      %1425 = vmatpush1.bf16.msra.mxu0 %v1403
      %1426 = vmatprep.subr.bf16.mxu0 0
      %1427 = vmatpush1.bf16.msra.mxu0 %v1404
      %1428 = vmatprep.subr.bf16.mxu0 0
      %1429 = vmatpush1.bf16.msra.mxu0 %v1405
      %1430 = vmatprep.subr.bf16.mxu0 0
      %1431 = vmatpush1.bf16.msra.mxu0 0
      %1432 = vmatprep.subr.bf16.mxu0 0
      %1433 = vmatpush1.bf16.msra.mxu0 0
      %1434 = vmatprep.subr.bf16.mxu0 0
      %1435 = vmatpush1.bf16.msra.mxu0 0
      %1436 = vmatprep.subr.bf16.mxu0 0
      %1437 = vmatpush1.bf16.msra.mxu0 0
      %1438 = vmatprep.subr.bf16.mxu0 0
      %1439 = vmatpush1.bf16.msra.mxu0 0
      %1440 = vmatprep.subr.bf16.mxu0 0
      %1441 = vmatpush1.bf16.msra.mxu0 0
      %1442 = vmatprep.subr.bf16.mxu0 0
      %1443 = vmatpush1.bf16.msra.mxu0 0
      %1444 = vmatprep.subr.bf16.mxu0 0
      %1445 = vmatpush1.bf16.msra.mxu0 0
      %1446 = vmatprep.mubr.bf16.mxu0 0
      %1447 = vmatmul.mubr.bf16.gmra.mrb[0].mxu0 %v1341
      %v1448 = vpop.f32.mrb[0].mxu0
      %v1449 = vadd.f32 %v1364, %v1448
      %v1450 = vpop.f32.mrb[0].mxu0
      %v1451 = vpop.f32.mrb[0].mxu0
      %v1452 = vadd.f32 %v1364, %v1451
      %v1453 = vpop.f32.mrb[0].mxu0
      %1454 = vmatprep.mubr.bf16.mxu0 0
      %1455 = vmatmul.mubr.bf16.gmra.mrb[0].mxu0 %v1342
      %v1456 = vpop.f32.mrb[0].mxu0
      %v1457 = vadd.f32 %v1364, %v1456
      %v1458 = vpop.f32.mrb[0].mxu0
      %v1459 = vpop.f32.mrb[0].mxu0
      %v1460 = vpop.f32.mrb[0].mxu0
      %1461 = vdwg.mxu0
      %v1462 = vadd.f32 %v280, %v1449
      %v1463 = vadd.f32 %v281, %v1452
      %v1464 = vadd.f32 %v282, %v1457
      %1465 = vst [vmem:[%s278] sm:$0xff] %v1462
      %1466 = vst [vmem:[%s278 + $0x8] sm:$0xff] %v1463
      %1467 = vst [vmem:[%s278 + $0x10] sm:$0x1] %v1464
      %p1468 = scmp.lt.s32.totalorder %s18, 1
      %s1469 = scalar_select %p1468, %s18, 1
      %s1470 = smul.addr %s1469, 3
      %s1471 = smul.addr %s1470, 8
      %s1472 = scalar_lea.vmem %s7, %s1471
      // Predicated region
      $region49: #{isavit_forward.9} parent=47 // pred_check
        %p1473 = pneg %p188
      $region50: #{isavit_forward.9} parent=47 // pred_check_branch
        %1475 = sbr.rel (%p1473) target = $region52
      $region51: #{isavit_forward.9} parent=47 // pred_region
        _
      $region52: #{isavit_forward.9} parent=47 // pred_fallthru
        _
    $region48: #{isavit_forward.9} parent=5 // pred_fallthru
      _
    %p1476 = scmp.le.s32.totalorder 2, %s13
    // Predicated region
    $region53: #{isavit_forward.9} parent=5 // pred_check
      %p1477 = pneg %p1476
    $region54: #{isavit_forward.9} parent=5 // pred_check_branch
      %1479 = sbr.rel (%p1477) target = $region56
    $region55: #{isavit_forward.9} parent=5 // pred_region
      %s1480 = ssub.s32 %s13, 2
      // Predicated region
      $region57: #{isavit_forward.9} parent=55 // pred_check
        %p1481 = pneg %p194
      $region58: #{isavit_forward.9} parent=55 // pred_check_branch
        %1483 = sbr.rel (%p1481) target = $region60
      $region59: #{isavit_forward.9} parent=55 // pred_region
        %p1484 = scmp.lt.s32.totalorder %s19, 1
        %s1485 = scalar_select %p1484, %s19, 1
        %s1486 = smul.addr %s1485, 3
        %s1487 = smul.addr %s1486, 8
        %s1488 = scalar_lea.vmem %s7, %s1487
      $region60: #{isavit_forward.9} parent=55 // pred_fallthru
        _
    $region56: #{isavit_forward.9} parent=5 // pred_fallthru
      _
  $region6: #{isavit_forward.9} parent=0 // loop_footer
    %s17 = sadd.s32 1, %s13
  $region7: #{isavit_forward.9} parent=0 // loop_footer_branch
    %12 = sbr.rel target = $region3
  $region8: #{isavit_forward.9} parent=0 // loop_exit
    _

// kernel: isavit_forward.10
$region0: #{isavit_forward.10}
  #allocation0 [shape = 'u32[]', space=smem, size = 0x4, offset = 0x4, fixed_abs, tag = 'smem constant byte address 0x4 - core index']
  #allocation1 [shape = 'u32[144,128]{1,0:T(1,128)}', space=vmem, size = 0x12000, scoped, tag = 'internal scratch']
  %s0 = inlined_call_operand.vmem [shape: f32[40,128], index: 0, kind: input, shape index: {}]
  %s1 = inlined_call_operand.vmem [shape: f32[1,128], index: 1, kind: input, shape index: {}]
  %s2 = inlined_call_operand.vmem [shape: f32[1,128], index: 2, kind: input, shape index: {}]
  %s3 = inlined_call_operand.vmem [shape: bf16[128,512], index: 3, kind: input, shape index: {}]
  %s4 = inlined_call_operand.vmem [shape: f32[1,512], index: 4, kind: input, shape index: {}]
  %s5 = inlined_call_operand.vmem [shape: bf16[512,128], index: 5, kind: input, shape index: {}]
  %s6 = inlined_call_operand.vmem [shape: f32[1,128], index: 6, kind: input, shape index: {}]
  %s7 = inlined_call_operand.vmem [shape: f32[40,128], index: 7, kind: output, shape index: {}]
  %s8 = sld [smem:[#allocation0]]
  $region38: #{isavit_forward.10} parent=0
    _
  %s10 = ssub.s32 1, %s8
  %s11 = scalar_select 0, %s10, %s8
  // Predicated region
  $region2: #{isavit_forward.10} parent=0 // pred_check
    _
  $region3: #{isavit_forward.10} parent=0 // pred_check_branch
    %13 = sbr.rel (0) target = $region5
  $region4: #{isavit_forward.10} parent=0 // pred_region
    _
  $region5: #{isavit_forward.10} parent=0 // pred_fallthru
    _
  // Predicated region
  $region6: #{isavit_forward.10} parent=0 // pred_check
    _
  $region7: #{isavit_forward.10} parent=0 // pred_check_branch
    %15 = sbr.rel (0) target = $region9
  $region8: #{isavit_forward.10} parent=0 // pred_region
    _
  $region9: #{isavit_forward.10} parent=0 // pred_fallthru
    _
  // Predicated region
  $region10: #{isavit_forward.10} parent=0 // pred_check
    _
  $region11: #{isavit_forward.10} parent=0 // pred_check_branch
    %17 = sbr.rel (0) target = $region13
  $region12: #{isavit_forward.10} parent=0 // pred_region
    _
  $region13: #{isavit_forward.10} parent=0 // pred_fallthru
    _
  // Predicated region
  $region14: #{isavit_forward.10} parent=0 // pred_check
    _
  $region15: #{isavit_forward.10} parent=0 // pred_check_branch
    %19 = sbr.rel (0) target = $region17
  $region16: #{isavit_forward.10} parent=0 // pred_region
    _
  $region17: #{isavit_forward.10} parent=0 // pred_fallthru
    _
  // Predicated region
  $region18: #{isavit_forward.10} parent=0 // pred_check
    _
  $region19: #{isavit_forward.10} parent=0 // pred_check_branch
    %21 = sbr.rel (0) target = $region21
  $region20: #{isavit_forward.10} parent=0 // pred_region
    _
  $region21: #{isavit_forward.10} parent=0 // pred_fallthru
    _
  // Predicated region
  $region22: #{isavit_forward.10} parent=0 // pred_check
    _
  $region23: #{isavit_forward.10} parent=0 // pred_check_branch
    %23 = sbr.rel (0) target = $region25
  $region24: #{isavit_forward.10} parent=0 // pred_region
    _
  $region25: #{isavit_forward.10} parent=0 // pred_fallthru
    _
  // Predicated region
  $region26: #{isavit_forward.10} parent=0 // pred_check
    _
  $region27: #{isavit_forward.10} parent=0 // pred_check_branch
    %25 = sbr.rel (0) target = $region29
  $region28: #{isavit_forward.10} parent=0 // pred_region
    _
  $region29: #{isavit_forward.10} parent=0 // pred_fallthru
    _
  %v27 = vld [vmem:[%s0] sm:$0xff]
  %v28 = vld [vmem:[%s0 + $0x8] sm:$0xff]
  %v29 = vld [vmem:[%s0 + $0x10] sm:$0xff]
  %v30 = vld [vmem:[%s0 + $0x18] sm:$0xff]
  %v31 = vld [vmem:[%s0 + $0x20] sm:$0xff]
  %v32 = vld [vmem:[%s1] sm:$0x1]
  %v33 = vld [vmem:[%s2] sm:$0x1]
  %34 = vadd.xlane.f32.xlu0 %v27
  %v35 = vpop.xlane.xlu0 %34
  %36 = vadd.xlane.f32.xlu0 %v28
  %v37 = vpop.xlane.xlu0 %36
  %38 = vadd.xlane.f32.xlu0 %v29
  %v39 = vpop.xlane.xlu0 %38
  %40 = vadd.xlane.f32.xlu0 %v30
  %v41 = vpop.xlane.xlu0 %40
  %42 = vadd.xlane.f32.xlu0 %v31
  %v43 = vpop.xlane.xlu0 %42
  %v44 = vrcp.pop 128.0
  %v45 = vmul.f32 %v35, %v44
  %v46 = vmul.f32 %v37, %v44
  %v47 = vmul.f32 %v39, %v44
  %v48 = vmul.f32 %v41, %v44
  %v49 = vmul.f32 %v43, %v44
  %v50 = vsub.f32 %v27, %v45
  %v51 = vsub.f32 %v28, %v46
  %v52 = vsub.f32 %v29, %v47
  %v53 = vsub.f32 %v30, %v48
  %v54 = vsub.f32 %v31, %v49
  %v55 = vmul.f32 %v50, %v50
  %v56 = vmul.f32 %v51, %v51
  %v57 = vmul.f32 %v52, %v52
  %v58 = vmul.f32 %v53, %v53
  %v59 = vmul.f32 %v54, %v54
  %60 = vadd.xlane.f32.xlu0 %v55
  %v61 = vpop.xlane.xlu0 %60
  %62 = vadd.xlane.f32.xlu0 %v56
  %v63 = vpop.xlane.xlu0 %62
  %64 = vadd.xlane.f32.xlu0 %v57
  %v65 = vpop.xlane.xlu0 %64
  %66 = vadd.xlane.f32.xlu0 %v58
  %v67 = vpop.xlane.xlu0 %66
  %68 = vadd.xlane.f32.xlu0 %v59
  %v69 = vpop.xlane.xlu0 %68
  %v70 = vmul.f32 %v61, %v44
  %v71 = vmul.f32 %v63, %v44
  %v72 = vmul.f32 %v65, %v44
  %v73 = vmul.f32 %v67, %v44
  %v74 = vmul.f32 %v69, %v44
  %v75 = vadd.f32 %v70, 1e-06
  %v76 = vadd.f32 %v71, 1e-06
  %v77 = vadd.f32 %v72, 1e-06
  %v78 = vadd.f32 %v73, 1e-06
  %v79 = vadd.f32 %v74, 1e-06
  %v80 = vrsqrt.pop %v75
  %v81 = vrsqrt.pop %v76
  %v82 = vrsqrt.pop %v77
  %v83 = vrsqrt.pop %v78
  %v84 = vrsqrt.pop %v79
  %v85 = vmul.f32 %v50, %v80
  %v86 = vmul.f32 %v51, %v81
  %v87 = vmul.f32 %v52, %v82
  %v88 = vmul.f32 %v53, %v83
  %v89 = vmul.f32 %v54, %v84
  %v91 = vlaneseq
  %v92 = vshrl.u32 %v91, 7
  %v93 = vsub.s32 0, %v92
  %v94 = vrot.slane %v32, %v93
  %v96 = vmul.f32 %v85, %v94
  %v97 = vmul.f32 %v86, %v94
  %v98 = vmul.f32 %v87, %v94
  %v99 = vmul.f32 %v88, %v94
  %v100 = vmul.f32 %v89, %v94
  %v102 = vlaneseq
  %v103 = vshrl.u32 %v102, 7
  %v104 = vsub.s32 0, %v103
  %v105 = vrot.slane %v33, %v104
  %v107 = vadd.f32 %v96, %v105
  %v108 = vadd.f32 %v97, %v105
  %v109 = vadd.f32 %v98, %v105
  %v110 = vadd.f32 %v99, %v105
  %v111 = vadd.f32 %v100, %v105
  %v112 = vpack.c.bf16 %v108, %v107
  %v113 = vpack.c.bf16 %v110, %v109
  %v114 = vpack.c.bf16 %v111, %v111
  %v115 = vld [vmem:[%s3] sm:$0xff]
  %v116 = vld [vmem:[%s3 + $0x8] sm:$0xff]
  %v117 = vld [vmem:[%s3 + $0x10] sm:$0xff]
  %v118 = vld [vmem:[%s3 + $0x18] sm:$0xff]
  %v119 = vld [vmem:[%s3 + $0x20] sm:$0xff]
  %v120 = vld [vmem:[%s3 + $0x28] sm:$0xff]
  %v121 = vld [vmem:[%s3 + $0x30] sm:$0xff]
  %v122 = vld [vmem:[%s3 + $0x38] sm:$0xff]
  %v123 = vld [vmem:[%s3 + $0x40] sm:$0xff]
  %v124 = vld [vmem:[%s3 + $0x48] sm:$0xff]
  %v125 = vld [vmem:[%s3 + $0x50] sm:$0xff]
  %v126 = vld [vmem:[%s3 + $0x58] sm:$0xff]
  %v127 = vld [vmem:[%s3 + $0x60] sm:$0xff]
  %v128 = vld [vmem:[%s3 + $0x68] sm:$0xff]
  %v129 = vld [vmem:[%s3 + $0x70] sm:$0xff]
  %v130 = vld [vmem:[%s3 + $0x78] sm:$0xff]
  %v131 = vld [vmem:[%s3 + $0x80] sm:$0xff]
  %v132 = vld [vmem:[%s3 + $0x88] sm:$0xff]
  %v133 = vld [vmem:[%s3 + $0x90] sm:$0xff]
  %v134 = vld [vmem:[%s3 + $0x98] sm:$0xff]
  %v135 = vld [vmem:[%s3 + $0xa0] sm:$0xff]
  %v136 = vld [vmem:[%s3 + $0xa8] sm:$0xff]
  %v137 = vld [vmem:[%s3 + $0xb0] sm:$0xff]
  %v138 = vld [vmem:[%s3 + $0xb8] sm:$0xff]
  %v139 = vld [vmem:[%s3 + $0xc0] sm:$0xff]
  %v140 = vld [vmem:[%s3 + $0xc8] sm:$0xff]
  %v141 = vld [vmem:[%s3 + $0xd0] sm:$0xff]
  %v142 = vld [vmem:[%s3 + $0xd8] sm:$0xff]
  %v143 = vld [vmem:[%s3 + $0xe0] sm:$0xff]
  %v144 = vld [vmem:[%s3 + $0xe8] sm:$0xff]
  %v145 = vld [vmem:[%s3 + $0xf0] sm:$0xff]
  %v146 = vld [vmem:[%s3 + $0xf8] sm:$0xff]
  %v147 = vld [vmem:[%s4] sm:$0xf]
  %v149 = vlaneseq
  %v150 = vshrl.u32 %v149, 7
  %v151 = vsub.s32 0, %v150
  %v152 = vrot.slane %v147, %v151
  %v153 = vlaneseq
  %v154 = vshrl.u32 %v153, 7
  %v155 = vsub.s32 1, %v154
  %v156 = vrot.slane %v147, %v155
  %v157 = vlaneseq
  %v158 = vshrl.u32 %v157, 7
  %v159 = vsub.s32 2, %v158
  %v160 = vrot.slane %v147, %v159
  %v161 = vlaneseq
  %v162 = vshrl.u32 %v161, 7
  %v163 = vsub.s32 3, %v162
  %v164 = vrot.slane %v147, %v163
  %v201 = vunpack.c.l.b16 %v115
  %v202 = vunpack.c.h.b16 %v115
  %v203 = vunpack.c.l.b16 %v116
  %v204 = vunpack.c.h.b16 %v116
  %v205 = vunpack.c.l.b16 %v117
  %v206 = vunpack.c.h.b16 %v117
  %v207 = vunpack.c.l.b16 %v118
  %v208 = vunpack.c.h.b16 %v118
  %v209 = vunpack.c.l.b16 %v119
  %v210 = vunpack.c.h.b16 %v119
  %v211 = vunpack.c.l.b16 %v120
  %v212 = vunpack.c.h.b16 %v120
  %v213 = vunpack.c.l.b16 %v121
  %v214 = vunpack.c.h.b16 %v121
  %v215 = vunpack.c.l.b16 %v122
  %v216 = vunpack.c.h.b16 %v122
  %v217 = vunpack.c.l.b16 %v123
  %v218 = vunpack.c.h.b16 %v123
  %v219 = vunpack.c.l.b16 %v124
  %v220 = vunpack.c.h.b16 %v124
  %v221 = vunpack.c.l.b16 %v125
  %v222 = vunpack.c.h.b16 %v125
  %v223 = vunpack.c.l.b16 %v126
  %v224 = vunpack.c.h.b16 %v126
  %v225 = vunpack.c.l.b16 %v127
  %v226 = vunpack.c.h.b16 %v127
  %v227 = vunpack.c.l.b16 %v128
  %v228 = vunpack.c.h.b16 %v128
  %v229 = vunpack.c.l.b16 %v129
  %v230 = vunpack.c.h.b16 %v129
  %v231 = vunpack.c.l.b16 %v130
  %v232 = vunpack.c.h.b16 %v130
  %v233 = vunpack.c.l.b16 %v131
  %v234 = vunpack.c.h.b16 %v131
  %v235 = vunpack.c.l.b16 %v132
  %v236 = vunpack.c.h.b16 %v132
  %v237 = vunpack.c.l.b16 %v133
  %v238 = vunpack.c.h.b16 %v133
  %v239 = vunpack.c.l.b16 %v134
  %v240 = vunpack.c.h.b16 %v134
  %v241 = vunpack.c.l.b16 %v135
  %v242 = vunpack.c.h.b16 %v135
  %v243 = vunpack.c.l.b16 %v136
  %v244 = vunpack.c.h.b16 %v136
  %v245 = vunpack.c.l.b16 %v137
  %v246 = vunpack.c.h.b16 %v137
  %v247 = vunpack.c.l.b16 %v138
  %v248 = vunpack.c.h.b16 %v138
  %v249 = vunpack.c.l.b16 %v139
  %v250 = vunpack.c.h.b16 %v139
  %v251 = vunpack.c.l.b16 %v140
  %v252 = vunpack.c.h.b16 %v140
  %v253 = vunpack.c.l.b16 %v141
  %v254 = vunpack.c.h.b16 %v141
  %v255 = vunpack.c.l.b16 %v142
  %v256 = vunpack.c.h.b16 %v142
  %v257 = vunpack.c.l.b16 %v143
  %v258 = vunpack.c.h.b16 %v143
  %v259 = vunpack.c.l.b16 %v144
  %v260 = vunpack.c.h.b16 %v144
  %v261 = vunpack.c.l.b16 %v145
  %v262 = vunpack.c.h.b16 %v145
  %v263 = vunpack.c.l.b16 %v146
  %v264 = vunpack.c.h.b16 %v146
  %v265 = vpack.c.b16 %v205, %v201
  %v266 = vpack.c.b16 %v206, %v202
  %v267 = vpack.c.b16 %v207, %v203
  %v268 = vpack.c.b16 %v208, %v204
  %v269 = vpack.c.b16 %v213, %v209
  %v270 = vpack.c.b16 %v214, %v210
  %v271 = vpack.c.b16 %v215, %v211
  %v272 = vpack.c.b16 %v216, %v212
  %v273 = vpack.c.b16 %v221, %v217
  %v274 = vpack.c.b16 %v222, %v218
  %v275 = vpack.c.b16 %v223, %v219
  %v276 = vpack.c.b16 %v224, %v220
  %v277 = vpack.c.b16 %v229, %v225
  %v278 = vpack.c.b16 %v230, %v226
  %v279 = vpack.c.b16 %v231, %v227
  %v280 = vpack.c.b16 %v232, %v228
  %v281 = vpack.c.b16 %v237, %v233
  %v282 = vpack.c.b16 %v238, %v234
  %v283 = vpack.c.b16 %v239, %v235
  %v284 = vpack.c.b16 %v240, %v236
  %v285 = vpack.c.b16 %v245, %v241
  %v286 = vpack.c.b16 %v246, %v242
  %v287 = vpack.c.b16 %v247, %v243
  %v288 = vpack.c.b16 %v248, %v244
  %v289 = vpack.c.b16 %v253, %v249
  %v290 = vpack.c.b16 %v254, %v250
  %v291 = vpack.c.b16 %v255, %v251
  %v292 = vpack.c.b16 %v256, %v252
  %v293 = vpack.c.b16 %v261, %v257
  %v294 = vpack.c.b16 %v262, %v258
  %v295 = vpack.c.b16 %v263, %v259
  %v296 = vpack.c.b16 %v264, %v260
  %329 = vmatprep.subr.bf16.mxu0 %v266
  %330 = vmatpush1.bf16.msra.mxu0 %v265
  %331 = vmatprep.subr.bf16.mxu0 %v270
  %332 = vmatpush1.bf16.msra.mxu0 %v269
  %333 = vmatprep.subr.bf16.mxu0 %v274
  %334 = vmatpush1.bf16.msra.mxu0 %v273
  %335 = vmatprep.subr.bf16.mxu0 %v278
  %336 = vmatpush1.bf16.msra.mxu0 %v277
  %337 = vmatprep.subr.bf16.mxu0 %v282
  %338 = vmatpush1.bf16.msra.mxu0 %v281
  %339 = vmatprep.subr.bf16.mxu0 %v286
  %340 = vmatpush1.bf16.msra.mxu0 %v285
  %341 = vmatprep.subr.bf16.mxu0 %v290
  %342 = vmatpush1.bf16.msra.mxu0 %v289
  %343 = vmatprep.subr.bf16.mxu0 %v294
  %344 = vmatpush1.bf16.msra.mxu0 %v293
  %345 = vmatprep.subr.bf16.mxu0 0
  %346 = vmatpush1.bf16.msra.mxu0 0
  %347 = vmatprep.subr.bf16.mxu0 0
  %348 = vmatpush1.bf16.msra.mxu0 0
  %349 = vmatprep.subr.bf16.mxu0 0
  %350 = vmatpush1.bf16.msra.mxu0 0
  %351 = vmatprep.subr.bf16.mxu0 0
  %352 = vmatpush1.bf16.msra.mxu0 0
  %353 = vmatprep.subr.bf16.mxu0 0
  %354 = vmatpush1.bf16.msra.mxu0 0
  %355 = vmatprep.subr.bf16.mxu0 0
  %356 = vmatpush1.bf16.msra.mxu0 0
  %357 = vmatprep.subr.bf16.mxu0 0
  %358 = vmatpush1.bf16.msra.mxu0 0
  %359 = vmatprep.subr.bf16.mxu0 0
  %360 = vmatpush1.bf16.msra.mxu0 0
  %361 = vmatprep.mubr.bf16.mxu0 0
  %362 = vmatmul.mubr.bf16.gmra.mrb[0].mxu0 %v112
  %v363 = vpop.f32.mrb[0].mxu0
  %v364 = vadd.f32 %v152, %v363
  %v365 = vpop.f32.mrb[0].mxu0
  %v366 = vadd.f32 %v156, %v365
  %v367 = vpop.f32.mrb[0].mxu0
  %v368 = vadd.f32 %v152, %v367
  %v369 = vpop.f32.mrb[0].mxu0
  %v370 = vadd.f32 %v156, %v369
  %371 = vmatprep.mubr.bf16.mxu0 0
  %372 = vmatmul.mubr.bf16.gmra.mrb[0].mxu0 %v113
  %v373 = vpop.f32.mrb[0].mxu0
  %v374 = vadd.f32 %v152, %v373
  %v375 = vpop.f32.mrb[0].mxu0
  %v376 = vadd.f32 %v156, %v375
  %v377 = vpop.f32.mrb[0].mxu0
  %v378 = vadd.f32 %v152, %v377
  %v379 = vpop.f32.mrb[0].mxu0
  %v380 = vadd.f32 %v156, %v379
  %381 = vmatprep.mubr.bf16.mxu0 0
  %382 = vmatmul.mubr.bf16.gmra.mrb[0].mxu0 %v114
  %v383 = vpop.f32.mrb[0].mxu0
  %v384 = vadd.f32 %v152, %v383
  %v385 = vpop.f32.mrb[0].mxu0
  %v386 = vadd.f32 %v156, %v385
  %v387 = vpop.f32.mrb[0].mxu0
  %v388 = vpop.f32.mrb[0].mxu0
  %389 = vdwg.mxu0
  %390 = vmatprep.subr.bf16.mxu0 %v268
  %391 = vmatpush1.bf16.msra.mxu0 %v267
  %392 = vmatprep.subr.bf16.mxu0 %v272
  %393 = vmatpush1.bf16.msra.mxu0 %v271
  %394 = vmatprep.subr.bf16.mxu0 %v276
  %395 = vmatpush1.bf16.msra.mxu0 %v275
  %396 = vmatprep.subr.bf16.mxu0 %v280
  %397 = vmatpush1.bf16.msra.mxu0 %v279
  %398 = vmatprep.subr.bf16.mxu0 %v284
  %399 = vmatpush1.bf16.msra.mxu0 %v283
  %400 = vmatprep.subr.bf16.mxu0 %v288
  %401 = vmatpush1.bf16.msra.mxu0 %v287
  %402 = vmatprep.subr.bf16.mxu0 %v292
  %403 = vmatpush1.bf16.msra.mxu0 %v291
  %404 = vmatprep.subr.bf16.mxu0 %v296
  %405 = vmatpush1.bf16.msra.mxu0 %v295
  %406 = vmatprep.subr.bf16.mxu0 0
  %407 = vmatpush1.bf16.msra.mxu0 0
  %408 = vmatprep.subr.bf16.mxu0 0
  %409 = vmatpush1.bf16.msra.mxu0 0
  %410 = vmatprep.subr.bf16.mxu0 0
  %411 = vmatpush1.bf16.msra.mxu0 0
  %412 = vmatprep.subr.bf16.mxu0 0
  %413 = vmatpush1.bf16.msra.mxu0 0
  %414 = vmatprep.subr.bf16.mxu0 0
  %415 = vmatpush1.bf16.msra.mxu0 0
  %416 = vmatprep.subr.bf16.mxu0 0
  %417 = vmatpush1.bf16.msra.mxu0 0
  %418 = vmatprep.subr.bf16.mxu0 0
  %419 = vmatpush1.bf16.msra.mxu0 0
  %420 = vmatprep.subr.bf16.mxu0 0
  %421 = vmatpush1.bf16.msra.mxu0 0
  %422 = vmatprep.mubr.bf16.mxu0 0
  %423 = vmatmul.mubr.bf16.gmra.mrb[0].mxu0 %v112
  %v424 = vpop.f32.mrb[0].mxu0
  %v425 = vadd.f32 %v160, %v424
  %v426 = vpop.f32.mrb[0].mxu0
  %v427 = vadd.f32 %v164, %v426
  %v428 = vpop.f32.mrb[0].mxu0
  %v429 = vadd.f32 %v160, %v428
  %v430 = vpop.f32.mrb[0].mxu0
  %v431 = vadd.f32 %v164, %v430
  %432 = vmatprep.mubr.bf16.mxu0 0
  %433 = vmatmul.mubr.bf16.gmra.mrb[0].mxu0 %v113
  %v434 = vpop.f32.mrb[0].mxu0
  %v435 = vadd.f32 %v160, %v434
  %v436 = vpop.f32.mrb[0].mxu0
  %v437 = vadd.f32 %v164, %v436
  %v438 = vpop.f32.mrb[0].mxu0
  %v439 = vadd.f32 %v160, %v438
  %v440 = vpop.f32.mrb[0].mxu0
  %v441 = vadd.f32 %v164, %v440
  %442 = vmatprep.mubr.bf16.mxu0 0
  %443 = vmatmul.mubr.bf16.gmra.mrb[0].mxu0 %v114
  %v444 = vpop.f32.mrb[0].mxu0
  %v445 = vadd.f32 %v160, %v444
  %v446 = vpop.f32.mrb[0].mxu0
  %v447 = vadd.f32 %v164, %v446
  %v448 = vpop.f32.mrb[0].mxu0
  %v449 = vpop.f32.mrb[0].mxu0
  %450 = vdwg.mxu0
  %v451 = vmul.f32 %v364, %v364
  %v452 = vmul.f32 %v366, %v366
  %v453 = vmul.f32 %v425, %v425
  %v454 = vmul.f32 %v427, %v427
  %v455 = vmul.f32 %v368, %v368
  %v456 = vmul.f32 %v370, %v370
  %v457 = vmul.f32 %v429, %v429
  %v458 = vmul.f32 %v431, %v431
  %v459 = vmul.f32 %v374, %v374
  %v460 = vmul.f32 %v376, %v376
  %v461 = vmul.f32 %v435, %v435
  %v462 = vmul.f32 %v437, %v437
  %v463 = vmul.f32 %v378, %v378
  %v464 = vmul.f32 %v380, %v380
  %v465 = vmul.f32 %v439, %v439
  %v466 = vmul.f32 %v441, %v441
  %v467 = vmul.f32 %v384, %v384
  %v468 = vmul.f32 %v386, %v386
  %v469 = vmul.f32 %v445, %v445
  %v470 = vmul.f32 %v447, %v447
  %v471 = vmul.f32 %v364, %v451
  %v472 = vmul.f32 %v366, %v452
  %v473 = vmul.f32 %v425, %v453
  %v474 = vmul.f32 %v427, %v454
  %v475 = vmul.f32 %v368, %v455
  %v476 = vmul.f32 %v370, %v456
  %v477 = vmul.f32 %v429, %v457
  %v478 = vmul.f32 %v431, %v458
  %v479 = vmul.f32 %v374, %v459
  %v480 = vmul.f32 %v376, %v460
  %v481 = vmul.f32 %v435, %v461
  %v482 = vmul.f32 %v437, %v462
  %v483 = vmul.f32 %v378, %v463
  %v484 = vmul.f32 %v380, %v464
  %v485 = vmul.f32 %v439, %v465
  %v486 = vmul.f32 %v441, %v466
  %v487 = vmul.f32 %v384, %v467
  %v488 = vmul.f32 %v386, %v468
  %v489 = vmul.f32 %v445, %v469
  %v490 = vmul.f32 %v447, %v470
  %v491 = vmul.f32 %v471, 0.044715
  %v492 = vmul.f32 %v472, 0.044715
  %v493 = vmul.f32 %v473, 0.044715
  %v494 = vmul.f32 %v474, 0.044715
  %v495 = vmul.f32 %v475, 0.044715
  %v496 = vmul.f32 %v476, 0.044715
  %v497 = vmul.f32 %v477, 0.044715
  %v498 = vmul.f32 %v478, 0.044715
  %v499 = vmul.f32 %v479, 0.044715
  %v500 = vmul.f32 %v480, 0.044715
  %v501 = vmul.f32 %v481, 0.044715
  %v502 = vmul.f32 %v482, 0.044715
  %v503 = vmul.f32 %v483, 0.044715
  %v504 = vmul.f32 %v484, 0.044715
  %v505 = vmul.f32 %v485, 0.044715
  %v506 = vmul.f32 %v486, 0.044715
  %v507 = vmul.f32 %v487, 0.044715
  %v508 = vmul.f32 %v488, 0.044715
  %v509 = vmul.f32 %v489, 0.044715
  %v510 = vmul.f32 %v490, 0.044715
  %v511 = vadd.f32 %v364, %v491
  %v512 = vadd.f32 %v366, %v492
  %v513 = vadd.f32 %v425, %v493
  %v514 = vadd.f32 %v427, %v494
  %v515 = vadd.f32 %v368, %v495
  %v516 = vadd.f32 %v370, %v496
  %v517 = vadd.f32 %v429, %v497
  %v518 = vadd.f32 %v431, %v498
  %v519 = vadd.f32 %v374, %v499
  %v520 = vadd.f32 %v376, %v500
  %v521 = vadd.f32 %v435, %v501
  %v522 = vadd.f32 %v437, %v502
  %v523 = vadd.f32 %v378, %v503
  %v524 = vadd.f32 %v380, %v504
  %v525 = vadd.f32 %v439, %v505
  %v526 = vadd.f32 %v441, %v506
  %v527 = vadd.f32 %v384, %v507
  %v528 = vadd.f32 %v386, %v508
  %v529 = vadd.f32 %v445, %v509
  %v530 = vadd.f32 %v447, %v510
  %v531 = vmul.f32 %v511, 0.7978846
  %v532 = vmul.f32 %v512, 0.7978846
  %v533 = vmul.f32 %v513, 0.7978846
  %v534 = vmul.f32 %v514, 0.7978846
  %v535 = vmul.f32 %v515, 0.7978846
  %v536 = vmul.f32 %v516, 0.7978846
  %v537 = vmul.f32 %v517, 0.7978846
  %v538 = vmul.f32 %v518, 0.7978846
  %v539 = vmul.f32 %v519, 0.7978846
  %v540 = vmul.f32 %v520, 0.7978846
  %v541 = vmul.f32 %v521, 0.7978846
  %v542 = vmul.f32 %v522, 0.7978846
  %v543 = vmul.f32 %v523, 0.7978846
  %v544 = vmul.f32 %v524, 0.7978846
  %v545 = vmul.f32 %v525, 0.7978846
  %v546 = vmul.f32 %v526, 0.7978846
  %v547 = vmul.f32 %v527, 0.7978846
  %v548 = vmul.f32 %v528, 0.7978846
  %v549 = vmul.f32 %v529, 0.7978846
  %v550 = vmul.f32 %v530, 0.7978846
  %v551 = vtanh.pop %v531
  %v552 = vtanh.pop %v532
  %v553 = vtanh.pop %v533
  %v554 = vtanh.pop %v534
  %v555 = vtanh.pop %v535
  %v556 = vtanh.pop %v536
  %v557 = vtanh.pop %v537
  %v558 = vtanh.pop %v538
  %v559 = vtanh.pop %v539
  %v560 = vtanh.pop %v540
  %v561 = vtanh.pop %v541
  %v562 = vtanh.pop %v542
  %v563 = vtanh.pop %v543
  %v564 = vtanh.pop %v544
  %v565 = vtanh.pop %v545
  %v566 = vtanh.pop %v546
  %v567 = vtanh.pop %v547
  %v568 = vtanh.pop %v548
  %v569 = vtanh.pop %v549
  %v570 = vtanh.pop %v550
  %v571 = vadd.f32 %v551, 1.0
  %v572 = vadd.f32 %v552, 1.0
  %v573 = vadd.f32 %v553, 1.0
  %v574 = vadd.f32 %v554, 1.0
  %v575 = vadd.f32 %v555, 1.0
  %v576 = vadd.f32 %v556, 1.0
  %v577 = vadd.f32 %v557, 1.0
  %v578 = vadd.f32 %v558, 1.0
  %v579 = vadd.f32 %v559, 1.0
  %v580 = vadd.f32 %v560, 1.0
  %v581 = vadd.f32 %v561, 1.0
  %v582 = vadd.f32 %v562, 1.0
  %v583 = vadd.f32 %v563, 1.0
  %v584 = vadd.f32 %v564, 1.0
  %v585 = vadd.f32 %v565, 1.0
  %v586 = vadd.f32 %v566, 1.0
  %v587 = vadd.f32 %v567, 1.0
  %v588 = vadd.f32 %v568, 1.0
  %v589 = vadd.f32 %v569, 1.0
  %v590 = vadd.f32 %v570, 1.0
  %v591 = vmul.f32 %v571, 0.5
  %v592 = vmul.f32 %v572, 0.5
  %v593 = vmul.f32 %v573, 0.5
  %v594 = vmul.f32 %v574, 0.5
  %v595 = vmul.f32 %v575, 0.5
  %v596 = vmul.f32 %v576, 0.5
  %v597 = vmul.f32 %v577, 0.5
  %v598 = vmul.f32 %v578, 0.5
  %v599 = vmul.f32 %v579, 0.5
  %v600 = vmul.f32 %v580, 0.5
  %v601 = vmul.f32 %v581, 0.5
  %v602 = vmul.f32 %v582, 0.5
  %v603 = vmul.f32 %v583, 0.5
  %v604 = vmul.f32 %v584, 0.5
  %v605 = vmul.f32 %v585, 0.5
  %v606 = vmul.f32 %v586, 0.5
  %v607 = vmul.f32 %v587, 0.5
  %v608 = vmul.f32 %v588, 0.5
  %v609 = vmul.f32 %v589, 0.5
  %v610 = vmul.f32 %v590, 0.5
  %v611 = vmul.f32 %v364, %v591
  %v612 = vmul.f32 %v366, %v592
  %v613 = vmul.f32 %v425, %v593
  %v614 = vmul.f32 %v427, %v594
  %v615 = vmul.f32 %v368, %v595
  %v616 = vmul.f32 %v370, %v596
  %v617 = vmul.f32 %v429, %v597
  %v618 = vmul.f32 %v431, %v598
  %v619 = vmul.f32 %v374, %v599
  %v620 = vmul.f32 %v376, %v600
  %v621 = vmul.f32 %v435, %v601
  %v622 = vmul.f32 %v437, %v602
  %v623 = vmul.f32 %v378, %v603
  %v624 = vmul.f32 %v380, %v604
  %v625 = vmul.f32 %v439, %v605
  %v626 = vmul.f32 %v441, %v606
  %v627 = vmul.f32 %v384, %v607
  %v628 = vmul.f32 %v386, %v608
  %v629 = vmul.f32 %v445, %v609
  %v630 = vmul.f32 %v447, %v610
  %v631 = vpack.c.bf16 %v615, %v611
  %v632 = vpack.c.bf16 %v616, %v612
  %v633 = vpack.c.bf16 %v617, %v613
  %v634 = vpack.c.bf16 %v618, %v614
  %v635 = vpack.c.bf16 %v623, %v619
  %v636 = vpack.c.bf16 %v624, %v620
  %v637 = vpack.c.bf16 %v625, %v621
  %v638 = vpack.c.bf16 %v626, %v622
  %v639 = vpack.c.bf16 %v627, %v627
  %v640 = vpack.c.bf16 %v628, %v628
  %v641 = vpack.c.bf16 %v629, %v629
  %v642 = vpack.c.bf16 %v630, %v630
  %v643 = vld [vmem:[%s5] sm:$0xf]
  %v644 = vld [vmem:[%s5 + $0x4] sm:$0xf]
  %v645 = vld [vmem:[%s5 + $0x8] sm:$0xf]
  %v646 = vld [vmem:[%s5 + $0xc] sm:$0xf]
  %v647 = vld [vmem:[%s5 + $0x10] sm:$0xf]
  %v648 = vld [vmem:[%s5 + $0x14] sm:$0xf]
  %v649 = vld [vmem:[%s5 + $0x18] sm:$0xf]
  %v650 = vld [vmem:[%s5 + $0x1c] sm:$0xf]
  %v651 = vld [vmem:[%s5 + $0x20] sm:$0xf]
  %v652 = vld [vmem:[%s5 + $0x24] sm:$0xf]
  %v653 = vld [vmem:[%s5 + $0x28] sm:$0xf]
  %v654 = vld [vmem:[%s5 + $0x2c] sm:$0xf]
  %v655 = vld [vmem:[%s5 + $0x30] sm:$0xf]
  %v656 = vld [vmem:[%s5 + $0x34] sm:$0xf]
  %v657 = vld [vmem:[%s5 + $0x38] sm:$0xf]
  %v658 = vld [vmem:[%s5 + $0x3c] sm:$0xf]
  %v659 = vld [vmem:[%s5 + $0x40] sm:$0xf]
  %v660 = vld [vmem:[%s5 + $0x44] sm:$0xf]
  %v661 = vld [vmem:[%s5 + $0x48] sm:$0xf]
  %v662 = vld [vmem:[%s5 + $0x4c] sm:$0xf]
  %v663 = vld [vmem:[%s5 + $0x50] sm:$0xf]
  %v664 = vld [vmem:[%s5 + $0x54] sm:$0xf]
  %v665 = vld [vmem:[%s5 + $0x58] sm:$0xf]
  %v666 = vld [vmem:[%s5 + $0x5c] sm:$0xf]
  %v667 = vld [vmem:[%s5 + $0x60] sm:$0xf]
  %v668 = vld [vmem:[%s5 + $0x64] sm:$0xf]
  %v669 = vld [vmem:[%s5 + $0x68] sm:$0xf]
  %v670 = vld [vmem:[%s5 + $0x6c] sm:$0xf]
  %v671 = vld [vmem:[%s5 + $0x70] sm:$0xf]
  %v672 = vld [vmem:[%s5 + $0x74] sm:$0xf]
  %v673 = vld [vmem:[%s5 + $0x78] sm:$0xf]
  %v674 = vld [vmem:[%s5 + $0x7c] sm:$0xf]
  %v675 = vld [vmem:[%s5 + $0x80] sm:$0xf]
  %v676 = vld [vmem:[%s5 + $0x84] sm:$0xf]
  %v677 = vld [vmem:[%s5 + $0x88] sm:$0xf]
  %v678 = vld [vmem:[%s5 + $0x8c] sm:$0xf]
  %v679 = vld [vmem:[%s5 + $0x90] sm:$0xf]
  %v680 = vld [vmem:[%s5 + $0x94] sm:$0xf]
  %v681 = vld [vmem:[%s5 + $0x98] sm:$0xf]
  %v682 = vld [vmem:[%s5 + $0x9c] sm:$0xf]
  %v683 = vld [vmem:[%s5 + $0xa0] sm:$0xf]
  %v684 = vld [vmem:[%s5 + $0xa4] sm:$0xf]
  %v685 = vld [vmem:[%s5 + $0xa8] sm:$0xf]
  %v686 = vld [vmem:[%s5 + $0xac] sm:$0xf]
  %v687 = vld [vmem:[%s5 + $0xb0] sm:$0xf]
  %v688 = vld [vmem:[%s5 + $0xb4] sm:$0xf]
  %v689 = vld [vmem:[%s5 + $0xb8] sm:$0xf]
  %v690 = vld [vmem:[%s5 + $0xbc] sm:$0xf]
  %v691 = vld [vmem:[%s5 + $0xc0] sm:$0xf]
  %v692 = vld [vmem:[%s5 + $0xc4] sm:$0xf]
  %v693 = vld [vmem:[%s5 + $0xc8] sm:$0xf]
  %v694 = vld [vmem:[%s5 + $0xcc] sm:$0xf]
  %v695 = vld [vmem:[%s5 + $0xd0] sm:$0xf]
  %v696 = vld [vmem:[%s5 + $0xd4] sm:$0xf]
  %v697 = vld [vmem:[%s5 + $0xd8] sm:$0xf]
  %v698 = vld [vmem:[%s5 + $0xdc] sm:$0xf]
  %v699 = vld [vmem:[%s5 + $0xe0] sm:$0xf]
  %v700 = vld [vmem:[%s5 + $0xe4] sm:$0xf]
  %v701 = vld [vmem:[%s5 + $0xe8] sm:$0xf]
  %v702 = vld [vmem:[%s5 + $0xec] sm:$0xf]
  %v703 = vld [vmem:[%s5 + $0xf0] sm:$0xf]
  %v704 = vld [vmem:[%s5 + $0xf4] sm:$0xf]
  %v705 = vld [vmem:[%s5 + $0xf8] sm:$0xf]
  %v706 = vld [vmem:[%s5 + $0xfc] sm:$0xf]
  %v707 = vld [vmem:[%s6] sm:$0x1]
  %v709 = vlaneseq
  %v710 = vshrl.u32 %v709, 7
  %v711 = vsub.s32 0, %v710
  %v712 = vrot.slane %v707, %v711
  %v778 = vunpack.c.l.b16 %v643
  %v779 = vunpack.c.l.b16 %v644
  %v780 = vunpack.c.l.b16 %v645
  %v781 = vunpack.c.l.b16 %v646
  %v782 = vunpack.c.l.b16 %v647
  %v783 = vunpack.c.l.b16 %v648
  %v784 = vunpack.c.l.b16 %v649
  %v785 = vunpack.c.l.b16 %v650
  %v786 = vunpack.c.l.b16 %v651
  %v787 = vunpack.c.l.b16 %v652
  %v788 = vunpack.c.l.b16 %v653
  %v789 = vunpack.c.l.b16 %v654
  %v790 = vunpack.c.l.b16 %v655
  %v791 = vunpack.c.l.b16 %v656
  %v792 = vunpack.c.l.b16 %v657
  %v793 = vunpack.c.l.b16 %v658
  %v794 = vunpack.c.l.b16 %v659
  %v795 = vunpack.c.l.b16 %v660
  %v796 = vunpack.c.l.b16 %v661
  %v797 = vunpack.c.l.b16 %v662
  %v798 = vunpack.c.l.b16 %v663
  %v799 = vunpack.c.l.b16 %v664
  %v800 = vunpack.c.l.b16 %v665
  %v801 = vunpack.c.l.b16 %v666
  %v802 = vunpack.c.l.b16 %v667
  %v803 = vunpack.c.l.b16 %v668
  %v804 = vunpack.c.l.b16 %v669
  %v805 = vunpack.c.l.b16 %v670
  %v806 = vunpack.c.l.b16 %v671
  %v807 = vunpack.c.l.b16 %v672
  %v808 = vunpack.c.l.b16 %v673
  %v809 = vunpack.c.l.b16 %v674
  %v810 = vunpack.c.l.b16 %v675
  %v811 = vunpack.c.l.b16 %v676
  %v812 = vunpack.c.l.b16 %v677
  %v813 = vunpack.c.l.b16 %v678
  %v814 = vunpack.c.l.b16 %v679
  %v815 = vunpack.c.l.b16 %v680
  %v816 = vunpack.c.l.b16 %v681
  %v817 = vunpack.c.l.b16 %v682
  %v818 = vunpack.c.l.b16 %v683
  %v819 = vunpack.c.l.b16 %v684
  %v820 = vunpack.c.l.b16 %v685
  %v821 = vunpack.c.l.b16 %v686
  %v822 = vunpack.c.l.b16 %v687
  %v823 = vunpack.c.l.b16 %v688
  %v824 = vunpack.c.l.b16 %v689
  %v825 = vunpack.c.l.b16 %v690
  %v826 = vunpack.c.l.b16 %v691
  %v827 = vunpack.c.l.b16 %v692
  %v828 = vunpack.c.l.b16 %v693
  %v829 = vunpack.c.l.b16 %v694
  %v830 = vunpack.c.l.b16 %v695
  %v831 = vunpack.c.l.b16 %v696
  %v832 = vunpack.c.l.b16 %v697
  %v833 = vunpack.c.l.b16 %v698
  %v834 = vunpack.c.l.b16 %v699
  %v835 = vunpack.c.l.b16 %v700
  %v836 = vunpack.c.l.b16 %v701
  %v837 = vunpack.c.l.b16 %v702
  %v838 = vunpack.c.l.b16 %v703
  %v839 = vunpack.c.l.b16 %v704
  %v840 = vunpack.c.l.b16 %v705
  %v841 = vunpack.c.l.b16 %v706
  %v842 = vpack.c.b16 %v779, %v778
  %v843 = vpack.c.b16 %v781, %v780
  %v844 = vpack.c.b16 %v783, %v782
  %v845 = vpack.c.b16 %v785, %v784
  %v846 = vpack.c.b16 %v787, %v786
  %v847 = vpack.c.b16 %v789, %v788
  %v848 = vpack.c.b16 %v791, %v790
  %v849 = vpack.c.b16 %v793, %v792
  %v850 = vpack.c.b16 %v795, %v794
  %v851 = vpack.c.b16 %v797, %v796
  %v852 = vpack.c.b16 %v799, %v798
  %v853 = vpack.c.b16 %v801, %v800
  %v854 = vpack.c.b16 %v803, %v802
  %v855 = vpack.c.b16 %v805, %v804
  %v856 = vpack.c.b16 %v807, %v806
  %v857 = vpack.c.b16 %v809, %v808
  %v858 = vpack.c.b16 %v811, %v810
  %v859 = vpack.c.b16 %v813, %v812
  %v860 = vpack.c.b16 %v815, %v814
  %v861 = vpack.c.b16 %v817, %v816
  %v862 = vpack.c.b16 %v819, %v818
  %v863 = vpack.c.b16 %v821, %v820
  %v864 = vpack.c.b16 %v823, %v822
  %v865 = vpack.c.b16 %v825, %v824
  %v866 = vpack.c.b16 %v827, %v826
  %v867 = vpack.c.b16 %v829, %v828
  %v868 = vpack.c.b16 %v831, %v830
  %v869 = vpack.c.b16 %v833, %v832
  %v870 = vpack.c.b16 %v835, %v834
  %v871 = vpack.c.b16 %v837, %v836
  %v872 = vpack.c.b16 %v839, %v838
  %v873 = vpack.c.b16 %v841, %v840
  %906 = vmatprep.subr.bf16.mxu0 0
  %907 = vmatpush1.bf16.msra.mxu0 %v842
  %908 = vmatprep.subr.bf16.mxu0 0
  %909 = vmatpush1.bf16.msra.mxu0 %v843
  %910 = vmatprep.subr.bf16.mxu0 0
  %911 = vmatpush1.bf16.msra.mxu0 %v844
  %912 = vmatprep.subr.bf16.mxu0 0
  %913 = vmatpush1.bf16.msra.mxu0 %v845
  %914 = vmatprep.subr.bf16.mxu0 0
  %915 = vmatpush1.bf16.msra.mxu0 %v846
  %916 = vmatprep.subr.bf16.mxu0 0
  %917 = vmatpush1.bf16.msra.mxu0 %v847
  %918 = vmatprep.subr.bf16.mxu0 0
  %919 = vmatpush1.bf16.msra.mxu0 %v848
  %920 = vmatprep.subr.bf16.mxu0 0
  %921 = vmatpush1.bf16.msra.mxu0 %v849
  %922 = vmatprep.subr.bf16.mxu0 0
  %923 = vmatpush1.bf16.msra.mxu0 %v850
  %924 = vmatprep.subr.bf16.mxu0 0
  %925 = vmatpush1.bf16.msra.mxu0 %v851
  %926 = vmatprep.subr.bf16.mxu0 0
  %927 = vmatpush1.bf16.msra.mxu0 %v852
  %928 = vmatprep.subr.bf16.mxu0 0
  %929 = vmatpush1.bf16.msra.mxu0 %v853
  %930 = vmatprep.subr.bf16.mxu0 0
  %931 = vmatpush1.bf16.msra.mxu0 %v854
  %932 = vmatprep.subr.bf16.mxu0 0
  %933 = vmatpush1.bf16.msra.mxu0 %v855
  %934 = vmatprep.subr.bf16.mxu0 0
  %935 = vmatpush1.bf16.msra.mxu0 %v856
  %936 = vmatprep.subr.bf16.mxu0 0
  %937 = vmatpush1.bf16.msra.mxu0 %v857
  %938 = vmatprep.mubr.bf16.mxu0 %v632
  %939 = vmatmul.mubr.bf16.gmra.mrb[0].mxu0 %v631
  %v940 = vpop.f32.mrb[0].mxu0
  %v941 = vadd.f32 %v712, %v940
  %v942 = vpop.f32.mrb[0].mxu0
  %v943 = vpop.f32.mrb[0].mxu0
  %v944 = vadd.f32 %v712, %v943
  %v945 = vpop.f32.mrb[0].mxu0
  %946 = vmatprep.mubr.bf16.mxu0 %v636
  %947 = vmatmul.mubr.bf16.gmra.mrb[0].mxu0 %v635
  %v948 = vpop.f32.mrb[0].mxu0
  %v949 = vadd.f32 %v712, %v948
  %v950 = vpop.f32.mrb[0].mxu0
  %v951 = vpop.f32.mrb[0].mxu0
  %v952 = vadd.f32 %v712, %v951
  %v953 = vpop.f32.mrb[0].mxu0
  %954 = vmatprep.mubr.bf16.mxu0 %v640
  %955 = vmatmul.mubr.bf16.gmra.mrb[0].mxu0 %v639
  %v956 = vpop.f32.mrb[0].mxu0
  %v957 = vadd.f32 %v712, %v956
  %v958 = vpop.f32.mrb[0].mxu0
  %v959 = vpop.f32.mrb[0].mxu0
  %v960 = vpop.f32.mrb[0].mxu0
  %961 = vdwg.mxu0
  %962 = vmatprep.subr.bf16.mxu0 0
  %963 = vmatpush1.bf16.msra.mxu0 %v858
  %964 = vmatprep.subr.bf16.mxu0 0
  %965 = vmatpush1.bf16.msra.mxu0 %v859
  %966 = vmatprep.subr.bf16.mxu0 0
  %967 = vmatpush1.bf16.msra.mxu0 %v860
  %968 = vmatprep.subr.bf16.mxu0 0
  %969 = vmatpush1.bf16.msra.mxu0 %v861
  %970 = vmatprep.subr.bf16.mxu0 0
  %971 = vmatpush1.bf16.msra.mxu0 %v862
  %972 = vmatprep.subr.bf16.mxu0 0
  %973 = vmatpush1.bf16.msra.mxu0 %v863
  %974 = vmatprep.subr.bf16.mxu0 0
  %975 = vmatpush1.bf16.msra.mxu0 %v864
  %976 = vmatprep.subr.bf16.mxu0 0
  %977 = vmatpush1.bf16.msra.mxu0 %v865
  %978 = vmatprep.subr.bf16.mxu0 0
  %979 = vmatpush1.bf16.msra.mxu0 %v866
  %980 = vmatprep.subr.bf16.mxu0 0
  %981 = vmatpush1.bf16.msra.mxu0 %v867
  %982 = vmatprep.subr.bf16.mxu0 0
  %983 = vmatpush1.bf16.msra.mxu0 %v868
  %984 = vmatprep.subr.bf16.mxu0 0
  %985 = vmatpush1.bf16.msra.mxu0 %v869
  %986 = vmatprep.subr.bf16.mxu0 0
  %987 = vmatpush1.bf16.msra.mxu0 %v870
  %988 = vmatprep.subr.bf16.mxu0 0
  %989 = vmatpush1.bf16.msra.mxu0 %v871
  %990 = vmatprep.subr.bf16.mxu0 0
  %991 = vmatpush1.bf16.msra.mxu0 %v872
  %992 = vmatprep.subr.bf16.mxu0 0
  %993 = vmatpush1.bf16.msra.mxu0 %v873
  %994 = vmatprep.mubr.bf16.mxu0 %v634
  %995 = vmatmul.mubr.bf16.gmra.mrb[0].mxu0 %v633
  %v996 = vpop.f32.mrb[0].mxu0
  %v997 = vadd.f32 %v941, %v996
  %v998 = vpop.f32.mrb[0].mxu0
  %v999 = vpop.f32.mrb[0].mxu0
  %v1000 = vadd.f32 %v944, %v999
  %v1001 = vpop.f32.mrb[0].mxu0
  %1002 = vmatprep.mubr.bf16.mxu0 %v638
  %1003 = vmatmul.mubr.bf16.gmra.mrb[0].mxu0 %v637
  %v1004 = vpop.f32.mrb[0].mxu0
  %v1005 = vadd.f32 %v949, %v1004
  %v1006 = vpop.f32.mrb[0].mxu0
  %v1007 = vpop.f32.mrb[0].mxu0
  %v1008 = vadd.f32 %v952, %v1007
  %v1009 = vpop.f32.mrb[0].mxu0
  %1010 = vmatprep.mubr.bf16.mxu0 %v642
  %1011 = vmatmul.mubr.bf16.gmra.mrb[0].mxu0 %v641
  %v1012 = vpop.f32.mrb[0].mxu0
  %v1013 = vadd.f32 %v957, %v1012
  %v1014 = vpop.f32.mrb[0].mxu0
  %v1015 = vpop.f32.mrb[0].mxu0
  %v1016 = vpop.f32.mrb[0].mxu0
  %1017 = vdwg.mxu0
  %v1018 = vadd.f32 %v27, %v997
  %v1019 = vadd.f32 %v28, %v1000
  %v1020 = vadd.f32 %v29, %v1005
  %v1021 = vadd.f32 %v30, %v1008
  %v1022 = vadd.f32 %v31, %v1013
  %1023 = vst [vmem:[%s7] sm:$0xff] %v1018
  %1024 = vst [vmem:[%s7 + $0x8] sm:$0xff] %v1019
  %1025 = vst [vmem:[%s7 + $0x10] sm:$0xff] %v1020
  %1026 = vst [vmem:[%s7 + $0x18] sm:$0xff] %v1021
  %1027 = vst [vmem:[%s7 + $0x20] sm:$0xff] %v1022
  // Predicated region
  $region30: #{isavit_forward.10} parent=0 // pred_check
    _
  $region31: #{isavit_forward.10} parent=0 // pred_check_branch
    %1029 = sbr.rel (0) target = $region33
  $region32: #{isavit_forward.10} parent=0 // pred_region
    _
  $region33: #{isavit_forward.10} parent=0 // pred_fallthru
    _
  // Predicated region
  $region34: #{isavit_forward.10} parent=0 // pred_check
    _
  $region35: #{isavit_forward.10} parent=0 // pred_check_branch
    %1031 = sbr.rel (0) target = $region37
  $region36: #{isavit_forward.10} parent=0 // pred_region
    _
  $region37: #{isavit_forward.10} parent=0 // pred_fallthru
    _

</llo_original>
